<compile_context>
chip_gen: v5e
topology: v5e:2x2
jax: 0.10.0
libtpu: 0.0.40
codegen_flags: <defaults>
</compile_context>

<pallas_src>
import numpy as np

import jax
import jax.numpy as jnp
from jax.experimental import pallas as pl
from jax.experimental.pallas import tpu as pltpu

BN_EPS = 1e-5


# --------------------------------------------------------------------- trace-time constants
def _interp_matrix(out_size, in_size):
    """(out_size, in_size) 1-D bilinear interpolation matrix, align_corners=True."""
    if out_size == 1 or in_size == 1:
        src = np.zeros((out_size,), np.float64)
    else:
        src = np.arange(out_size, dtype=np.float64) * (in_size - 1) / (out_size - 1)
    i0 = np.clip(np.floor(src).astype(np.int64), 0, in_size - 1)
    i1 = np.minimum(i0 + 1, in_size - 1)
    frac = (src - i0).astype(np.float32)
    A = np.zeros((out_size, in_size), np.float32)
    rows = np.arange(out_size)
    np.add.at(A, (rows, i0), 1.0 - frac)
    np.add.at(A, (rows, i1), frac)
    return A


def upsample_matrix_t(H, W, h, w):
    """(h*w, H*W) matrix Ut so that  x_up[c, :] = x[c, :] @ Ut  (bilinear, align_corners=True)."""
    Ah = _interp_matrix(H, h)                                    # (H, h)
    Aw = _interp_matrix(W, w)                                    # (W, w)
    U = np.einsum("Hh,Ww->HWhw", Ah, Aw).reshape(H * W, h * w)   # U[p_out, q_in]
    return np.ascontiguousarray(U.T.astype(np.float32))          # (h*w, H*W)


def shift_matrices_t(H, W):
    """(9, H*W, H*W) matrices St so that  tap_k[c, :] = x[c, :] @ St[k]  (3x3 taps, zero pad)."""
    HW = H * W
    ii, jj = np.meshgrid(np.arange(H), np.arange(W), indexing="ij")
    p = (ii * W + jj).reshape(-1)
    mats = []
    for dy in range(3):
        for dx in range(3):
            si, sj = ii + dy - 1, jj + dx - 1
            valid = ((si >= 0) & (si < H) & (sj >= 0) & (sj < W)).reshape(-1)
            q = (np.clip(si, 0, H - 1) * W + np.clip(sj, 0, W - 1)).reshape(-1)
            m = np.zeros((HW, HW), np.float32)
            m[q[valid], p[valid]] = 1.0
            mats.append(m)
    return np.stack(mats)                                        # k = dy*3 + dx


# ----------------------------------------------------------------------------------- kernel
def _decoder_block_kernel(
        x_ref, skip_ref, ut_ref, st_ref,
        w1_ref, b1_ref, w2_ref, b2_ref, w3_ref, b3_ref, wd_ref,
        v1_ref, c1_ref, v2_ref, c2_ref, v3_ref, c3_ref,
        o_ref):
    f32 = jnp.float32

    def conv3x3(h, w_taps_ref, bias_ref):
        # h: (planes, HW); w_taps_ref: (9, planes, planes); bias_ref: (planes, 1)
        acc = jnp.zeros_like(h)
        for k in range(9):
            tap = jnp.dot(h, st_ref[k], preferred_element_type=f32)     # spatial shift (planes, HW)
            acc = acc + jnp.dot(w_taps_ref[k], tap, preferred_element_type=f32)
        return acc + bias_ref[...]

    def bottleneck(h, identity, w1, b1, w2_r, b2_r, w3, b3):
        o = jnp.maximum(jnp.dot(w1, h, preferred_element_type=f32) + b1, 0.0)   # conv1+bn1+relu
        o = jnp.maximum(conv3x3(o, w2_r, b2_r), 0.0)                            # conv2+bn2+relu
        o = jnp.dot(w3, o, preferred_element_type=f32) + b3                     # conv3+bn3
        return jnp.maximum(o + identity, 0.0)                                   # +identity, relu

    x = x_ref[0]                                                  # (C_low, h*w)
    skip = skip_ref[0]                                            # (C_skip, H*W)

    # bilinear upsample (align_corners=True) as a single matmul
    xu = jnp.dot(x, ut_ref[...], preferred_element_type=f32)      # (C_low, H*W)

    # block1 (with downsample = plain 1x1 conv, no bias / no BN, per spec)
    idn = jnp.dot(wd_ref[...], xu, preferred_element_type=f32)    # (C_out, H*W)
    y1 = bottleneck(xu, idn, w1_ref[...], b1_ref[...], w2_ref, b2_ref,
                    w3_ref[...], b3_ref[...])

    # skip connection
    s = y1 + skip

    # block2 (identity = input)
    y2 = bottleneck(s, s, v1_ref[...], c1_ref[...], v2_ref, c2_ref,
                    v3_ref[...], c3_ref[...])

    o_ref[0] = y2.astype(o_ref.dtype)


# ---------------------------------------------------------------------------------- wrapper
def decoder_block_forward(x_nchw, skip_nchw, params):
    N, C_low, h, w = x_nchw.shape
    _, C_skip, H, W = skip_nchw.shape
    hw, HW = h * w, H * W

    x2 = x_nchw.reshape(N, C_low, hw).astype(jnp.float32)         # NCHW -> (N, C, hw), no transpose
    s2 = skip_nchw.reshape(N, C_skip, HW).astype(jnp.float32)

    ut = jnp.asarray(upsample_matrix_t(H, W, h, w))               # (hw, HW) constant
    st = jnp.asarray(shift_matrices_t(H, W))                      # (9, HW, HW) constant

    b1p, b2p = params['block1'], params['block2']
    C_out = b1p['w3'].shape[0]

    args = (x2, s2, ut, st,
            b1p['w1'], b1p['b1'], b1p['w2'], b1p['b2'], b1p['w3'], b1p['b3'], b1p['wd'],
            b2p['w1'], b2p['b1'], b2p['w2'], b2p['b2'], b2p['w3'], b2p['b3'])

    def full_spec(a):
        nd = a.ndim
        return pl.BlockSpec(a.shape, lambda n, _nd=nd: (0,) * _nd)

    in_specs = [
        pl.BlockSpec((1, C_low, hw), lambda n: (n, 0, 0)),
        pl.BlockSpec((1, C_skip, HW), lambda n: (n, 0, 0)),
    ] + [full_spec(a) for a in args[2:]]

    out = pl.pallas_call(
        _decoder_block_kernel,
        out_shape=jax.ShapeDtypeStruct((N, C_out, HW), jnp.float32),
        grid=(N,),
        in_specs=in_specs,
        out_specs=pl.BlockSpec((1, C_out, HW), lambda n: (n, 0, 0)),
        compiler_params=pltpu.CompilerParams(dimension_semantics=("parallel",)),
    )(*args)

    return out.reshape(N, C_out, H, W)                            # back to NCHW


# ----------------------------------------------------------------------------------- params
def init_bottleneck_params(key, inplanes, planes, downsample=False):
    """torchvision-style Bottleneck (expansion=4); BN folded, weights in (Cout, Cin) layout."""
    expansion = 4
    keys = jax.random.split(key, 8)

    def conv(k, cout, cin, ks):
        return 0.1 * jax.random.normal(k, (cout, cin, ks, ks), jnp.float32)

    def bn(k, c):
        k1, k2, k3, k4 = jax.random.split(k, 4)
        gamma = 1.0 + 0.1 * jax.random.normal(k1, (c,), jnp.float32)
        beta = 0.1 * jax.random.normal(k2, (c,), jnp.float32)
        mean = 0.1 * jax.random.normal(k3, (c,), jnp.float32)
        var = 1.0 + 0.1 * jnp.abs(jax.random.normal(k4, (c,), jnp.float32))
        return gamma, beta, mean, var

    outp = planes * expansion
    w1, bn1 = conv(keys[0], planes, inplanes, 1), bn(keys[1], planes)
    w2, bn2 = conv(keys[2], planes, planes, 3), bn(keys[3], planes)
    w3, bn3 = conv(keys[4], outp, planes, 1), bn(keys[5], outp)

    def fold(w_oc_ic, gamma, beta, mean, var):
        scale = gamma / jnp.sqrt(var + BN_EPS)
        return w_oc_ic * scale[:, None], (beta - mean * scale).reshape(-1, 1)

    p = {}
    p['w1'], p['b1'] = fold(w1[:, :, 0, 0], *bn1)                 # (planes, inplanes), (planes, 1)
    scale2 = bn2[0] / jnp.sqrt(bn2[3] + BN_EPS)
    w2s = w2 * scale2[:, None, None, None]                        # (planes, planes, 3, 3)
    p['w2'] = jnp.transpose(w2s, (2, 3, 0, 1)).reshape(9, planes, planes)  # tap-major (dy, dx)
    p['b2'] = (bn2[1] - bn2[2] * scale2).reshape(-1, 1)
    p['w3'], p['b3'] = fold(w3[:, :, 0, 0], *bn3)                 # (outp, planes), (outp, 1)
    if downsample:
        wd = conv(keys[6], outp, inplanes, 1)                     # nn.Conv2d(..., 1, bias=False)
        p['wd'] = wd[:, :, 0, 0]                                  # (outp, inplanes), no BN
    return p


# ------------------------------------------------------------------------------------- main
if __name__ == "__main__":
    skip_channels = 16      # planes = 4, bottleneck output = 16
    lower_channels = 32

    key = jax.random.PRNGKey(0)
    k_x, k_skip, k_b1, k_b2 = jax.random.split(key, 4)

    x = jax.random.normal(k_x, (2, lower_channels, 8, 8), jnp.float32)         # low-res feature
    skip = jax.random.normal(k_skip, (2, skip_channels, 16, 16), jnp.float32)  # skip feature

    params = {
        'block1': init_bottleneck_params(k_b1, lower_channels, skip_channels // 4, downsample=True),
        'block2': init_bottleneck_params(k_b2, skip_channels, skip_channels // 4, downsample=False),
    }

    out = jax.jit(decoder_block_forward)(x, skip, params)
    out = jax.block_until_ready(out)
    assert out.shape == (2, skip_channels, 16, 16), out.shape
    assert out.dtype == jnp.float32
    print("KERNEL_OK")
</pallas_src>

<mosaic_0001>
module attributes {stable_mosaic.version = 11 : i64} {
  func.func @_decoder_block_kernel(%arg0: i32, %arg1: memref<1x32x64xf32, #tpu.memory_space<vmem>>, %arg2: memref<1x16x256xf32, #tpu.memory_space<vmem>>, %arg3: memref<64x256xf32, #tpu.memory_space<vmem>>, %arg4: memref<9x256x256xf32, #tpu.memory_space<vmem>>, %arg5: memref<4x32xf32, #tpu.memory_space<vmem>>, %arg6: memref<4x1xf32, #tpu.memory_space<vmem>>, %arg7: memref<9x4x4xf32, #tpu.memory_space<vmem>>, %arg8: memref<4x1xf32, #tpu.memory_space<vmem>>, %arg9: memref<16x4xf32, #tpu.memory_space<vmem>>, %arg10: memref<16x1xf32, #tpu.memory_space<vmem>>, %arg11: memref<16x32xf32, #tpu.memory_space<vmem>>, %arg12: memref<4x16xf32, #tpu.memory_space<vmem>>, %arg13: memref<4x1xf32, #tpu.memory_space<vmem>>, %arg14: memref<9x4x4xf32, #tpu.memory_space<vmem>>, %arg15: memref<4x1xf32, #tpu.memory_space<vmem>>, %arg16: memref<16x4xf32, #tpu.memory_space<vmem>>, %arg17: memref<16x1xf32, #tpu.memory_space<vmem>>, %arg18: memref<1x16x256xf32, #tpu.memory_space<vmem>>) attributes {dimension_semantics = [#tpu.dimension_semantics<parallel>], iteration_bounds = array<i64: 2>, scalar_prefetch = 0 : i64, scratch_operands = 0 : i64, tpu.core_type = #tpu.core_type<tc>, window_params = [{transform_indices = @transform_0, window_bounds = array<i64: 1, 32, 64>}, {transform_indices = @transform_1, window_bounds = array<i64: 1, 16, 256>}, {pipeline_mode = #tpu.pipeline_mode<synchronous>, transform_indices = @transform_2, window_bounds = array<i64: 64, 256>}, {pipeline_mode = #tpu.pipeline_mode<synchronous>, transform_indices = @transform_3, window_bounds = array<i64: 9, 256, 256>}, {pipeline_mode = #tpu.pipeline_mode<synchronous>, transform_indices = @transform_4, window_bounds = array<i64: 4, 32>}, {pipeline_mode = #tpu.pipeline_mode<synchronous>, transform_indices = @transform_5, window_bounds = array<i64: 4, 1>}, {pipeline_mode = #tpu.pipeline_mode<synchronous>, transform_indices = @transform_6, window_bounds = array<i64: 9, 4, 4>}, {pipeline_mode = #tpu.pipeline_mode<synchronous>, transform_indices = @transform_7, window_bounds = array<i64: 4, 1>}, {pipeline_mode = #tpu.pipeline_mode<synchronous>, transform_indices = @transform_8, window_bounds = array<i64: 16, 4>}, {pipeline_mode = #tpu.pipeline_mode<synchronous>, transform_indices = @transform_9, window_bounds = array<i64: 16, 1>}, {pipeline_mode = #tpu.pipeline_mode<synchronous>, transform_indices = @transform_10, window_bounds = array<i64: 16, 32>}, {pipeline_mode = #tpu.pipeline_mode<synchronous>, transform_indices = @transform_11, window_bounds = array<i64: 4, 16>}, {pipeline_mode = #tpu.pipeline_mode<synchronous>, transform_indices = @transform_12, window_bounds = array<i64: 4, 1>}, {pipeline_mode = #tpu.pipeline_mode<synchronous>, transform_indices = @transform_13, window_bounds = array<i64: 9, 4, 4>}, {pipeline_mode = #tpu.pipeline_mode<synchronous>, transform_indices = @transform_14, window_bounds = array<i64: 4, 1>}, {pipeline_mode = #tpu.pipeline_mode<synchronous>, transform_indices = @transform_15, window_bounds = array<i64: 16, 4>}, {pipeline_mode = #tpu.pipeline_mode<synchronous>, transform_indices = @transform_16, window_bounds = array<i64: 16, 1>}, {transform_indices = @transform_17, window_bounds = array<i64: 1, 16, 256>}]} {
    %c0 = arith.constant 0 : index
    %c0_0 = arith.constant 0 : index
    %c0_1 = arith.constant 0 : index
    %0 = vector.load %arg1[%c0, %c0_0, %c0_1] : memref<1x32x64xf32, #tpu.memory_space<vmem>>, vector<1x32x64xf32>
    %1 = vector.shape_cast %0 : vector<1x32x64xf32> to vector<32x64xf32>
    %c0_2 = arith.constant 0 : index
    %c0_3 = arith.constant 0 : index
    %c0_4 = arith.constant 0 : index
    %2 = vector.load %arg2[%c0_2, %c0_3, %c0_4] : memref<1x16x256xf32, #tpu.memory_space<vmem>>, vector<1x16x256xf32>
    %3 = vector.shape_cast %2 : vector<1x16x256xf32> to vector<16x256xf32>
    %c0_5 = arith.constant 0 : index
    %c0_6 = arith.constant 0 : index
    %4 = vector.load %arg3[%c0_5, %c0_6] : memref<64x256xf32, #tpu.memory_space<vmem>>, vector<64x256xf32>
    %cst = arith.constant dense<0.000000e+00> : vector<32x256xf32>
    %5 = tpu.matmul %1, %4, %cst {dimension_numbers = #tpu.dot_dimension_numbers<[1], [0], [0], [1], [0, 0, 1, 1], [], []>} : vector<32x64xf32>, vector<64x256xf32>, vector<32x256xf32> -> vector<32x256xf32>
    %c0_7 = arith.constant 0 : index
    %c0_8 = arith.constant 0 : index
    %6 = vector.load %arg11[%c0_7, %c0_8] : memref<16x32xf32, #tpu.memory_space<vmem>>, vector<16x32xf32>
    %cst_9 = arith.constant dense<0.000000e+00> : vector<16x256xf32>
    %7 = tpu.matmul %6, %5, %cst_9 {dimension_numbers = #tpu.dot_dimension_numbers<[1], [0], [0], [1], [0, 0, 1, 1], [], []>} : vector<16x32xf32>, vector<32x256xf32>, vector<16x256xf32> -> vector<16x256xf32>
    %c0_10 = arith.constant 0 : index
    %c0_11 = arith.constant 0 : index
    %8 = vector.load %arg5[%c0_10, %c0_11] : memref<4x32xf32, #tpu.memory_space<vmem>>, vector<4x32xf32>
    %c0_12 = arith.constant 0 : index
    %c0_13 = arith.constant 0 : index
    %9 = vector.load %arg6[%c0_12, %c0_13] : memref<4x1xf32, #tpu.memory_space<vmem>>, vector<4x1xf32>
    %c0_14 = arith.constant 0 : index
    %c0_15 = arith.constant 0 : index
    %10 = vector.load %arg9[%c0_14, %c0_15] : memref<16x4xf32, #tpu.memory_space<vmem>>, vector<16x4xf32>
    %c0_16 = arith.constant 0 : index
    %c0_17 = arith.constant 0 : index
    %11 = vector.load %arg10[%c0_16, %c0_17] : memref<16x1xf32, #tpu.memory_space<vmem>>, vector<16x1xf32>
    %cst_18 = arith.constant dense<0.000000e+00> : vector<4x256xf32>
    %12 = tpu.matmul %8, %5, %cst_18 {dimension_numbers = #tpu.dot_dimension_numbers<[1], [0], [0], [1], [0, 0, 1, 1], [], []>} : vector<4x32xf32>, vector<32x256xf32>, vector<4x256xf32> -> vector<4x256xf32>
    %13 = vector.broadcast %9 : vector<4x1xf32> to vector<4x256xf32>
    %14 = arith.addf %12, %13 : vector<4x256xf32>
    %cst_19 = arith.constant 0.000000e+00 : f32
    %15 = vector.broadcast %cst_19 : f32 to vector<4x256xf32>
    %16 = arith.maximumf %14, %15 : vector<4x256xf32>
    %cst_20 = arith.constant 0.000000e+00 : f32
    %17 = vector.broadcast %cst_20 : f32 to vector<4x256xf32>
    %c0_21 = arith.constant 0 : index
    %c0_22 = arith.constant 0 : index
    %c0_23 = arith.constant 0 : index
    %18 = vector.load %arg4[%c0_21, %c0_22, %c0_23] : memref<9x256x256xf32, #tpu.memory_space<vmem>>, vector<1x256x256xf32>
    %19 = vector.shape_cast %18 : vector<1x256x256xf32> to vector<256x256xf32>
    %cst_24 = arith.constant dense<0.000000e+00> : vector<4x256xf32>
    %20 = tpu.matmul %16, %19, %cst_24 {dimension_numbers = #tpu.dot_dimension_numbers<[1], [0], [0], [1], [0, 0, 1, 1], [], []>} : vector<4x256xf32>, vector<256x256xf32>, vector<4x256xf32> -> vector<4x256xf32>
    %c0_25 = arith.constant 0 : index
    %c0_26 = arith.constant 0 : index
    %c0_27 = arith.constant 0 : index
    %21 = vector.load %arg7[%c0_25, %c0_26, %c0_27] : memref<9x4x4xf32, #tpu.memory_space<vmem>>, vector<1x4x4xf32>
    %22 = vector.shape_cast %21 : vector<1x4x4xf32> to vector<4x4xf32>
    %cst_28 = arith.constant dense<0.000000e+00> : vector<4x256xf32>
    %23 = tpu.matmul %22, %20, %cst_28 {dimension_numbers = #tpu.dot_dimension_numbers<[1], [0], [0], [1], [0, 0, 1, 1], [], []>} : vector<4x4xf32>, vector<4x256xf32>, vector<4x256xf32> -> vector<4x256xf32>
    %24 = arith.addf %17, %23 : vector<4x256xf32>
    %c1 = arith.constant 1 : index
    %c0_29 = arith.constant 0 : index
    %c0_30 = arith.constant 0 : index
    %25 = vector.load %arg4[%c1, %c0_29, %c0_30] : memref<9x256x256xf32, #tpu.memory_space<vmem>>, vector<1x256x256xf32>
    %26 = vector.shape_cast %25 : vector<1x256x256xf32> to vector<256x256xf32>
    %cst_31 = arith.constant dense<0.000000e+00> : vector<4x256xf32>
    %27 = tpu.matmul %16, %26, %cst_31 {dimension_numbers = #tpu.dot_dimension_numbers<[1], [0], [0], [1], [0, 0, 1, 1], [], []>} : vector<4x256xf32>, vector<256x256xf32>, vector<4x256xf32> -> vector<4x256xf32>
    %c1_32 = arith.constant 1 : index
    %c0_33 = arith.constant 0 : index
    %c0_34 = arith.constant 0 : index
    %28 = vector.load %arg7[%c1_32, %c0_33, %c0_34] : memref<9x4x4xf32, #tpu.memory_space<vmem>>, vector<1x4x4xf32>
    %29 = vector.shape_cast %28 : vector<1x4x4xf32> to vector<4x4xf32>
    %cst_35 = arith.constant dense<0.000000e+00> : vector<4x256xf32>
    %30 = tpu.matmul %29, %27, %cst_35 {dimension_numbers = #tpu.dot_dimension_numbers<[1], [0], [0], [1], [0, 0, 1, 1], [], []>} : vector<4x4xf32>, vector<4x256xf32>, vector<4x256xf32> -> vector<4x256xf32>
    %31 = arith.addf %24, %30 : vector<4x256xf32>
    %c2 = arith.constant 2 : index
    %c0_36 = arith.constant 0 : index
    %c0_37 = arith.constant 0 : index
    %32 = vector.load %arg4[%c2, %c0_36, %c0_37] : memref<9x256x256xf32, #tpu.memory_space<vmem>>, vector<1x256x256xf32>
    %33 = vector.shape_cast %32 : vector<1x256x256xf32> to vector<256x256xf32>
    %cst_38 = arith.constant dense<0.000000e+00> : vector<4x256xf32>
    %34 = tpu.matmul %16, %33, %cst_38 {dimension_numbers = #tpu.dot_dimension_numbers<[1], [0], [0], [1], [0, 0, 1, 1], [], []>} : vector<4x256xf32>, vector<256x256xf32>, vector<4x256xf32> -> vector<4x256xf32>
    %c2_39 = arith.constant 2 : index
    %c0_40 = arith.constant 0 : index
    %c0_41 = arith.constant 0 : index
    %35 = vector.load %arg7[%c2_39, %c0_40, %c0_41] : memref<9x4x4xf32, #tpu.memory_space<vmem>>, vector<1x4x4xf32>
    %36 = vector.shape_cast %35 : vector<1x4x4xf32> to vector<4x4xf32>
    %cst_42 = arith.constant dense<0.000000e+00> : vector<4x256xf32>
    %37 = tpu.matmul %36, %34, %cst_42 {dimension_numbers = #tpu.dot_dimension_numbers<[1], [0], [0], [1], [0, 0, 1, 1], [], []>} : vector<4x4xf32>, vector<4x256xf32>, vector<4x256xf32> -> vector<4x256xf32>
    %38 = arith.addf %31, %37 : vector<4x256xf32>
    %c3 = arith.constant 3 : index
    %c0_43 = arith.constant 0 : index
    %c0_44 = arith.constant 0 : index
    %39 = vector.load %arg4[%c3, %c0_43, %c0_44] : memref<9x256x256xf32, #tpu.memory_space<vmem>>, vector<1x256x256xf32>
    %40 = vector.shape_cast %39 : vector<1x256x256xf32> to vector<256x256xf32>
    %cst_45 = arith.constant dense<0.000000e+00> : vector<4x256xf32>
    %41 = tpu.matmul %16, %40, %cst_45 {dimension_numbers = #tpu.dot_dimension_numbers<[1], [0], [0], [1], [0, 0, 1, 1], [], []>} : vector<4x256xf32>, vector<256x256xf32>, vector<4x256xf32> -> vector<4x256xf32>
    %c3_46 = arith.constant 3 : index
    %c0_47 = arith.constant 0 : index
    %c0_48 = arith.constant 0 : index
    %42 = vector.load %arg7[%c3_46, %c0_47, %c0_48] : memref<9x4x4xf32, #tpu.memory_space<vmem>>, vector<1x4x4xf32>
    %43 = vector.shape_cast %42 : vector<1x4x4xf32> to vector<4x4xf32>
    %cst_49 = arith.constant dense<0.000000e+00> : vector<4x256xf32>
    %44 = tpu.matmul %43, %41, %cst_49 {dimension_numbers = #tpu.dot_dimension_numbers<[1], [0], [0], [1], [0, 0, 1, 1], [], []>} : vector<4x4xf32>, vector<4x256xf32>, vector<4x256xf32> -> vector<4x256xf32>
    %45 = arith.addf %38, %44 : vector<4x256xf32>
    %c4 = arith.constant 4 : index
    %c0_50 = arith.constant 0 : index
    %c0_51 = arith.constant 0 : index
    %46 = vector.load %arg4[%c4, %c0_50, %c0_51] : memref<9x256x256xf32, #tpu.memory_space<vmem>>, vector<1x256x256xf32>
    %47 = vector.shape_cast %46 : vector<1x256x256xf32> to vector<256x256xf32>
    %cst_52 = arith.constant dense<0.000000e+00> : vector<4x256xf32>
    %48 = tpu.matmul %16, %47, %cst_52 {dimension_numbers = #tpu.dot_dimension_numbers<[1], [0], [0], [1], [0, 0, 1, 1], [], []>} : vector<4x256xf32>, vector<256x256xf32>, vector<4x256xf32> -> vector<4x256xf32>
    %c4_53 = arith.constant 4 : index
    %c0_54 = arith.constant 0 : index
    %c0_55 = arith.constant 0 : index
    %49 = vector.load %arg7[%c4_53, %c0_54, %c0_55] : memref<9x4x4xf32, #tpu.memory_space<vmem>>, vector<1x4x4xf32>
    %50 = vector.shape_cast %49 : vector<1x4x4xf32> to vector<4x4xf32>
    %cst_56 = arith.constant dense<0.000000e+00> : vector<4x256xf32>
    %51 = tpu.matmul %50, %48, %cst_56 {dimension_numbers = #tpu.dot_dimension_numbers<[1], [0], [0], [1], [0, 0, 1, 1], [], []>} : vector<4x4xf32>, vector<4x256xf32>, vector<4x256xf32> -> vector<4x256xf32>
    %52 = arith.addf %45, %51 : vector<4x256xf32>
    %c5 = arith.constant 5 : index
    %c0_57 = arith.constant 0 : index
    %c0_58 = arith.constant 0 : index
    %53 = vector.load %arg4[%c5, %c0_57, %c0_58] : memref<9x256x256xf32, #tpu.memory_space<vmem>>, vector<1x256x256xf32>
    %54 = vector.shape_cast %53 : vector<1x256x256xf32> to vector<256x256xf32>
    %cst_59 = arith.constant dense<0.000000e+00> : vector<4x256xf32>
    %55 = tpu.matmul %16, %54, %cst_59 {dimension_numbers = #tpu.dot_dimension_numbers<[1], [0], [0], [1], [0, 0, 1, 1], [], []>} : vector<4x256xf32>, vector<256x256xf32>, vector<4x256xf32> -> vector<4x256xf32>
    %c5_60 = arith.constant 5 : index
    %c0_61 = arith.constant 0 : index
    %c0_62 = arith.constant 0 : index
    %56 = vector.load %arg7[%c5_60, %c0_61, %c0_62] : memref<9x4x4xf32, #tpu.memory_space<vmem>>, vector<1x4x4xf32>
    %57 = vector.shape_cast %56 : vector<1x4x4xf32> to vector<4x4xf32>
    %cst_63 = arith.constant dense<0.000000e+00> : vector<4x256xf32>
    %58 = tpu.matmul %57, %55, %cst_63 {dimension_numbers = #tpu.dot_dimension_numbers<[1], [0], [0], [1], [0, 0, 1, 1], [], []>} : vector<4x4xf32>, vector<4x256xf32>, vector<4x256xf32> -> vector<4x256xf32>
    %59 = arith.addf %52, %58 : vector<4x256xf32>
    %c6 = arith.constant 6 : index
    %c0_64 = arith.constant 0 : index
    %c0_65 = arith.constant 0 : index
    %60 = vector.load %arg4[%c6, %c0_64, %c0_65] : memref<9x256x256xf32, #tpu.memory_space<vmem>>, vector<1x256x256xf32>
    %61 = vector.shape_cast %60 : vector<1x256x256xf32> to vector<256x256xf32>
    %cst_66 = arith.constant dense<0.000000e+00> : vector<4x256xf32>
    %62 = tpu.matmul %16, %61, %cst_66 {dimension_numbers = #tpu.dot_dimension_numbers<[1], [0], [0], [1], [0, 0, 1, 1], [], []>} : vector<4x256xf32>, vector<256x256xf32>, vector<4x256xf32> -> vector<4x256xf32>
    %c6_67 = arith.constant 6 : index
    %c0_68 = arith.constant 0 : index
    %c0_69 = arith.constant 0 : index
    %63 = vector.load %arg7[%c6_67, %c0_68, %c0_69] : memref<9x4x4xf32, #tpu.memory_space<vmem>>, vector<1x4x4xf32>
    %64 = vector.shape_cast %63 : vector<1x4x4xf32> to vector<4x4xf32>
    %cst_70 = arith.constant dense<0.000000e+00> : vector<4x256xf32>
    %65 = tpu.matmul %64, %62, %cst_70 {dimension_numbers = #tpu.dot_dimension_numbers<[1], [0], [0], [1], [0, 0, 1, 1], [], []>} : vector<4x4xf32>, vector<4x256xf32>, vector<4x256xf32> -> vector<4x256xf32>
    %66 = arith.addf %59, %65 : vector<4x256xf32>
    %c7 = arith.constant 7 : index
    %c0_71 = arith.constant 0 : index
    %c0_72 = arith.constant 0 : index
    %67 = vector.load %arg4[%c7, %c0_71, %c0_72] : memref<9x256x256xf32, #tpu.memory_space<vmem>>, vector<1x256x256xf32>
    %68 = vector.shape_cast %67 : vector<1x256x256xf32> to vector<256x256xf32>
    %cst_73 = arith.constant dense<0.000000e+00> : vector<4x256xf32>
    %69 = tpu.matmul %16, %68, %cst_73 {dimension_numbers = #tpu.dot_dimension_numbers<[1], [0], [0], [1], [0, 0, 1, 1], [], []>} : vector<4x256xf32>, vector<256x256xf32>, vector<4x256xf32> -> vector<4x256xf32>
    %c7_74 = arith.constant 7 : index
    %c0_75 = arith.constant 0 : index
    %c0_76 = arith.constant 0 : index
    %70 = vector.load %arg7[%c7_74, %c0_75, %c0_76] : memref<9x4x4xf32, #tpu.memory_space<vmem>>, vector<1x4x4xf32>
    %71 = vector.shape_cast %70 : vector<1x4x4xf32> to vector<4x4xf32>
    %cst_77 = arith.constant dense<0.000000e+00> : vector<4x256xf32>
    %72 = tpu.matmul %71, %69, %cst_77 {dimension_numbers = #tpu.dot_dimension_numbers<[1], [0], [0], [1], [0, 0, 1, 1], [], []>} : vector<4x4xf32>, vector<4x256xf32>, vector<4x256xf32> -> vector<4x256xf32>
    %73 = arith.addf %66, %72 : vector<4x256xf32>
    %c8 = arith.constant 8 : index
    %c0_78 = arith.constant 0 : index
    %c0_79 = arith.constant 0 : index
    %74 = vector.load %arg4[%c8, %c0_78, %c0_79] : memref<9x256x256xf32, #tpu.memory_space<vmem>>, vector<1x256x256xf32>
    %75 = vector.shape_cast %74 : vector<1x256x256xf32> to vector<256x256xf32>
    %cst_80 = arith.constant dense<0.000000e+00> : vector<4x256xf32>
    %76 = tpu.matmul %16, %75, %cst_80 {dimension_numbers = #tpu.dot_dimension_numbers<[1], [0], [0], [1], [0, 0, 1, 1], [], []>} : vector<4x256xf32>, vector<256x256xf32>, vector<4x256xf32> -> vector<4x256xf32>
    %c8_81 = arith.constant 8 : index
    %c0_82 = arith.constant 0 : index
    %c0_83 = arith.constant 0 : index
    %77 = vector.load %arg7[%c8_81, %c0_82, %c0_83] : memref<9x4x4xf32, #tpu.memory_space<vmem>>, vector<1x4x4xf32>
    %78 = vector.shape_cast %77 : vector<1x4x4xf32> to vector<4x4xf32>
    %cst_84 = arith.constant dense<0.000000e+00> : vector<4x256xf32>
    %79 = tpu.matmul %78, %76, %cst_84 {dimension_numbers = #tpu.dot_dimension_numbers<[1], [0], [0], [1], [0, 0, 1, 1], [], []>} : vector<4x4xf32>, vector<4x256xf32>, vector<4x256xf32> -> vector<4x256xf32>
    %80 = arith.addf %73, %79 : vector<4x256xf32>
    %c0_85 = arith.constant 0 : index
    %c0_86 = arith.constant 0 : index
    %81 = vector.load %arg8[%c0_85, %c0_86] : memref<4x1xf32, #tpu.memory_space<vmem>>, vector<4x1xf32>
    %82 = vector.broadcast %81 : vector<4x1xf32> to vector<4x256xf32>
    %83 = arith.addf %80, %82 : vector<4x256xf32>
    %cst_87 = arith.constant 0.000000e+00 : f32
    %84 = vector.broadcast %cst_87 : f32 to vector<4x256xf32>
    %85 = arith.maximumf %83, %84 : vector<4x256xf32>
    %cst_88 = arith.constant dense<0.000000e+00> : vector<16x256xf32>
    %86 = tpu.matmul %10, %85, %cst_88 {dimension_numbers = #tpu.dot_dimension_numbers<[1], [0], [0], [1], [0, 0, 1, 1], [], []>} : vector<16x4xf32>, vector<4x256xf32>, vector<16x256xf32> -> vector<16x256xf32>
    %87 = vector.broadcast %11 : vector<16x1xf32> to vector<16x256xf32>
    %88 = arith.addf %86, %87 : vector<16x256xf32>
    %89 = arith.addf %88, %7 : vector<16x256xf32>
    %cst_89 = arith.constant 0.000000e+00 : f32
    %90 = vector.broadcast %cst_89 : f32 to vector<16x256xf32>
    %91 = arith.maximumf %89, %90 : vector<16x256xf32>
    %92 = arith.addf %91, %3 : vector<16x256xf32>
    %c0_90 = arith.constant 0 : index
    %c0_91 = arith.constant 0 : index
    %93 = vector.load %arg12[%c0_90, %c0_91] : memref<4x16xf32, #tpu.memory_space<vmem>>, vector<4x16xf32>
    %c0_92 = arith.constant 0 : index
    %c0_93 = arith.constant 0 : index
    %94 = vector.load %arg13[%c0_92, %c0_93] : memref<4x1xf32, #tpu.memory_space<vmem>>, vector<4x1xf32>
    %c0_94 = arith.constant 0 : index
    %c0_95 = arith.constant 0 : index
    %95 = vector.load %arg16[%c0_94, %c0_95] : memref<16x4xf32, #tpu.memory_space<vmem>>, vector<16x4xf32>
    %c0_96 = arith.constant 0 : index
    %c0_97 = arith.constant 0 : index
    %96 = vector.load %arg17[%c0_96, %c0_97] : memref<16x1xf32, #tpu.memory_space<vmem>>, vector<16x1xf32>
    %cst_98 = arith.constant dense<0.000000e+00> : vector<4x256xf32>
    %97 = tpu.matmul %93, %92, %cst_98 {dimension_numbers = #tpu.dot_dimension_numbers<[1], [0], [0], [1], [0, 0, 1, 1], [], []>} : vector<4x16xf32>, vector<16x256xf32>, vector<4x256xf32> -> vector<4x256xf32>
    %98 = vector.broadcast %94 : vector<4x1xf32> to vector<4x256xf32>
    %99 = arith.addf %97, %98 : vector<4x256xf32>
    %cst_99 = arith.constant 0.000000e+00 : f32
    %100 = vector.broadcast %cst_99 : f32 to vector<4x256xf32>
    %101 = arith.maximumf %99, %100 : vector<4x256xf32>
    %cst_100 = arith.constant 0.000000e+00 : f32
    %102 = vector.broadcast %cst_100 : f32 to vector<4x256xf32>
    %c0_101 = arith.constant 0 : index
    %c0_102 = arith.constant 0 : index
    %c0_103 = arith.constant 0 : index
    %103 = vector.load %arg4[%c0_101, %c0_102, %c0_103] : memref<9x256x256xf32, #tpu.memory_space<vmem>>, vector<1x256x256xf32>
    %104 = vector.shape_cast %103 : vector<1x256x256xf32> to vector<256x256xf32>
    %cst_104 = arith.constant dense<0.000000e+00> : vector<4x256xf32>
    %105 = tpu.matmul %101, %104, %cst_104 {dimension_numbers = #tpu.dot_dimension_numbers<[1], [0], [0], [1], [0, 0, 1, 1], [], []>} : vector<4x256xf32>, vector<256x256xf32>, vector<4x256xf32> -> vector<4x256xf32>
    %c0_105 = arith.constant 0 : index
    %c0_106 = arith.constant 0 : index
    %c0_107 = arith.constant 0 : index
    %106 = vector.load %arg14[%c0_105, %c0_106, %c0_107] : memref<9x4x4xf32, #tpu.memory_space<vmem>>, vector<1x4x4xf32>
    %107 = vector.shape_cast %106 : vector<1x4x4xf32> to vector<4x4xf32>
    %cst_108 = arith.constant dense<0.000000e+00> : vector<4x256xf32>
    %108 = tpu.matmul %107, %105, %cst_108 {dimension_numbers = #tpu.dot_dimension_numbers<[1], [0], [0], [1], [0, 0, 1, 1], [], []>} : vector<4x4xf32>, vector<4x256xf32>, vector<4x256xf32> -> vector<4x256xf32>
    %109 = arith.addf %102, %108 : vector<4x256xf32>
    %c1_109 = arith.constant 1 : index
    %c0_110 = arith.constant 0 : index
    %c0_111 = arith.constant 0 : index
    %110 = vector.load %arg4[%c1_109, %c0_110, %c0_111] : memref<9x256x256xf32, #tpu.memory_space<vmem>>, vector<1x256x256xf32>
    %111 = vector.shape_cast %110 : vector<1x256x256xf32> to vector<256x256xf32>
    %cst_112 = arith.constant dense<0.000000e+00> : vector<4x256xf32>
    %112 = tpu.matmul %101, %111, %cst_112 {dimension_numbers = #tpu.dot_dimension_numbers<[1], [0], [0], [1], [0, 0, 1, 1], [], []>} : vector<4x256xf32>, vector<256x256xf32>, vector<4x256xf32> -> vector<4x256xf32>
    %c1_113 = arith.constant 1 : index
    %c0_114 = arith.constant 0 : index
    %c0_115 = arith.constant 0 : index
    %113 = vector.load %arg14[%c1_113, %c0_114, %c0_115] : memref<9x4x4xf32, #tpu.memory_space<vmem>>, vector<1x4x4xf32>
    %114 = vector.shape_cast %113 : vector<1x4x4xf32> to vector<4x4xf32>
    %cst_116 = arith.constant dense<0.000000e+00> : vector<4x256xf32>
    %115 = tpu.matmul %114, %112, %cst_116 {dimension_numbers = #tpu.dot_dimension_numbers<[1], [0], [0], [1], [0, 0, 1, 1], [], []>} : vector<4x4xf32>, vector<4x256xf32>, vector<4x256xf32> -> vector<4x256xf32>
    %116 = arith.addf %109, %115 : vector<4x256xf32>
    %c2_117 = arith.constant 2 : index
    %c0_118 = arith.constant 0 : index
    %c0_119 = arith.constant 0 : index
    %117 = vector.load %arg4[%c2_117, %c0_118, %c0_119] : memref<9x256x256xf32, #tpu.memory_space<vmem>>, vector<1x256x256xf32>
    %118 = vector.shape_cast %117 : vector<1x256x256xf32> to vector<256x256xf32>
    %cst_120 = arith.constant dense<0.000000e+00> : vector<4x256xf32>
    %119 = tpu.matmul %101, %118, %cst_120 {dimension_numbers = #tpu.dot_dimension_numbers<[1], [0], [0], [1], [0, 0, 1, 1], [], []>} : vector<4x256xf32>, vector<256x256xf32>, vector<4x256xf32> -> vector<4x256xf32>
    %c2_121 = arith.constant 2 : index
    %c0_122 = arith.constant 0 : index
    %c0_123 = arith.constant 0 : index
    %120 = vector.load %arg14[%c2_121, %c0_122, %c0_123] : memref<9x4x4xf32, #tpu.memory_space<vmem>>, vector<1x4x4xf32>
    %121 = vector.shape_cast %120 : vector<1x4x4xf32> to vector<4x4xf32>
    %cst_124 = arith.constant dense<0.000000e+00> : vector<4x256xf32>
    %122 = tpu.matmul %121, %119, %cst_124 {dimension_numbers = #tpu.dot_dimension_numbers<[1], [0], [0], [1], [0, 0, 1, 1], [], []>} : vector<4x4xf32>, vector<4x256xf32>, vector<4x256xf32> -> vector<4x256xf32>
    %123 = arith.addf %116, %122 : vector<4x256xf32>
    %c3_125 = arith.constant 3 : index
    %c0_126 = arith.constant 0 : index
    %c0_127 = arith.constant 0 : index
    %124 = vector.load %arg4[%c3_125, %c0_126, %c0_127] : memref<9x256x256xf32, #tpu.memory_space<vmem>>, vector<1x256x256xf32>
    %125 = vector.shape_cast %124 : vector<1x256x256xf32> to vector<256x256xf32>
    %cst_128 = arith.constant dense<0.000000e+00> : vector<4x256xf32>
    %126 = tpu.matmul %101, %125, %cst_128 {dimension_numbers = #tpu.dot_dimension_numbers<[1], [0], [0], [1], [0, 0, 1, 1], [], []>} : vector<4x256xf32>, vector<256x256xf32>, vector<4x256xf32> -> vector<4x256xf32>
    %c3_129 = arith.constant 3 : index
    %c0_130 = arith.constant 0 : index
    %c0_131 = arith.constant 0 : index
    %127 = vector.load %arg14[%c3_129, %c0_130, %c0_131] : memref<9x4x4xf32, #tpu.memory_space<vmem>>, vector<1x4x4xf32>
    %128 = vector.shape_cast %127 : vector<1x4x4xf32> to vector<4x4xf32>
    %cst_132 = arith.constant dense<0.000000e+00> : vector<4x256xf32>
    %129 = tpu.matmul %128, %126, %cst_132 {dimension_numbers = #tpu.dot_dimension_numbers<[1], [0], [0], [1], [0, 0, 1, 1], [], []>} : vector<4x4xf32>, vector<4x256xf32>, vector<4x256xf32> -> vector<4x256xf32>
    %130 = arith.addf %123, %129 : vector<4x256xf32>
    %c4_133 = arith.constant 4 : index
    %c0_134 = arith.constant 0 : index
    %c0_135 = arith.constant 0 : index
    %131 = vector.load %arg4[%c4_133, %c0_134, %c0_135] : memref<9x256x256xf32, #tpu.memory_space<vmem>>, vector<1x256x256xf32>
    %132 = vector.shape_cast %131 : vector<1x256x256xf32> to vector<256x256xf32>
    %cst_136 = arith.constant dense<0.000000e+00> : vector<4x256xf32>
    %133 = tpu.matmul %101, %132, %cst_136 {dimension_numbers = #tpu.dot_dimension_numbers<[1], [0], [0], [1], [0, 0, 1, 1], [], []>} : vector<4x256xf32>, vector<256x256xf32>, vector<4x256xf32> -> vector<4x256xf32>
    %c4_137 = arith.constant 4 : index
    %c0_138 = arith.constant 0 : index
    %c0_139 = arith.constant 0 : index
    %134 = vector.load %arg14[%c4_137, %c0_138, %c0_139] : memref<9x4x4xf32, #tpu.memory_space<vmem>>, vector<1x4x4xf32>
    %135 = vector.shape_cast %134 : vector<1x4x4xf32> to vector<4x4xf32>
    %cst_140 = arith.constant dense<0.000000e+00> : vector<4x256xf32>
    %136 = tpu.matmul %135, %133, %cst_140 {dimension_numbers = #tpu.dot_dimension_numbers<[1], [0], [0], [1], [0, 0, 1, 1], [], []>} : vector<4x4xf32>, vector<4x256xf32>, vector<4x256xf32> -> vector<4x256xf32>
    %137 = arith.addf %130, %136 : vector<4x256xf32>
    %c5_141 = arith.constant 5 : index
    %c0_142 = arith.constant 0 : index
    %c0_143 = arith.constant 0 : index
    %138 = vector.load %arg4[%c5_141, %c0_142, %c0_143] : memref<9x256x256xf32, #tpu.memory_space<vmem>>, vector<1x256x256xf32>
    %139 = vector.shape_cast %138 : vector<1x256x256xf32> to vector<256x256xf32>
    %cst_144 = arith.constant dense<0.000000e+00> : vector<4x256xf32>
    %140 = tpu.matmul %101, %139, %cst_144 {dimension_numbers = #tpu.dot_dimension_numbers<[1], [0], [0], [1], [0, 0, 1, 1], [], []>} : vector<4x256xf32>, vector<256x256xf32>, vector<4x256xf32> -> vector<4x256xf32>
    %c5_145 = arith.constant 5 : index
    %c0_146 = arith.constant 0 : index
    %c0_147 = arith.constant 0 : index
    %141 = vector.load %arg14[%c5_145, %c0_146, %c0_147] : memref<9x4x4xf32, #tpu.memory_space<vmem>>, vector<1x4x4xf32>
    %142 = vector.shape_cast %141 : vector<1x4x4xf32> to vector<4x4xf32>
    %cst_148 = arith.constant dense<0.000000e+00> : vector<4x256xf32>
    %143 = tpu.matmul %142, %140, %cst_148 {dimension_numbers = #tpu.dot_dimension_numbers<[1], [0], [0], [1], [0, 0, 1, 1], [], []>} : vector<4x4xf32>, vector<4x256xf32>, vector<4x256xf32> -> vector<4x256xf32>
    %144 = arith.addf %137, %143 : vector<4x256xf32>
    %c6_149 = arith.constant 6 : index
    %c0_150 = arith.constant 0 : index
    %c0_151 = arith.constant 0 : index
    %145 = vector.load %arg4[%c6_149, %c0_150, %c0_151] : memref<9x256x256xf32, #tpu.memory_space<vmem>>, vector<1x256x256xf32>
    %146 = vector.shape_cast %145 : vector<1x256x256xf32> to vector<256x256xf32>
    %cst_152 = arith.constant dense<0.000000e+00> : vector<4x256xf32>
    %147 = tpu.matmul %101, %146, %cst_152 {dimension_numbers = #tpu.dot_dimension_numbers<[1], [0], [0], [1], [0, 0, 1, 1], [], []>} : vector<4x256xf32>, vector<256x256xf32>, vector<4x256xf32> -> vector<4x256xf32>
    %c6_153 = arith.constant 6 : index
    %c0_154 = arith.constant 0 : index
    %c0_155 = arith.constant 0 : index
    %148 = vector.load %arg14[%c6_153, %c0_154, %c0_155] : memref<9x4x4xf32, #tpu.memory_space<vmem>>, vector<1x4x4xf32>
    %149 = vector.shape_cast %148 : vector<1x4x4xf32> to vector<4x4xf32>
    %cst_156 = arith.constant dense<0.000000e+00> : vector<4x256xf32>
    %150 = tpu.matmul %149, %147, %cst_156 {dimension_numbers = #tpu.dot_dimension_numbers<[1], [0], [0], [1], [0, 0, 1, 1], [], []>} : vector<4x4xf32>, vector<4x256xf32>, vector<4x256xf32> -> vector<4x256xf32>
    %151 = arith.addf %144, %150 : vector<4x256xf32>
    %c7_157 = arith.constant 7 : index
    %c0_158 = arith.constant 0 : index
    %c0_159 = arith.constant 0 : index
    %152 = vector.load %arg4[%c7_157, %c0_158, %c0_159] : memref<9x256x256xf32, #tpu.memory_space<vmem>>, vector<1x256x256xf32>
    %153 = vector.shape_cast %152 : vector<1x256x256xf32> to vector<256x256xf32>
    %cst_160 = arith.constant dense<0.000000e+00> : vector<4x256xf32>
    %154 = tpu.matmul %101, %153, %cst_160 {dimension_numbers = #tpu.dot_dimension_numbers<[1], [0], [0], [1], [0, 0, 1, 1], [], []>} : vector<4x256xf32>, vector<256x256xf32>, vector<4x256xf32> -> vector<4x256xf32>
    %c7_161 = arith.constant 7 : index
    %c0_162 = arith.constant 0 : index
    %c0_163 = arith.constant 0 : index
    %155 = vector.load %arg14[%c7_161, %c0_162, %c0_163] : memref<9x4x4xf32, #tpu.memory_space<vmem>>, vector<1x4x4xf32>
    %156 = vector.shape_cast %155 : vector<1x4x4xf32> to vector<4x4xf32>
    %cst_164 = arith.constant dense<0.000000e+00> : vector<4x256xf32>
    %157 = tpu.matmul %156, %154, %cst_164 {dimension_numbers = #tpu.dot_dimension_numbers<[1], [0], [0], [1], [0, 0, 1, 1], [], []>} : vector<4x4xf32>, vector<4x256xf32>, vector<4x256xf32> -> vector<4x256xf32>
    %158 = arith.addf %151, %157 : vector<4x256xf32>
    %c8_165 = arith.constant 8 : index
    %c0_166 = arith.constant 0 : index
    %c0_167 = arith.constant 0 : index
    %159 = vector.load %arg4[%c8_165, %c0_166, %c0_167] : memref<9x256x256xf32, #tpu.memory_space<vmem>>, vector<1x256x256xf32>
    %160 = vector.shape_cast %159 : vector<1x256x256xf32> to vector<256x256xf32>
    %cst_168 = arith.constant dense<0.000000e+00> : vector<4x256xf32>
    %161 = tpu.matmul %101, %160, %cst_168 {dimension_numbers = #tpu.dot_dimension_numbers<[1], [0], [0], [1], [0, 0, 1, 1], [], []>} : vector<4x256xf32>, vector<256x256xf32>, vector<4x256xf32> -> vector<4x256xf32>
    %c8_169 = arith.constant 8 : index
    %c0_170 = arith.constant 0 : index
    %c0_171 = arith.constant 0 : index
    %162 = vector.load %arg14[%c8_169, %c0_170, %c0_171] : memref<9x4x4xf32, #tpu.memory_space<vmem>>, vector<1x4x4xf32>
    %163 = vector.shape_cast %162 : vector<1x4x4xf32> to vector<4x4xf32>
    %cst_172 = arith.constant dense<0.000000e+00> : vector<4x256xf32>
    %164 = tpu.matmul %163, %161, %cst_172 {dimension_numbers = #tpu.dot_dimension_numbers<[1], [0], [0], [1], [0, 0, 1, 1], [], []>} : vector<4x4xf32>, vector<4x256xf32>, vector<4x256xf32> -> vector<4x256xf32>
    %165 = arith.addf %158, %164 : vector<4x256xf32>
    %c0_173 = arith.constant 0 : index
    %c0_174 = arith.constant 0 : index
    %166 = vector.load %arg15[%c0_173, %c0_174] : memref<4x1xf32, #tpu.memory_space<vmem>>, vector<4x1xf32>
    %167 = vector.broadcast %166 : vector<4x1xf32> to vector<4x256xf32>
    %168 = arith.addf %165, %167 : vector<4x256xf32>
    %cst_175 = arith.constant 0.000000e+00 : f32
    %169 = vector.broadcast %cst_175 : f32 to vector<4x256xf32>
    %170 = arith.maximumf %168, %169 : vector<4x256xf32>
    %cst_176 = arith.constant dense<0.000000e+00> : vector<16x256xf32>
    %171 = tpu.matmul %95, %170, %cst_176 {dimension_numbers = #tpu.dot_dimension_numbers<[1], [0], [0], [1], [0, 0, 1, 1], [], []>} : vector<16x4xf32>, vector<4x256xf32>, vector<16x256xf32> -> vector<16x256xf32>
    %172 = vector.broadcast %96 : vector<16x1xf32> to vector<16x256xf32>
    %173 = arith.addf %171, %172 : vector<16x256xf32>
    %174 = arith.addf %173, %92 : vector<16x256xf32>
    %cst_177 = arith.constant 0.000000e+00 : f32
    %175 = vector.broadcast %cst_177 : f32 to vector<16x256xf32>
    %176 = arith.maximumf %174, %175 : vector<16x256xf32>
    %c0_178 = arith.constant 0 : index
    %c0_179 = arith.constant 0 : index
    %c0_180 = arith.constant 0 : index
    %177 = vector.load %arg18[%c0_178, %c0_179, %c0_180] : memref<1x16x256xf32, #tpu.memory_space<vmem>>, vector<1x16x256xf32>
    %178 = vector.shape_cast %177 : vector<1x16x256xf32> to vector<16x256xf32>
    %179 = vector.shape_cast %176 : vector<16x256xf32> to vector<1x16x256xf32>
    tpu.vector_store %arg18[%c0_178, %c0_179, %c0_180], %179 {strides = array<i32>} : memref<1x16x256xf32, #tpu.memory_space<vmem>>, vector<1x16x256xf32>,
    return
  }
  func.func @transform_0(%arg0: i32) -> (i32, i32, i32) {
    %c0_i32 = arith.constant 0 : i32
    %c0_i32_0 = arith.constant 0 : i32
    %c0_i32_1 = arith.constant 0 : i32
    return %arg0, %c0_i32, %c0_i32_0 : i32, i32, i32
  }
  func.func @transform_1(%arg0: i32) -> (i32, i32, i32) {
    %c0_i32 = arith.constant 0 : i32
    %c0_i32_0 = arith.constant 0 : i32
    %c0_i32_1 = arith.constant 0 : i32
    return %arg0, %c0_i32, %c0_i32_0 : i32, i32, i32
  }
  func.func @transform_2(%arg0: i32) -> (i32, i32) {
    %c0_i32 = arith.constant 0 : i32
    %c0_i32_0 = arith.constant 0 : i32
    %c0_i32_1 = arith.constant 0 : i32
    return %c0_i32, %c0_i32_0 : i32, i32
  }
  func.func @transform_3(%arg0: i32) -> (i32, i32, i32) {
    %c0_i32 = arith.constant 0 : i32
    %c0_i32_0 = arith.constant 0 : i32
    %c0_i32_1 = arith.constant 0 : i32
    %c0_i32_2 = arith.constant 0 : i32
    return %c0_i32, %c0_i32_0, %c0_i32_1 : i32, i32, i32
  }
  func.func @transform_4(%arg0: i32) -> (i32, i32) {
    %c0_i32 = arith.constant 0 : i32
    %c0_i32_0 = arith.constant 0 : i32
    %c0_i32_1 = arith.constant 0 : i32
    return %c0_i32, %c0_i32_0 : i32, i32
  }
  func.func @transform_5(%arg0: i32) -> (i32, i32) {
    %c0_i32 = arith.constant 0 : i32
    %c0_i32_0 = arith.constant 0 : i32
    %c0_i32_1 = arith.constant 0 : i32
    return %c0_i32, %c0_i32_0 : i32, i32
  }
  func.func @transform_6(%arg0: i32) -> (i32, i32, i32) {
    %c0_i32 = arith.constant 0 : i32
    %c0_i32_0 = arith.constant 0 : i32
    %c0_i32_1 = arith.constant 0 : i32
    %c0_i32_2 = arith.constant 0 : i32
    return %c0_i32, %c0_i32_0, %c0_i32_1 : i32, i32, i32
  }
  func.func @transform_7(%arg0: i32) -> (i32, i32) {
    %c0_i32 = arith.constant 0 : i32
    %c0_i32_0 = arith.constant 0 : i32
    %c0_i32_1 = arith.constant 0 : i32
    return %c0_i32, %c0_i32_0 : i32, i32
  }
  func.func @transform_8(%arg0: i32) -> (i32, i32) {
    %c0_i32 = arith.constant 0 : i32
    %c0_i32_0 = arith.constant 0 : i32
    %c0_i32_1 = arith.constant 0 : i32
    return %c0_i32, %c0_i32_0 : i32, i32
  }
  func.func @transform_9(%arg0: i32) -> (i32, i32) {
    %c0_i32 = arith.constant 0 : i32
    %c0_i32_0 = arith.constant 0 : i32
    %c0_i32_1 = arith.constant 0 : i32
    return %c0_i32, %c0_i32_0 : i32, i32
  }
  func.func @transform_10(%arg0: i32) -> (i32, i32) {
    %c0_i32 = arith.constant 0 : i32
    %c0_i32_0 = arith.constant 0 : i32
    %c0_i32_1 = arith.constant 0 : i32
    return %c0_i32, %c0_i32_0 : i32, i32
  }
  func.func @transform_11(%arg0: i32) -> (i32, i32) {
    %c0_i32 = arith.constant 0 : i32
    %c0_i32_0 = arith.constant 0 : i32
    %c0_i32_1 = arith.constant 0 : i32
    return %c0_i32, %c0_i32_0 : i32, i32
  }
  func.func @transform_12(%arg0: i32) -> (i32, i32) {
    %c0_i32 = arith.constant 0 : i32
    %c0_i32_0 = arith.constant 0 : i32
    %c0_i32_1 = arith.constant 0 : i32
    return %c0_i32, %c0_i32_0 : i32, i32
  }
  func.func @transform_13(%arg0: i32) -> (i32, i32, i32) {
    %c0_i32 = arith.constant 0 : i32
    %c0_i32_0 = arith.constant 0 : i32
    %c0_i32_1 = arith.constant 0 : i32
    %c0_i32_2 = arith.constant 0 : i32
    return %c0_i32, %c0_i32_0, %c0_i32_1 : i32, i32, i32
  }
  func.func @transform_14(%arg0: i32) -> (i32, i32) {
    %c0_i32 = arith.constant 0 : i32
    %c0_i32_0 = arith.constant 0 : i32
    %c0_i32_1 = arith.constant 0 : i32
    return %c0_i32, %c0_i32_0 : i32, i32
  }
  func.func @transform_15(%arg0: i32) -> (i32, i32) {
    %c0_i32 = arith.constant 0 : i32
    %c0_i32_0 = arith.constant 0 : i32
    %c0_i32_1 = arith.constant 0 : i32
    return %c0_i32, %c0_i32_0 : i32, i32
  }
  func.func @transform_16(%arg0: i32) -> (i32, i32) {
    %c0_i32 = arith.constant 0 : i32
    %c0_i32_0 = arith.constant 0 : i32
    %c0_i32_1 = arith.constant 0 : i32
    return %c0_i32, %c0_i32_0 : i32, i32
  }
  func.func @transform_17(%arg0: i32) -> (i32, i32, i32) {
    %c0_i32 = arith.constant 0 : i32
    %c0_i32_0 = arith.constant 0 : i32
    %c0_i32_1 = arith.constant 0 : i32
    return %arg0, %c0_i32, %c0_i32_0 : i32, i32, i32
  }
}

</mosaic_0001>

<llo_original>
// kernel: decoder_block_forward.1
$region0: #{decoder_block_forward.1}
  #allocation0 [shape = 'u32[]', space=smem, size = 0x4, offset = 0x4, fixed_abs, tag = 'smem constant byte address 0x4 - core index']
  #allocation1 [shape = 'u32[72,128]{1,0:T(1,128)}', space=vmem, size = 0x9000, scoped, tag = 'internal scratch']
  %s0 = inlined_call_operand.vmem [shape: f32[2,32,64], index: 0, kind: input, shape index: {}]
  %s1 = inlined_call_operand.vmem [shape: f32[2,16,256], index: 1, kind: input, shape index: {}]
  %s2 = inlined_call_operand.hbm [shape: f32[64,256], index: 2, kind: input, shape index: {}]
  %s3 = inlined_call_operand.hbm [shape: f32[9,256,256], index: 3, kind: input, shape index: {}]
  %s4 = inlined_call_operand.hbm [shape: f32[4,32], index: 4, kind: input, shape index: {}]
  %s5 = inlined_call_operand.vmem [shape: f32[4,1], index: 5, kind: input, shape index: {}]
  %s6 = inlined_call_operand.vmem [shape: f32[9,4,4], index: 6, kind: input, shape index: {}]
  %s7 = inlined_call_operand.vmem [shape: f32[4,1], index: 7, kind: input, shape index: {}]
  %s8 = inlined_call_operand.vmem [shape: f32[16,4], index: 8, kind: input, shape index: {}]
  %s9 = inlined_call_operand.vmem [shape: f32[16,1], index: 9, kind: input, shape index: {}]
  %s10 = inlined_call_operand.hbm [shape: f32[16,32], index: 10, kind: input, shape index: {}]
  %s11 = inlined_call_operand.hbm [shape: f32[4,16], index: 11, kind: input, shape index: {}]
  %s12 = inlined_call_operand.vmem [shape: f32[4,1], index: 12, kind: input, shape index: {}]
  %s13 = inlined_call_operand.vmem [shape: f32[9,4,4], index: 13, kind: input, shape index: {}]
  %s14 = inlined_call_operand.vmem [shape: f32[4,1], index: 14, kind: input, shape index: {}]
  %s15 = inlined_call_operand.vmem [shape: f32[16,4], index: 15, kind: input, shape index: {}]
  %s16 = inlined_call_operand.vmem [shape: f32[16,1], index: 16, kind: input, shape index: {}]
  %s17 = inlined_call_operand.vmem [shape: f32[2,16,256], index: 17, kind: output, shape index: {}]
  %s18 = sld [smem:[#allocation0]]
  $region121: #{decoder_block_forward.1} parent=0
    _
  %s20 = ssub.s32 1, %s18
  %s21 = scalar_select 0, %s20, %s18
  $region1: #{decoder_block_forward.1} parent=0
    #allocation2 [shape = 'u8[65536]{0}', space=vmem, size = 0x10000, scoped, tag = 'input window, operand 2, single buffered']
    #allocation3 [shape = 's32[2]{0}', space=sflag, size = 0x8, scoped, tag = 'scoped memory for decoder_block_forward.1']
    #allocation4 [shape = 'u8[2359296]{0}', space=vmem, size = 0x240000, scoped, tag = 'input window, operand 3, single buffered']
    #allocation5 [shape = 's32[1]{0}', space=sflag, size = 0x4, scoped, tag = 'scoped memory for decoder_block_forward.1']
    #allocation6 [shape = 'u8[2048]{0}', space=vmem, size = 0x800, scoped, tag = 'input window, operand 4, single buffered']
    #allocation7 [shape = 'u8[8192]{0}', space=vmem, size = 0x2000, scoped, tag = 'input window, operand 10, single buffered']
    #allocation8 [shape = 's32[1]{0}', space=sflag, size = 0x4, scoped, tag = 'scoped memory for decoder_block_forward.1']
    #allocation9 [shape = 'u8[2048]{0}', space=vmem, size = 0x800, scoped, tag = 'input window, operand 11, single buffered']
    %22 = vsyncpa [#allocation3], 0
    %23 = vsyncpa [#allocation5], 0
    %24 = vsyncpa [#allocation8], 0
    loop: start=0, step=1, limit=4
    $region2: #{decoder_block_forward.1} parent=1 // loop_pre_header
      _
    $region3: #{decoder_block_forward.1} parent=1 // loop_header
      %s26 = sphi 0, %s30
      %p27 = scmp.ge.s32.totalorder %s26, 4
      %s36 = sphi 0, %s38
      %s39 = sphi 0, %s36
      %s40 = sphi 0, %s39
      %s56 = sphi 0, %s40
      %s62 = sphi 0, %s64
      %s65 = sphi 0, %s62
      %s66 = sphi 0, %s65
      %s82 = sphi 0, %s66
      %s86 = sphi 0, %s86
      %s88 = sphi 0, %s86
      %s89 = sphi 0, %s88
      %s103 = sphi 0, %s89
      %s107 = sphi 0, %s107
      %s109 = sphi 0, %s107
      %s110 = sphi 0, %s109
      %s124 = sphi 0, %s110
      %s128 = sphi 0, %s128
      %s130 = sphi 0, %s128
      %s131 = sphi 0, %s130
      %s145 = sphi 0, %s131
      %s149 = sphi 0, %s149
      %s151 = sphi 0, %s149
      %s152 = sphi 0, %s151
      %s166 = sphi 0, %s152
      %s170 = sphi 0, %s170
      %s172 = sphi 0, %s170
      %s173 = sphi 0, %s172
      %s187 = sphi 0, %s173
      %s191 = sphi 0, %s191
      %s193 = sphi 0, %s191
      %s194 = sphi 0, %s193
      %s208 = sphi 0, %s194
      %s212 = sphi 0, %s212
      %s214 = sphi 0, %s212
      %s215 = sphi 0, %s214
      %s229 = sphi 0, %s215
      %s233 = sphi 0, %s233
      %s235 = sphi 0, %s233
      %s236 = sphi 0, %s235
      %s250 = sphi 0, %s236
      %s254 = sphi 0, %s254
      %s256 = sphi 0, %s254
      %s257 = sphi 0, %s256
      %s271 = sphi 0, %s257
      %s275 = sphi 0, %s275
      %s277 = sphi 0, %s275
      %s278 = sphi 0, %s277
      %s292 = sphi 0, %s278
      %s296 = sphi 0, %s296
      %s298 = sphi 0, %s296
      %s299 = sphi 0, %s298
      %s313 = sphi 0, %s299
      %s317 = sphi 0, %s317
      %s319 = sphi 0, %s317
      %s320 = sphi 0, %s319
      %s334 = sphi 0, %s320
      %s338 = sphi 0, %s338
      %s340 = sphi 0, %s338
      %s341 = sphi 0, %s340
      %s355 = sphi 0, %s341
      %s359 = sphi 0, %s359
      %s361 = sphi 0, %s359
      %s362 = sphi 0, %s361
      %s376 = sphi 0, %s362
      %s380 = sphi 0, %s380
      %s382 = sphi 0, %s380
      %s383 = sphi 0, %s382
      %s397 = sphi 0, %s383
      %s403 = sphi 0, %s405
      %s406 = sphi 0, %s403
      %s407 = sphi 0, %s406
      %s423 = sphi 0, %s407
    $region4: #{decoder_block_forward.1} parent=1 // loop_header_branch
      %29 = sbr.rel (%p27) target = $region8
    $region5: #{decoder_block_forward.1} parent=1 // loop_body
      %s31 = ssub.s32 %s26, 1
      %s32 = ssub.s32 %s26, 2
      %s33 = sadd.s32 %s26, 1
      %s34 = ssub.s32 %s26, %s33
      %p35 = scmp.eq.s32.totalorder %s34, 0
      %s37 = sadd.s32 %s36, 1
      %s38 = scalar_select %p35, %s36, %s37
      %p41 = pneg %p35
      %p42 = scmp.eq.s32.totalorder %s26, 1
      %p43 = por %p41, %p42
      %p44 = scmp.ne.s32.totalorder %s36, %s39
      %p45 = scmp.eq.s32.totalorder %s26, 0
      %p46 = por %p44, %p45
      %p47 = scmp.ne.s32.totalorder %s36, %s39
      %p48 = scmp.eq.s32.totalorder %s31, 1
      %p49 = por %p47, %p48
      %p50 = scmp.ne.s32.totalorder %s39, %s40
      %p51 = scmp.eq.s32.totalorder %s31, 0
      %p52 = por %p50, %p51
      %p53 = scmp.ne.s32.totalorder %s39, %s40
      %p54 = scmp.eq.s32.totalorder %s32, 1
      %p55 = por %p53, %p54
      %p57 = scmp.ne.s32.totalorder %s40, %s56
      %p58 = scmp.eq.s32.totalorder %s32, 0
      %p59 = por %p57, %p58
      %s60 = ssub.s32 %s26, %s33
      %p61 = scmp.eq.s32.totalorder %s60, 0
      %s63 = sadd.s32 %s62, 1
      %s64 = scalar_select %p61, %s62, %s63
      %p67 = pneg %p61
      %p68 = scmp.eq.s32.totalorder %s26, 1
      %p69 = por %p67, %p68
      %p70 = scmp.ne.s32.totalorder %s62, %s65
      %p71 = scmp.eq.s32.totalorder %s26, 0
      %p72 = por %p70, %p71
      %p73 = scmp.ne.s32.totalorder %s62, %s65
      %p74 = scmp.eq.s32.totalorder %s31, 1
      %p75 = por %p73, %p74
      %p76 = scmp.ne.s32.totalorder %s65, %s66
      %p77 = scmp.eq.s32.totalorder %s31, 0
      %p78 = por %p76, %p77
      %p79 = scmp.ne.s32.totalorder %s65, %s66
      %p80 = scmp.eq.s32.totalorder %s32, 1
      %p81 = por %p79, %p80
      %p83 = scmp.ne.s32.totalorder %s66, %s82
      %p84 = scmp.eq.s32.totalorder %s32, 0
      %p85 = por %p83, %p84
      %s87 = sadd.s32 %s86, 1
      %p90 = scmp.eq.s32.totalorder %s26, 1
      %p91 = scmp.ne.s32.totalorder %s86, %s88
      %p92 = scmp.eq.s32.totalorder %s26, 0
      %p93 = por %p91, %p92
      %p94 = scmp.ne.s32.totalorder %s86, %s88
      %p95 = scmp.eq.s32.totalorder %s31, 1
      %p96 = por %p94, %p95
      %p97 = scmp.ne.s32.totalorder %s88, %s89
      %p98 = scmp.eq.s32.totalorder %s31, 0
      %p99 = por %p97, %p98
      %p100 = scmp.ne.s32.totalorder %s88, %s89
      %p101 = scmp.eq.s32.totalorder %s32, 1
      %p102 = por %p100, %p101
      %p104 = scmp.ne.s32.totalorder %s89, %s103
      %p105 = scmp.eq.s32.totalorder %s32, 0
      %p106 = por %p104, %p105
      %s108 = sadd.s32 %s107, 1
      %p111 = scmp.eq.s32.totalorder %s26, 1
      %p112 = scmp.ne.s32.totalorder %s107, %s109
      %p113 = scmp.eq.s32.totalorder %s26, 0
      %p114 = por %p112, %p113
      %p115 = scmp.ne.s32.totalorder %s107, %s109
      %p116 = scmp.eq.s32.totalorder %s31, 1
      %p117 = por %p115, %p116
      %p118 = scmp.ne.s32.totalorder %s109, %s110
      %p119 = scmp.eq.s32.totalorder %s31, 0
      %p120 = por %p118, %p119
      %p121 = scmp.ne.s32.totalorder %s109, %s110
      %p122 = scmp.eq.s32.totalorder %s32, 1
      %p123 = por %p121, %p122
      %p125 = scmp.ne.s32.totalorder %s110, %s124
      %p126 = scmp.eq.s32.totalorder %s32, 0
      %p127 = por %p125, %p126
      %s129 = sadd.s32 %s128, 1
      %p132 = scmp.eq.s32.totalorder %s26, 1
      %p133 = scmp.ne.s32.totalorder %s128, %s130
      %p134 = scmp.eq.s32.totalorder %s26, 0
      %p135 = por %p133, %p134
      %p136 = scmp.ne.s32.totalorder %s128, %s130
      %p137 = scmp.eq.s32.totalorder %s31, 1
      %p138 = por %p136, %p137
      %p139 = scmp.ne.s32.totalorder %s130, %s131
      %p140 = scmp.eq.s32.totalorder %s31, 0
      %p141 = por %p139, %p140
      %p142 = scmp.ne.s32.totalorder %s130, %s131
      %p143 = scmp.eq.s32.totalorder %s32, 1
      %p144 = por %p142, %p143
      %p146 = scmp.ne.s32.totalorder %s131, %s145
      %p147 = scmp.eq.s32.totalorder %s32, 0
      %p148 = por %p146, %p147
      %s150 = sadd.s32 %s149, 1
      %p153 = scmp.eq.s32.totalorder %s26, 1
      %p154 = scmp.ne.s32.totalorder %s149, %s151
      %p155 = scmp.eq.s32.totalorder %s26, 0
      %p156 = por %p154, %p155
      %p157 = scmp.ne.s32.totalorder %s149, %s151
      %p158 = scmp.eq.s32.totalorder %s31, 1
      %p159 = por %p157, %p158
      %p160 = scmp.ne.s32.totalorder %s151, %s152
      %p161 = scmp.eq.s32.totalorder %s31, 0
      %p162 = por %p160, %p161
      %p163 = scmp.ne.s32.totalorder %s151, %s152
      %p164 = scmp.eq.s32.totalorder %s32, 1
      %p165 = por %p163, %p164
      %p167 = scmp.ne.s32.totalorder %s152, %s166
      %p168 = scmp.eq.s32.totalorder %s32, 0
      %p169 = por %p167, %p168
      %s171 = sadd.s32 %s170, 1
      %p174 = scmp.eq.s32.totalorder %s26, 1
      %p175 = scmp.ne.s32.totalorder %s170, %s172
      %p176 = scmp.eq.s32.totalorder %s26, 0
      %p177 = por %p175, %p176
      %p178 = scmp.ne.s32.totalorder %s170, %s172
      %p179 = scmp.eq.s32.totalorder %s31, 1
      %p180 = por %p178, %p179
      %p181 = scmp.ne.s32.totalorder %s172, %s173
      %p182 = scmp.eq.s32.totalorder %s31, 0
      %p183 = por %p181, %p182
      %p184 = scmp.ne.s32.totalorder %s172, %s173
      %p185 = scmp.eq.s32.totalorder %s32, 1
      %p186 = por %p184, %p185
      %p188 = scmp.ne.s32.totalorder %s173, %s187
      %p189 = scmp.eq.s32.totalorder %s32, 0
      %p190 = por %p188, %p189
      %s192 = sadd.s32 %s191, 1
      %p195 = scmp.eq.s32.totalorder %s26, 1
      %p196 = scmp.ne.s32.totalorder %s191, %s193
      %p197 = scmp.eq.s32.totalorder %s26, 0
      %p198 = por %p196, %p197
      %p199 = scmp.ne.s32.totalorder %s191, %s193
      %p200 = scmp.eq.s32.totalorder %s31, 1
      %p201 = por %p199, %p200
      %p202 = scmp.ne.s32.totalorder %s193, %s194
      %p203 = scmp.eq.s32.totalorder %s31, 0
      %p204 = por %p202, %p203
      %p205 = scmp.ne.s32.totalorder %s193, %s194
      %p206 = scmp.eq.s32.totalorder %s32, 1
      %p207 = por %p205, %p206
      %p209 = scmp.ne.s32.totalorder %s194, %s208
      %p210 = scmp.eq.s32.totalorder %s32, 0
      %p211 = por %p209, %p210
      %s213 = sadd.s32 %s212, 1
      %p216 = scmp.eq.s32.totalorder %s26, 1
      %p217 = scmp.ne.s32.totalorder %s212, %s214
      %p218 = scmp.eq.s32.totalorder %s26, 0
      %p219 = por %p217, %p218
      %p220 = scmp.ne.s32.totalorder %s212, %s214
      %p221 = scmp.eq.s32.totalorder %s31, 1
      %p222 = por %p220, %p221
      %p223 = scmp.ne.s32.totalorder %s214, %s215
      %p224 = scmp.eq.s32.totalorder %s31, 0
      %p225 = por %p223, %p224
      %p226 = scmp.ne.s32.totalorder %s214, %s215
      %p227 = scmp.eq.s32.totalorder %s32, 1
      %p228 = por %p226, %p227
      %p230 = scmp.ne.s32.totalorder %s215, %s229
      %p231 = scmp.eq.s32.totalorder %s32, 0
      %p232 = por %p230, %p231
      %s234 = sadd.s32 %s233, 1
      %p237 = scmp.eq.s32.totalorder %s26, 1
      %p238 = scmp.ne.s32.totalorder %s233, %s235
      %p239 = scmp.eq.s32.totalorder %s26, 0
      %p240 = por %p238, %p239
      %p241 = scmp.ne.s32.totalorder %s233, %s235
      %p242 = scmp.eq.s32.totalorder %s31, 1
      %p243 = por %p241, %p242
      %p244 = scmp.ne.s32.totalorder %s235, %s236
      %p245 = scmp.eq.s32.totalorder %s31, 0
      %p246 = por %p244, %p245
      %p247 = scmp.ne.s32.totalorder %s235, %s236
      %p248 = scmp.eq.s32.totalorder %s32, 1
      %p249 = por %p247, %p248
      %p251 = scmp.ne.s32.totalorder %s236, %s250
      %p252 = scmp.eq.s32.totalorder %s32, 0
      %p253 = por %p251, %p252
      %s255 = sadd.s32 %s254, 1
      %p258 = scmp.eq.s32.totalorder %s26, 1
      %p259 = scmp.ne.s32.totalorder %s254, %s256
      %p260 = scmp.eq.s32.totalorder %s26, 0
      %p261 = por %p259, %p260
      %p262 = scmp.ne.s32.totalorder %s254, %s256
      %p263 = scmp.eq.s32.totalorder %s31, 1
      %p264 = por %p262, %p263
      %p265 = scmp.ne.s32.totalorder %s256, %s257
      %p266 = scmp.eq.s32.totalorder %s31, 0
      %p267 = por %p265, %p266
      %p268 = scmp.ne.s32.totalorder %s256, %s257
      %p269 = scmp.eq.s32.totalorder %s32, 1
      %p270 = por %p268, %p269
      %p272 = scmp.ne.s32.totalorder %s257, %s271
      %p273 = scmp.eq.s32.totalorder %s32, 0
      %p274 = por %p272, %p273
      %s276 = sadd.s32 %s275, 1
      %p279 = scmp.eq.s32.totalorder %s26, 1
      %p280 = scmp.ne.s32.totalorder %s275, %s277
      %p281 = scmp.eq.s32.totalorder %s26, 0
      %p282 = por %p280, %p281
      %p283 = scmp.ne.s32.totalorder %s275, %s277
      %p284 = scmp.eq.s32.totalorder %s31, 1
      %p285 = por %p283, %p284
      %p286 = scmp.ne.s32.totalorder %s277, %s278
      %p287 = scmp.eq.s32.totalorder %s31, 0
      %p288 = por %p286, %p287
      %p289 = scmp.ne.s32.totalorder %s277, %s278
      %p290 = scmp.eq.s32.totalorder %s32, 1
      %p291 = por %p289, %p290
      %p293 = scmp.ne.s32.totalorder %s278, %s292
      %p294 = scmp.eq.s32.totalorder %s32, 0
      %p295 = por %p293, %p294
      %s297 = sadd.s32 %s296, 1
      %p300 = scmp.eq.s32.totalorder %s26, 1
      %p301 = scmp.ne.s32.totalorder %s296, %s298
      %p302 = scmp.eq.s32.totalorder %s26, 0
      %p303 = por %p301, %p302
      %p304 = scmp.ne.s32.totalorder %s296, %s298
      %p305 = scmp.eq.s32.totalorder %s31, 1
      %p306 = por %p304, %p305
      %p307 = scmp.ne.s32.totalorder %s298, %s299
      %p308 = scmp.eq.s32.totalorder %s31, 0
      %p309 = por %p307, %p308
      %p310 = scmp.ne.s32.totalorder %s298, %s299
      %p311 = scmp.eq.s32.totalorder %s32, 1
      %p312 = por %p310, %p311
      %p314 = scmp.ne.s32.totalorder %s299, %s313
      %p315 = scmp.eq.s32.totalorder %s32, 0
      %p316 = por %p314, %p315
      %s318 = sadd.s32 %s317, 1
      %p321 = scmp.eq.s32.totalorder %s26, 1
      %p322 = scmp.ne.s32.totalorder %s317, %s319
      %p323 = scmp.eq.s32.totalorder %s26, 0
      %p324 = por %p322, %p323
      %p325 = scmp.ne.s32.totalorder %s317, %s319
      %p326 = scmp.eq.s32.totalorder %s31, 1
      %p327 = por %p325, %p326
      %p328 = scmp.ne.s32.totalorder %s319, %s320
      %p329 = scmp.eq.s32.totalorder %s31, 0
      %p330 = por %p328, %p329
      %p331 = scmp.ne.s32.totalorder %s319, %s320
      %p332 = scmp.eq.s32.totalorder %s32, 1
      %p333 = por %p331, %p332
      %p335 = scmp.ne.s32.totalorder %s320, %s334
      %p336 = scmp.eq.s32.totalorder %s32, 0
      %p337 = por %p335, %p336
      %s339 = sadd.s32 %s338, 1
      %p342 = scmp.eq.s32.totalorder %s26, 1
      %p343 = scmp.ne.s32.totalorder %s338, %s340
      %p344 = scmp.eq.s32.totalorder %s26, 0
      %p345 = por %p343, %p344
      %p346 = scmp.ne.s32.totalorder %s338, %s340
      %p347 = scmp.eq.s32.totalorder %s31, 1
      %p348 = por %p346, %p347
      %p349 = scmp.ne.s32.totalorder %s340, %s341
      %p350 = scmp.eq.s32.totalorder %s31, 0
      %p351 = por %p349, %p350
      %p352 = scmp.ne.s32.totalorder %s340, %s341
      %p353 = scmp.eq.s32.totalorder %s32, 1
      %p354 = por %p352, %p353
      %p356 = scmp.ne.s32.totalorder %s341, %s355
      %p357 = scmp.eq.s32.totalorder %s32, 0
      %p358 = por %p356, %p357
      %s360 = sadd.s32 %s359, 1
      %p363 = scmp.eq.s32.totalorder %s26, 1
      %p364 = scmp.ne.s32.totalorder %s359, %s361
      %p365 = scmp.eq.s32.totalorder %s26, 0
      %p366 = por %p364, %p365
      %p367 = scmp.ne.s32.totalorder %s359, %s361
      %p368 = scmp.eq.s32.totalorder %s31, 1
      %p369 = por %p367, %p368
      %p370 = scmp.ne.s32.totalorder %s361, %s362
      %p371 = scmp.eq.s32.totalorder %s31, 0
      %p372 = por %p370, %p371
      %p373 = scmp.ne.s32.totalorder %s361, %s362
      %p374 = scmp.eq.s32.totalorder %s32, 1
      %p375 = por %p373, %p374
      %p377 = scmp.ne.s32.totalorder %s362, %s376
      %p378 = scmp.eq.s32.totalorder %s32, 0
      %p379 = por %p377, %p378
      %s381 = sadd.s32 %s380, 1
      %p384 = scmp.eq.s32.totalorder %s26, 1
      %p385 = scmp.ne.s32.totalorder %s380, %s382
      %p386 = scmp.eq.s32.totalorder %s26, 0
      %p387 = por %p385, %p386
      %p388 = scmp.ne.s32.totalorder %s380, %s382
      %p389 = scmp.eq.s32.totalorder %s31, 1
      %p390 = por %p388, %p389
      %p391 = scmp.ne.s32.totalorder %s382, %s383
      %p392 = scmp.eq.s32.totalorder %s31, 0
      %p393 = por %p391, %p392
      %p394 = scmp.ne.s32.totalorder %s382, %s383
      %p395 = scmp.eq.s32.totalorder %s32, 1
      %p396 = por %p394, %p395
      %p398 = scmp.ne.s32.totalorder %s383, %s397
      %p399 = scmp.eq.s32.totalorder %s32, 0
      %p400 = por %p398, %p399
      %s401 = ssub.s32 %s26, %s33
      %p402 = scmp.eq.s32.totalorder %s401, 0
      %s404 = sadd.s32 %s403, 1
      %s405 = scalar_select %p402, %s403, %s404
      %p408 = pneg %p402
      %p409 = scmp.eq.s32.totalorder %s26, 1
      %p410 = por %p408, %p409
      %p411 = scmp.ne.s32.totalorder %s403, %s406
      %p412 = scmp.eq.s32.totalorder %s26, 0
      %p413 = por %p411, %p412
      %p414 = scmp.ne.s32.totalorder %s403, %s406
      %p415 = scmp.eq.s32.totalorder %s31, 1
      %p416 = por %p414, %p415
      %p417 = scmp.ne.s32.totalorder %s406, %s407
      %p418 = scmp.eq.s32.totalorder %s31, 0
      %p419 = por %p417, %p418
      %p420 = scmp.ne.s32.totalorder %s406, %s407
      %p421 = scmp.eq.s32.totalorder %s32, 1
      %p422 = por %p420, %p421
      %p424 = scmp.ne.s32.totalorder %s407, %s423
      %p425 = scmp.eq.s32.totalorder %s32, 0
      %p426 = por %p424, %p425
      %p427 = scmp.le.s32.totalorder 1, %s26
      %p428 = scmp.lt.s32.totalorder %s26, 3
      %p429 = pnand %p427, %p428
      %p430 = pneg %p429
      // Predicated region
      $region9: #{decoder_block_forward.1} parent=5 // pred_check
        _
      $region10: #{decoder_block_forward.1} parent=5 // pred_check_branch
        %432 = sbr.rel (%p429) target = $region12
      $region11: #{decoder_block_forward.1} parent=5 // pred_region
        %s433 = ssub.s32 %s26, 1
        // Predicated region
        $region13: #{decoder_block_forward.1} parent=11 // pred_check
          %p434 = pneg %p99
        $region14: #{decoder_block_forward.1} parent=11 // pred_check_branch
          %436 = sbr.rel (%p434) target = $region16
        $region15: #{decoder_block_forward.1} parent=11 // pred_region
          %438 = vsyncadd [#allocation3], 0
          %s439 = sshll.u32 %s2, 4
          %s440 = int_to_ptr.hbm [resolvable:$true] %s439
          %s441 = sshll.u32 [#allocation2], 4
          %s442 = int_to_ptr.vmem [resolvable:$true] %s441
          %447 = dma.hbm_to_vmem [thread:$0]  %s440, 2048, %s442, [#allocation3], 256, 256, 16
        $region16: #{decoder_block_forward.1} parent=11 // pred_fallthru
          _
        // Predicated region
        $region17: #{decoder_block_forward.1} parent=11 // pred_check
          %p448 = pneg %p120
        $region18: #{decoder_block_forward.1} parent=11 // pred_check_branch
          %450 = sbr.rel (%p448) target = $region20
        $region19: #{decoder_block_forward.1} parent=11 // pred_region
          %452 = vsyncadd [#allocation5], 0
          %s453 = sshll.u32 %s3, 4
          %s454 = int_to_ptr.hbm [resolvable:$true] %s453
          %s455 = sshll.u32 [#allocation4], 4
          %s456 = int_to_ptr.vmem [resolvable:$true] %s455
          %461 = dma.hbm_to_vmem [thread:$0]  %s454, 73728, %s456, [#allocation5], 256, 256, 16
        $region20: #{decoder_block_forward.1} parent=11 // pred_fallthru
          _
        // Predicated region
        $region21: #{decoder_block_forward.1} parent=11 // pred_check
          %p462 = pneg %p141
        $region22: #{decoder_block_forward.1} parent=11 // pred_check_branch
          %464 = sbr.rel (%p462) target = $region24
        $region23: #{decoder_block_forward.1} parent=11 // pred_region
          %466 = vsyncadd [#allocation5], 0
          %s468 = sshll.u32 %s4, 4
          %s469 = int_to_ptr.hbm [resolvable:$true] %s468
          %s470 = sshll.u32 [#allocation6], 4
          %s471 = int_to_ptr.vmem [resolvable:$true] %s470
          %473 = dma.hbm_to_vmem [thread:$0]  %s469, 64, %s471, [#allocation5]
        $region24: #{decoder_block_forward.1} parent=11 // pred_fallthru
          _
        // Predicated region
        $region25: #{decoder_block_forward.1} parent=11 // pred_check
          %p474 = pneg %p162
        $region26: #{decoder_block_forward.1} parent=11 // pred_check_branch
          %476 = sbr.rel (%p474) target = $region28
        $region27: #{decoder_block_forward.1} parent=11 // pred_region
          _
        $region28: #{decoder_block_forward.1} parent=11 // pred_fallthru
          _
        // Predicated region
        $region29: #{decoder_block_forward.1} parent=11 // pred_check
          %p477 = pneg %p183
        $region30: #{decoder_block_forward.1} parent=11 // pred_check_branch
          %479 = sbr.rel (%p477) target = $region32
        $region31: #{decoder_block_forward.1} parent=11 // pred_region
          _
        $region32: #{decoder_block_forward.1} parent=11 // pred_fallthru
          _
        // Predicated region
        $region33: #{decoder_block_forward.1} parent=11 // pred_check
          %p480 = pneg %p204
        $region34: #{decoder_block_forward.1} parent=11 // pred_check_branch
          %482 = sbr.rel (%p480) target = $region36
        $region35: #{decoder_block_forward.1} parent=11 // pred_region
          _
        $region36: #{decoder_block_forward.1} parent=11 // pred_fallthru
          _
        // Predicated region
        $region37: #{decoder_block_forward.1} parent=11 // pred_check
          %p483 = pneg %p225
        $region38: #{decoder_block_forward.1} parent=11 // pred_check_branch
          %485 = sbr.rel (%p483) target = $region40
        $region39: #{decoder_block_forward.1} parent=11 // pred_region
          _
        $region40: #{decoder_block_forward.1} parent=11 // pred_fallthru
          _
        // Predicated region
        $region41: #{decoder_block_forward.1} parent=11 // pred_check
          %p486 = pneg %p246
        $region42: #{decoder_block_forward.1} parent=11 // pred_check_branch
          %488 = sbr.rel (%p486) target = $region44
        $region43: #{decoder_block_forward.1} parent=11 // pred_region
          _
        $region44: #{decoder_block_forward.1} parent=11 // pred_fallthru
          _
        // Predicated region
        $region45: #{decoder_block_forward.1} parent=11 // pred_check
          %p489 = pneg %p267
        $region46: #{decoder_block_forward.1} parent=11 // pred_check_branch
          %491 = sbr.rel (%p489) target = $region48
        $region47: #{decoder_block_forward.1} parent=11 // pred_region
          %493 = vsyncadd [#allocation8], 0
          %s494 = sshll.u32 %s10, 4
          %s495 = int_to_ptr.hbm [resolvable:$true] %s494
          %s496 = sshll.u32 [#allocation7], 4
          %s497 = int_to_ptr.vmem [resolvable:$true] %s496
          %502 = dma.hbm_to_vmem [thread:$0]  %s495, 256, %s497, [#allocation8], 128, 128, 8
        $region48: #{decoder_block_forward.1} parent=11 // pred_fallthru
          _
        // Predicated region
        $region49: #{decoder_block_forward.1} parent=11 // pred_check
          %p503 = pneg %p288
        $region50: #{decoder_block_forward.1} parent=11 // pred_check_branch
          %505 = sbr.rel (%p503) target = $region52
        $region51: #{decoder_block_forward.1} parent=11 // pred_region
          %507 = vsyncadd [#allocation8], 0
          %s509 = sshll.u32 %s11, 4
          %s510 = int_to_ptr.hbm [resolvable:$true] %s509
          %s511 = sshll.u32 [#allocation9], 4
          %s512 = int_to_ptr.vmem [resolvable:$true] %s511
          %514 = dma.hbm_to_vmem [thread:$0]  %s510, 64, %s512, [#allocation8]
        $region52: #{decoder_block_forward.1} parent=11 // pred_fallthru
          _
        // Predicated region
        $region53: #{decoder_block_forward.1} parent=11 // pred_check
          %p515 = pneg %p309
        $region54: #{decoder_block_forward.1} parent=11 // pred_check_branch
          %517 = sbr.rel (%p515) target = $region56
        $region55: #{decoder_block_forward.1} parent=11 // pred_region
          _
        $region56: #{decoder_block_forward.1} parent=11 // pred_fallthru
          _
        // Predicated region
        $region57: #{decoder_block_forward.1} parent=11 // pred_check
          %p518 = pneg %p330
        $region58: #{decoder_block_forward.1} parent=11 // pred_check_branch
          %520 = sbr.rel (%p518) target = $region60
        $region59: #{decoder_block_forward.1} parent=11 // pred_region
          _
        $region60: #{decoder_block_forward.1} parent=11 // pred_fallthru
          _
        // Predicated region
        $region61: #{decoder_block_forward.1} parent=11 // pred_check
          %p521 = pneg %p351
        $region62: #{decoder_block_forward.1} parent=11 // pred_check_branch
          %523 = sbr.rel (%p521) target = $region64
        $region63: #{decoder_block_forward.1} parent=11 // pred_region
          _
        $region64: #{decoder_block_forward.1} parent=11 // pred_fallthru
          _
        // Predicated region
        $region65: #{decoder_block_forward.1} parent=11 // pred_check
          %p524 = pneg %p372
        $region66: #{decoder_block_forward.1} parent=11 // pred_check_branch
          %526 = sbr.rel (%p524) target = $region68
        $region67: #{decoder_block_forward.1} parent=11 // pred_region
          _
        $region68: #{decoder_block_forward.1} parent=11 // pred_fallthru
          _
        // Predicated region
        $region69: #{decoder_block_forward.1} parent=11 // pred_check
          %p527 = pneg %p393
        $region70: #{decoder_block_forward.1} parent=11 // pred_check_branch
          %529 = sbr.rel (%p527) target = $region72
        $region71: #{decoder_block_forward.1} parent=11 // pred_region
          _
        $region72: #{decoder_block_forward.1} parent=11 // pred_fallthru
          _
      $region12: #{decoder_block_forward.1} parent=5 // pred_fallthru
        _
      %p530 = scmp.lt.s32.totalorder %s26, 2
      // Predicated region
      $region73: #{decoder_block_forward.1} parent=5 // pred_check
        %p531 = pneg %p530
      $region74: #{decoder_block_forward.1} parent=5 // pred_check_branch
        %533 = sbr.rel (%p531) target = $region76
      $region75: #{decoder_block_forward.1} parent=5 // pred_region
        // Predicated region
        $region77: #{decoder_block_forward.1} parent=75 // pred_check
          %p534 = pneg %p46
        $region78: #{decoder_block_forward.1} parent=75 // pred_check_branch
          %536 = sbr.rel (%p534) target = $region80
        $region79: #{decoder_block_forward.1} parent=75 // pred_region
          %p537 = scmp.lt.s32.totalorder %s26, 1
          %s538 = scalar_select %p537, %s26, 1
          %s539 = smul.addr %s538, 4
          %s540 = smul.addr %s539, 8
          %s541 = scalar_lea.vmem %s0, %s540
        $region80: #{decoder_block_forward.1} parent=75 // pred_fallthru
          _
        // Predicated region
        $region81: #{decoder_block_forward.1} parent=75 // pred_check
          %p542 = pneg %p72
        $region82: #{decoder_block_forward.1} parent=75 // pred_check_branch
          %544 = sbr.rel (%p542) target = $region84
        $region83: #{decoder_block_forward.1} parent=75 // pred_region
          %p545 = scmp.lt.s32.totalorder %s26, 1
          %s546 = scalar_select %p545, %s26, 1
          %s547 = smul.addr %s546, 4
          %s548 = smul.addr %s547, 8
          %s549 = scalar_lea.vmem %s1, %s548
        $region84: #{decoder_block_forward.1} parent=75 // pred_fallthru
          _
      $region76: #{decoder_block_forward.1} parent=5 // pred_fallthru
        _
      %p550 = scmp.le.s32.totalorder 1, %s26
      %p551 = scmp.lt.s32.totalorder %s26, 3
      %p552 = pnand %p550, %p551
      %p553 = pneg %p552
      // Predicated region
      $region85: #{decoder_block_forward.1} parent=5 // pred_check
        _
      $region86: #{decoder_block_forward.1} parent=5 // pred_check_branch
        %555 = sbr.rel (%p552) target = $region88
      $region87: #{decoder_block_forward.1} parent=5 // pred_region
        %s556 = ssub.s32 %s26, 1
        // Predicated region
        $region89: #{decoder_block_forward.1} parent=87 // pred_check
          %p557 = pneg %p99
        $region90: #{decoder_block_forward.1} parent=87 // pred_check_branch
          %559 = sbr.rel (%p557) target = $region92
        $region91: #{decoder_block_forward.1} parent=87 // pred_region
          %561 = dma.done [#allocation3], 2048
        $region92: #{decoder_block_forward.1} parent=87 // pred_fallthru
          _
        // Predicated region
        $region93: #{decoder_block_forward.1} parent=87 // pred_check
          %p562 = pneg %p120
        $region94: #{decoder_block_forward.1} parent=87 // pred_check_branch
          %564 = sbr.rel (%p562) target = $region96
        $region95: #{decoder_block_forward.1} parent=87 // pred_region
          %566 = dma.done [#allocation5], 73728
        $region96: #{decoder_block_forward.1} parent=87 // pred_fallthru
          _
        // Predicated region
        $region97: #{decoder_block_forward.1} parent=87 // pred_check
          %p567 = pneg %p141
        $region98: #{decoder_block_forward.1} parent=87 // pred_check_branch
          %569 = sbr.rel (%p567) target = $region100
        $region99: #{decoder_block_forward.1} parent=87 // pred_region
          %571 = dma.done [#allocation5], 64
        $region100: #{decoder_block_forward.1} parent=87 // pred_fallthru
          _
        // Predicated region
        $region101: #{decoder_block_forward.1} parent=87 // pred_check
          %p572 = pneg %p267
        $region102: #{decoder_block_forward.1} parent=87 // pred_check_branch
          %574 = sbr.rel (%p572) target = $region104
        $region103: #{decoder_block_forward.1} parent=87 // pred_region
          %576 = dma.done [#allocation8], 256
        $region104: #{decoder_block_forward.1} parent=87 // pred_fallthru
          _
        // Predicated region
        $region105: #{decoder_block_forward.1} parent=87 // pred_check
          %p577 = pneg %p288
        $region106: #{decoder_block_forward.1} parent=87 // pred_check_branch
          %579 = sbr.rel (%p577) target = $region108
        $region107: #{decoder_block_forward.1} parent=87 // pred_region
          %581 = dma.done [#allocation8], 64
        $region108: #{decoder_block_forward.1} parent=87 // pred_fallthru
          _
        %p582 = scmp.lt.s32.totalorder %s31, 1
        %s583 = scalar_select %p582, %s31, 1
        %s584 = smul.addr %s583, 4
        %s585 = smul.addr %s584, 8
        %s586 = scalar_lea.vmem %s0, %s585
        %p587 = pneg %p52
        %p588 = pneg %p49
        %p589 = scmp.lt.s32.totalorder %s31, 1
        %s590 = scalar_select %p589, %s31, 1
        %s591 = smul.addr %s590, 4
        %s592 = smul.addr %s591, 8
        %s593 = scalar_lea.vmem %s1, %s592
        %p594 = pneg %p78
        %p595 = pneg %p75
        %p596 = pneg %p99
        %p597 = pneg %p96
        %p598 = pneg %p120
        %p599 = pneg %p117
        %p600 = pneg %p141
        %p601 = pneg %p138
        %p602 = pneg %p162
        %p603 = pneg %p159
        %p604 = pneg %p183
        %p605 = pneg %p180
        %p606 = pneg %p204
        %p607 = pneg %p201
        %p608 = pneg %p225
        %p609 = pneg %p222
        %p610 = pneg %p246
        %p611 = pneg %p243
        %p612 = pneg %p267
        %p613 = pneg %p264
        %p614 = pneg %p288
        %p615 = pneg %p285
        %p616 = pneg %p309
        %p617 = pneg %p306
        %p618 = pneg %p330
        %p619 = pneg %p327
        %p620 = pneg %p351
        %p621 = pneg %p348
        %p622 = pneg %p372
        %p623 = pneg %p369
        %p624 = pneg %p393
        %p625 = pneg %p390
        %p626 = pneg %p419
        %p627 = pneg %p416
        %p628 = scmp.lt.s32.totalorder %s31, 1
        %s629 = scalar_select %p628, %s31, 1
        %s630 = smul.addr %s629, 4
        %s631 = smul.addr %s630, 8
        %s632 = scalar_lea.vmem %s17, %s631
        %p633 = scmp.lt.s32.totalorder %s31, 1
        %s634 = scalar_select %p633, %s31, 1
        %s635 = smul.addr %s634, 4
        %s636 = smul.addr %s635, 8
        %s637 = scalar_lea.vmem %s0, %s636
        %p638 = scmp.lt.s32.totalorder %s31, 1
        %s639 = scalar_select %p638, %s31, 1
        %s640 = smul.addr %s639, 4
        %s641 = smul.addr %s640, 8
        %s642 = scalar_lea.vmem %s1, %s641
        %p643 = scmp.lt.s32.totalorder %s31, 1
        %s644 = scalar_select %p643, %s31, 1
        %s645 = smul.addr %s644, 4
        %s646 = smul.addr %s645, 8
        %s647 = scalar_lea.vmem %s17, %s646
        %v648 = vld [vmem:[%s637] sm:$0xff]
        %v649 = vld [vmem:[%s637 + $0x8] sm:$0xff]
        %v650 = vld [vmem:[%s637 + $0x10] sm:$0xff]
        %v651 = vld [vmem:[%s637 + $0x18] sm:$0xff]
        %v652 = vld [vmem:[%s642] sm:$0xff]
        %v653 = vld [vmem:[%s642 + $0x8] sm:$0xff]
        %v654 = vld [vmem:[%s642 + $0x10] sm:$0xff]
        %v655 = vld [vmem:[%s642 + $0x18] sm:$0xff]
        %v656 = vld [vmem:[#allocation2] sm:$0xff]
        %v657 = vld [vmem:[#allocation2 + $0x8] sm:$0xff]
        %v658 = vld [vmem:[#allocation2 + $0x10] sm:$0xff]
        %v659 = vld [vmem:[#allocation2 + $0x18] sm:$0xff]
        %v660 = vld [vmem:[#allocation2 + $0x20] sm:$0xff]
        %v661 = vld [vmem:[#allocation2 + $0x28] sm:$0xff]
        %v662 = vld [vmem:[#allocation2 + $0x30] sm:$0xff]
        %v663 = vld [vmem:[#allocation2 + $0x38] sm:$0xff]
        %v664 = vld [vmem:[#allocation2 + $0x40] sm:$0xff]
        %v665 = vld [vmem:[#allocation2 + $0x48] sm:$0xff]
        %v666 = vld [vmem:[#allocation2 + $0x50] sm:$0xff]
        %v667 = vld [vmem:[#allocation2 + $0x58] sm:$0xff]
        %v668 = vld [vmem:[#allocation2 + $0x60] sm:$0xff]
        %v669 = vld [vmem:[#allocation2 + $0x68] sm:$0xff]
        %v670 = vld [vmem:[#allocation2 + $0x70] sm:$0xff]
        %v671 = vld [vmem:[#allocation2 + $0x78] sm:$0xff]
        %vm672 = vcmask 523264
        %v674 = vsel %vm672, %v648, 0
        %v677 = vsel %vm672, %v649, 0
        %v680 = vsel %vm672, %v650, 0
        %v683 = vsel %vm672, %v651, 0
        %685 = vmatpush.msra.mxu0 0.0
        %686 = vmatpush.msra.mxu0 0.0
        %687 = vmatpush.msra.mxu0 0.0
        %688 = vmatpush.msra.mxu0 0.0
        %689 = vmatpush.msra.mxu0 0.0
        %690 = vmatpush.msra.mxu0 0.0
        %691 = vmatpush.msra.mxu0 0.0
        %692 = vmatpush.msra.mxu0 0.0
        %693 = vmatpush.msra.mxu0 %v670
        %694 = vmatpush.msra.mxu0 %v668
        %695 = vmatpush.msra.mxu0 %v666
        %696 = vmatpush.msra.mxu0 %v664
        %697 = vmatpush.msra.mxu0 %v662
        %698 = vmatpush.msra.mxu0 %v660
        %699 = vmatpush.msra.mxu0 %v658
        %700 = vmatpush.msra.mxu0 %v656
        %701 = vmatmul.f32.gmra.mxu0 %v674
        %v702 = vpop.f32.mrf.mxu0
        %v703 = vadd.f32 0.0, %v702
        %704 = vmatmul.f32.gmra.mxu0 %v677
        %v705 = vpop.f32.mrf.mxu0
        %v706 = vadd.f32 0.0, %v705
        %707 = vmatmul.f32.gmra.mxu0 %v680
        %v708 = vpop.f32.mrf.mxu0
        %v709 = vadd.f32 0.0, %v708
        %710 = vmatmul.f32.gmra.mxu0 %v683
        %v711 = vpop.f32.mrf.mxu0
        %v712 = vadd.f32 0.0, %v711
        %713 = vdwg.mxu0
        %714 = vmatpush.msra.mxu0 0.0
        %715 = vmatpush.msra.mxu0 0.0
        %716 = vmatpush.msra.mxu0 0.0
        %717 = vmatpush.msra.mxu0 0.0
        %718 = vmatpush.msra.mxu0 0.0
        %719 = vmatpush.msra.mxu0 0.0
        %720 = vmatpush.msra.mxu0 0.0
        %721 = vmatpush.msra.mxu0 0.0
        %722 = vmatpush.msra.mxu0 %v671
        %723 = vmatpush.msra.mxu0 %v669
        %724 = vmatpush.msra.mxu0 %v667
        %725 = vmatpush.msra.mxu0 %v665
        %726 = vmatpush.msra.mxu0 %v663
        %727 = vmatpush.msra.mxu0 %v661
        %728 = vmatpush.msra.mxu0 %v659
        %729 = vmatpush.msra.mxu0 %v657
        %730 = vmatmul.f32.gmra.mxu0 %v674
        %v731 = vpop.f32.mrf.mxu0
        %v732 = vadd.f32 0.0, %v731
        %733 = vmatmul.f32.gmra.mxu0 %v677
        %v734 = vpop.f32.mrf.mxu0
        %v735 = vadd.f32 0.0, %v734
        %736 = vmatmul.f32.gmra.mxu0 %v680
        %v737 = vpop.f32.mrf.mxu0
        %v738 = vadd.f32 0.0, %v737
        %739 = vmatmul.f32.gmra.mxu0 %v683
        %v740 = vpop.f32.mrf.mxu0
        %v741 = vadd.f32 0.0, %v740
        %742 = vdwg.mxu0
        %v743 = vld [vmem:[#allocation7] sm:$0xff]
        %v744 = vld [vmem:[#allocation7 + $0x8] sm:$0xff]
        %vm745 = vcmask 261120
        %v747 = vsel %vm745, %v743, 0
        %v750 = vsel %vm745, %v744, 0
        %752 = vmatpush.msra.mxu0 0.0
        %753 = vmatpush.msra.mxu0 0.0
        %754 = vmatpush.msra.mxu0 0.0
        %755 = vmatpush.msra.mxu0 0.0
        %756 = vmatpush.msra.mxu0 0.0
        %757 = vmatpush.msra.mxu0 0.0
        %758 = vmatpush.msra.mxu0 0.0
        %759 = vmatpush.msra.mxu0 0.0
        %760 = vmatpush.msra.mxu0 0.0
        %761 = vmatpush.msra.mxu0 0.0
        %762 = vmatpush.msra.mxu0 0.0
        %763 = vmatpush.msra.mxu0 0.0
        %764 = vmatpush.msra.mxu0 %v712
        %765 = vmatpush.msra.mxu0 %v709
        %766 = vmatpush.msra.mxu0 %v706
        %767 = vmatpush.msra.mxu0 %v703
        %768 = vmatmul.f32.gmra.mxu0 %v747
        %v769 = vpop.f32.mrf.mxu0
        %v770 = vadd.f32 0.0, %v769
        %771 = vmatmul.f32.gmra.mxu0 %v750
        %v772 = vpop.f32.mrf.mxu0
        %v773 = vadd.f32 0.0, %v772
        %774 = vdwg.mxu0
        %775 = vmatpush.msra.mxu0 0.0
        %776 = vmatpush.msra.mxu0 0.0
        %777 = vmatpush.msra.mxu0 0.0
        %778 = vmatpush.msra.mxu0 0.0
        %779 = vmatpush.msra.mxu0 0.0
        %780 = vmatpush.msra.mxu0 0.0
        %781 = vmatpush.msra.mxu0 0.0
        %782 = vmatpush.msra.mxu0 0.0
        %783 = vmatpush.msra.mxu0 0.0
        %784 = vmatpush.msra.mxu0 0.0
        %785 = vmatpush.msra.mxu0 0.0
        %786 = vmatpush.msra.mxu0 0.0
        %787 = vmatpush.msra.mxu0 %v741
        %788 = vmatpush.msra.mxu0 %v738
        %789 = vmatpush.msra.mxu0 %v735
        %790 = vmatpush.msra.mxu0 %v732
        %791 = vmatmul.f32.gmra.mxu0 %v747
        %v792 = vpop.f32.mrf.mxu0
        %v793 = vadd.f32 0.0, %v792
        %794 = vmatmul.f32.gmra.mxu0 %v750
        %v795 = vpop.f32.mrf.mxu0
        %v796 = vadd.f32 0.0, %v795
        %797 = vdwg.mxu0
        %v798 = vld [vmem:[#allocation6] sm:$0xf]
        %v799 = vld [vmem:[%s5] sm:$0xf]
        %v800 = vld [vmem:[%s8] sm:$0xff]
        %v801 = vld [vmem:[%s8 + $0x8] sm:$0xff]
        %v802 = vld [vmem:[%s9] sm:$0xff]
        %v803 = vld [vmem:[%s9 + $0x8] sm:$0xff]
        %805 = vset.pattern.permute.xlu0 0
        %806 = vperm.xlu0 %805, %v799
        %v807 = vpop.permute.xlu0 %806
        %v810 = vsel %vm745, %v798, 0
        %812 = vmatpush.msra.mxu0 0.0
        %813 = vmatpush.msra.mxu0 0.0
        %814 = vmatpush.msra.mxu0 0.0
        %815 = vmatpush.msra.mxu0 0.0
        %816 = vmatpush.msra.mxu0 0.0
        %817 = vmatpush.msra.mxu0 0.0
        %818 = vmatpush.msra.mxu0 0.0
        %819 = vmatpush.msra.mxu0 0.0
        %820 = vmatpush.msra.mxu0 0.0
        %821 = vmatpush.msra.mxu0 0.0
        %822 = vmatpush.msra.mxu0 0.0
        %823 = vmatpush.msra.mxu0 0.0
        %824 = vmatpush.msra.mxu0 %v712
        %825 = vmatpush.msra.mxu0 %v709
        %826 = vmatpush.msra.mxu0 %v706
        %827 = vmatpush.msra.mxu0 %v703
        %828 = vmatmul.f32.gmra.mxu0 %v810
        %v829 = vpop.f32.mrf.mxu0
        %v830 = vadd.f32 %v807, %v829
        %831 = vdwg.mxu0
        %832 = vmatpush.msra.mxu0 0.0
        %833 = vmatpush.msra.mxu0 0.0
        %834 = vmatpush.msra.mxu0 0.0
        %835 = vmatpush.msra.mxu0 0.0
        %836 = vmatpush.msra.mxu0 0.0
        %837 = vmatpush.msra.mxu0 0.0
        %838 = vmatpush.msra.mxu0 0.0
        %839 = vmatpush.msra.mxu0 0.0
        %840 = vmatpush.msra.mxu0 0.0
        %841 = vmatpush.msra.mxu0 0.0
        %842 = vmatpush.msra.mxu0 0.0
        %843 = vmatpush.msra.mxu0 0.0
        %844 = vmatpush.msra.mxu0 %v741
        %845 = vmatpush.msra.mxu0 %v738
        %846 = vmatpush.msra.mxu0 %v735
        %847 = vmatpush.msra.mxu0 %v732
        %848 = vmatmul.f32.gmra.mxu0 %v810
        %v849 = vpop.f32.mrf.mxu0
        %v850 = vadd.f32 %v807, %v849
        %851 = vdwg.mxu0
        %v852 = vmax.f32 %v830, 0.0
        %v853 = vmax.f32 %v850, 0.0
        %v854 = vld [vmem:[#allocation4] sm:$0xff]
        %v855 = vld [vmem:[#allocation4 + $0x8] sm:$0xff]
        %v856 = vld [vmem:[#allocation4 + $0x10] sm:$0xff]
        %v857 = vld [vmem:[#allocation4 + $0x18] sm:$0xff]
        %v858 = vld [vmem:[#allocation4 + $0x20] sm:$0xff]
        %v859 = vld [vmem:[#allocation4 + $0x28] sm:$0xff]
        %v860 = vld [vmem:[#allocation4 + $0x30] sm:$0xff]
        %v861 = vld [vmem:[#allocation4 + $0x38] sm:$0xff]
        %v862 = vld [vmem:[#allocation4 + $0x40] sm:$0xff]
        %v863 = vld [vmem:[#allocation4 + $0x48] sm:$0xff]
        %v864 = vld [vmem:[#allocation4 + $0x50] sm:$0xff]
        %v865 = vld [vmem:[#allocation4 + $0x58] sm:$0xff]
        %v866 = vld [vmem:[#allocation4 + $0x60] sm:$0xff]
        %v867 = vld [vmem:[#allocation4 + $0x68] sm:$0xff]
        %v868 = vld [vmem:[#allocation4 + $0x70] sm:$0xff]
        %v869 = vld [vmem:[#allocation4 + $0x78] sm:$0xff]
        %v870 = vld [vmem:[#allocation4 + $0x80] sm:$0xff]
        %v871 = vld [vmem:[#allocation4 + $0x88] sm:$0xff]
        %v872 = vld [vmem:[#allocation4 + $0x90] sm:$0xff]
        %v873 = vld [vmem:[#allocation4 + $0x98] sm:$0xff]
        %v874 = vld [vmem:[#allocation4 + $0xa0] sm:$0xff]
        %v875 = vld [vmem:[#allocation4 + $0xa8] sm:$0xff]
        %v876 = vld [vmem:[#allocation4 + $0xb0] sm:$0xff]
        %v877 = vld [vmem:[#allocation4 + $0xb8] sm:$0xff]
        %v878 = vld [vmem:[#allocation4 + $0xc0] sm:$0xff]
        %v879 = vld [vmem:[#allocation4 + $0xc8] sm:$0xff]
        %v880 = vld [vmem:[#allocation4 + $0xd0] sm:$0xff]
        %v881 = vld [vmem:[#allocation4 + $0xd8] sm:$0xff]
        %v882 = vld [vmem:[#allocation4 + $0xe0] sm:$0xff]
        %v883 = vld [vmem:[#allocation4 + $0xe8] sm:$0xff]
        %v884 = vld [vmem:[#allocation4 + $0xf0] sm:$0xff]
        %v885 = vld [vmem:[#allocation4 + $0xf8] sm:$0xff]
        %v886 = vld [vmem:[#allocation4 + $0x100] sm:$0xff]
        %v887 = vld [vmem:[#allocation4 + $0x108] sm:$0xff]
        %v888 = vld [vmem:[#allocation4 + $0x110] sm:$0xff]
        %v889 = vld [vmem:[#allocation4 + $0x118] sm:$0xff]
        %v890 = vld [vmem:[#allocation4 + $0x120] sm:$0xff]
        %v891 = vld [vmem:[#allocation4 + $0x128] sm:$0xff]
        %v892 = vld [vmem:[#allocation4 + $0x130] sm:$0xff]
        %v893 = vld [vmem:[#allocation4 + $0x138] sm:$0xff]
        %v894 = vld [vmem:[#allocation4 + $0x140] sm:$0xff]
        %v895 = vld [vmem:[#allocation4 + $0x148] sm:$0xff]
        %v896 = vld [vmem:[#allocation4 + $0x150] sm:$0xff]
        %v897 = vld [vmem:[#allocation4 + $0x158] sm:$0xff]
        %v898 = vld [vmem:[#allocation4 + $0x160] sm:$0xff]
        %v899 = vld [vmem:[#allocation4 + $0x168] sm:$0xff]
        %v900 = vld [vmem:[#allocation4 + $0x170] sm:$0xff]
        %v901 = vld [vmem:[#allocation4 + $0x178] sm:$0xff]
        %v902 = vld [vmem:[#allocation4 + $0x180] sm:$0xff]
        %v903 = vld [vmem:[#allocation4 + $0x188] sm:$0xff]
        %v904 = vld [vmem:[#allocation4 + $0x190] sm:$0xff]
        %v905 = vld [vmem:[#allocation4 + $0x198] sm:$0xff]
        %v906 = vld [vmem:[#allocation4 + $0x1a0] sm:$0xff]
        %v907 = vld [vmem:[#allocation4 + $0x1a8] sm:$0xff]
        %v908 = vld [vmem:[#allocation4 + $0x1b0] sm:$0xff]
        %v909 = vld [vmem:[#allocation4 + $0x1b8] sm:$0xff]
        %v910 = vld [vmem:[#allocation4 + $0x1c0] sm:$0xff]
        %v911 = vld [vmem:[#allocation4 + $0x1c8] sm:$0xff]
        %v912 = vld [vmem:[#allocation4 + $0x1d0] sm:$0xff]
        %v913 = vld [vmem:[#allocation4 + $0x1d8] sm:$0xff]
        %v914 = vld [vmem:[#allocation4 + $0x1e0] sm:$0xff]
        %v915 = vld [vmem:[#allocation4 + $0x1e8] sm:$0xff]
        %v916 = vld [vmem:[#allocation4 + $0x1f0] sm:$0xff]
        %v917 = vld [vmem:[#allocation4 + $0x1f8] sm:$0xff]
        %918 = vmatpush.msra.mxu0 %v884
        %919 = vmatpush.msra.mxu0 %v882
        %920 = vmatpush.msra.mxu0 %v880
        %921 = vmatpush.msra.mxu0 %v878
        %922 = vmatpush.msra.mxu0 %v876
        %923 = vmatpush.msra.mxu0 %v874
        %924 = vmatpush.msra.mxu0 %v872
        %925 = vmatpush.msra.mxu0 %v870
        %926 = vmatpush.msra.mxu0 %v868
        %927 = vmatpush.msra.mxu0 %v866
        %928 = vmatpush.msra.mxu0 %v864
        %929 = vmatpush.msra.mxu0 %v862
        %930 = vmatpush.msra.mxu0 %v860
        %931 = vmatpush.msra.mxu0 %v858
        %932 = vmatpush.msra.mxu0 %v856
        %933 = vmatpush.msra.mxu0 %v854
        %934 = vmatmul.f32.gmra.mxu0 %v852
        %v935 = vpop.f32.mrf.mxu0
        %v936 = vadd.f32 0.0, %v935
        %937 = vdwg.mxu0
        %938 = vmatpush.msra.mxu0 %v916
        %939 = vmatpush.msra.mxu0 %v914
        %940 = vmatpush.msra.mxu0 %v912
        %941 = vmatpush.msra.mxu0 %v910
        %942 = vmatpush.msra.mxu0 %v908
        %943 = vmatpush.msra.mxu0 %v906
        %944 = vmatpush.msra.mxu0 %v904
        %945 = vmatpush.msra.mxu0 %v902
        %946 = vmatpush.msra.mxu0 %v900
        %947 = vmatpush.msra.mxu0 %v898
        %948 = vmatpush.msra.mxu0 %v896
        %949 = vmatpush.msra.mxu0 %v894
        %950 = vmatpush.msra.mxu0 %v892
        %951 = vmatpush.msra.mxu0 %v890
        %952 = vmatpush.msra.mxu0 %v888
        %953 = vmatpush.msra.mxu0 %v886
        %954 = vmatmul.f32.gmra.mxu0 %v853
        %v955 = vpop.f32.mrf.mxu0
        %v956 = vadd.f32 %v936, %v955
        %957 = vdwg.mxu0
        %958 = vmatpush.msra.mxu0 %v885
        %959 = vmatpush.msra.mxu0 %v883
        %960 = vmatpush.msra.mxu0 %v881
        %961 = vmatpush.msra.mxu0 %v879
        %962 = vmatpush.msra.mxu0 %v877
        %963 = vmatpush.msra.mxu0 %v875
        %964 = vmatpush.msra.mxu0 %v873
        %965 = vmatpush.msra.mxu0 %v871
        %966 = vmatpush.msra.mxu0 %v869
        %967 = vmatpush.msra.mxu0 %v867
        %968 = vmatpush.msra.mxu0 %v865
        %969 = vmatpush.msra.mxu0 %v863
        %970 = vmatpush.msra.mxu0 %v861
        %971 = vmatpush.msra.mxu0 %v859
        %972 = vmatpush.msra.mxu0 %v857
        %973 = vmatpush.msra.mxu0 %v855
        %974 = vmatmul.f32.gmra.mxu0 %v852
        %v975 = vpop.f32.mrf.mxu0
        %v976 = vadd.f32 0.0, %v975
        %977 = vdwg.mxu0
        %978 = vmatpush.msra.mxu0 %v917
        %979 = vmatpush.msra.mxu0 %v915
        %980 = vmatpush.msra.mxu0 %v913
        %981 = vmatpush.msra.mxu0 %v911
        %982 = vmatpush.msra.mxu0 %v909
        %983 = vmatpush.msra.mxu0 %v907
        %984 = vmatpush.msra.mxu0 %v905
        %985 = vmatpush.msra.mxu0 %v903
        %986 = vmatpush.msra.mxu0 %v901
        %987 = vmatpush.msra.mxu0 %v899
        %988 = vmatpush.msra.mxu0 %v897
        %989 = vmatpush.msra.mxu0 %v895
        %990 = vmatpush.msra.mxu0 %v893
        %991 = vmatpush.msra.mxu0 %v891
        %992 = vmatpush.msra.mxu0 %v889
        %993 = vmatpush.msra.mxu0 %v887
        %994 = vmatmul.f32.gmra.mxu0 %v853
        %v995 = vpop.f32.mrf.mxu0
        %v996 = vadd.f32 %v976, %v995
        %997 = vdwg.mxu0
        %v998 = vld [vmem:[%s6] sm:$0xf]
        %s999 = scalar_lea.vmem [#allocation4], 512
        %v1000 = vld [vmem:[%s999] sm:$0xff]
        %v1001 = vld [vmem:[%s999 + $0x8] sm:$0xff]
        %v1002 = vld [vmem:[%s999 + $0x10] sm:$0xff]
        %v1003 = vld [vmem:[%s999 + $0x18] sm:$0xff]
        %v1004 = vld [vmem:[%s999 + $0x20] sm:$0xff]
        %v1005 = vld [vmem:[%s999 + $0x28] sm:$0xff]
        %v1006 = vld [vmem:[%s999 + $0x30] sm:$0xff]
        %v1007 = vld [vmem:[%s999 + $0x38] sm:$0xff]
        %v1008 = vld [vmem:[%s999 + $0x40] sm:$0xff]
        %v1009 = vld [vmem:[%s999 + $0x48] sm:$0xff]
        %v1010 = vld [vmem:[%s999 + $0x50] sm:$0xff]
        %v1011 = vld [vmem:[%s999 + $0x58] sm:$0xff]
        %v1012 = vld [vmem:[%s999 + $0x60] sm:$0xff]
        %v1013 = vld [vmem:[%s999 + $0x68] sm:$0xff]
        %v1014 = vld [vmem:[%s999 + $0x70] sm:$0xff]
        %v1015 = vld [vmem:[%s999 + $0x78] sm:$0xff]
        %v1016 = vld [vmem:[%s999 + $0x80] sm:$0xff]
        %v1017 = vld [vmem:[%s999 + $0x88] sm:$0xff]
        %v1018 = vld [vmem:[%s999 + $0x90] sm:$0xff]
        %v1019 = vld [vmem:[%s999 + $0x98] sm:$0xff]
        %v1020 = vld [vmem:[%s999 + $0xa0] sm:$0xff]
        %v1021 = vld [vmem:[%s999 + $0xa8] sm:$0xff]
        %v1022 = vld [vmem:[%s999 + $0xb0] sm:$0xff]
        %v1023 = vld [vmem:[%s999 + $0xb8] sm:$0xff]
        %v1024 = vld [vmem:[%s999 + $0xc0] sm:$0xff]
        %v1025 = vld [vmem:[%s999 + $0xc8] sm:$0xff]
        %v1026 = vld [vmem:[%s999 + $0xd0] sm:$0xff]
        %v1027 = vld [vmem:[%s999 + $0xd8] sm:$0xff]
        %v1028 = vld [vmem:[%s999 + $0xe0] sm:$0xff]
        %v1029 = vld [vmem:[%s999 + $0xe8] sm:$0xff]
        %v1030 = vld [vmem:[%s999 + $0xf0] sm:$0xff]
        %v1031 = vld [vmem:[%s999 + $0xf8] sm:$0xff]
        %v1032 = vld [vmem:[%s999 + $0x100] sm:$0xff]
        %v1033 = vld [vmem:[%s999 + $0x108] sm:$0xff]
        %v1034 = vld [vmem:[%s999 + $0x110] sm:$0xff]
        %v1035 = vld [vmem:[%s999 + $0x118] sm:$0xff]
        %v1036 = vld [vmem:[%s999 + $0x120] sm:$0xff]
        %v1037 = vld [vmem:[%s999 + $0x128] sm:$0xff]
        %v1038 = vld [vmem:[%s999 + $0x130] sm:$0xff]
        %v1039 = vld [vmem:[%s999 + $0x138] sm:$0xff]
        %v1040 = vld [vmem:[%s999 + $0x140] sm:$0xff]
        %v1041 = vld [vmem:[%s999 + $0x148] sm:$0xff]
        %v1042 = vld [vmem:[%s999 + $0x150] sm:$0xff]
        %v1043 = vld [vmem:[%s999 + $0x158] sm:$0xff]
        %v1044 = vld [vmem:[%s999 + $0x160] sm:$0xff]
        %v1045 = vld [vmem:[%s999 + $0x168] sm:$0xff]
        %v1046 = vld [vmem:[%s999 + $0x170] sm:$0xff]
        %v1047 = vld [vmem:[%s999 + $0x178] sm:$0xff]
        %v1048 = vld [vmem:[%s999 + $0x180] sm:$0xff]
        %v1049 = vld [vmem:[%s999 + $0x188] sm:$0xff]
        %v1050 = vld [vmem:[%s999 + $0x190] sm:$0xff]
        %v1051 = vld [vmem:[%s999 + $0x198] sm:$0xff]
        %v1052 = vld [vmem:[%s999 + $0x1a0] sm:$0xff]
        %v1053 = vld [vmem:[%s999 + $0x1a8] sm:$0xff]
        %v1054 = vld [vmem:[%s999 + $0x1b0] sm:$0xff]
        %v1055 = vld [vmem:[%s999 + $0x1b8] sm:$0xff]
        %v1056 = vld [vmem:[%s999 + $0x1c0] sm:$0xff]
        %v1057 = vld [vmem:[%s999 + $0x1c8] sm:$0xff]
        %v1058 = vld [vmem:[%s999 + $0x1d0] sm:$0xff]
        %v1059 = vld [vmem:[%s999 + $0x1d8] sm:$0xff]
        %v1060 = vld [vmem:[%s999 + $0x1e0] sm:$0xff]
        %v1061 = vld [vmem:[%s999 + $0x1e8] sm:$0xff]
        %v1062 = vld [vmem:[%s999 + $0x1f0] sm:$0xff]
        %v1063 = vld [vmem:[%s999 + $0x1f8] sm:$0xff]
        %1064 = vmatpush.msra.mxu0 %v1030
        %1065 = vmatpush.msra.mxu0 %v1028
        %1066 = vmatpush.msra.mxu0 %v1026
        %1067 = vmatpush.msra.mxu0 %v1024
        %1068 = vmatpush.msra.mxu0 %v1022
        %1069 = vmatpush.msra.mxu0 %v1020
        %1070 = vmatpush.msra.mxu0 %v1018
        %1071 = vmatpush.msra.mxu0 %v1016
        %1072 = vmatpush.msra.mxu0 %v1014
        %1073 = vmatpush.msra.mxu0 %v1012
        %1074 = vmatpush.msra.mxu0 %v1010
        %1075 = vmatpush.msra.mxu0 %v1008
        %1076 = vmatpush.msra.mxu0 %v1006
        %1077 = vmatpush.msra.mxu0 %v1004
        %1078 = vmatpush.msra.mxu0 %v1002
        %1079 = vmatpush.msra.mxu0 %v1000
        %1080 = vmatmul.f32.gmra.mxu0 %v852
        %v1081 = vpop.f32.mrf.mxu0
        %v1082 = vadd.f32 0.0, %v1081
        %1083 = vdwg.mxu0
        %1084 = vmatpush.msra.mxu0 %v1062
        %1085 = vmatpush.msra.mxu0 %v1060
        %1086 = vmatpush.msra.mxu0 %v1058
        %1087 = vmatpush.msra.mxu0 %v1056
        %1088 = vmatpush.msra.mxu0 %v1054
        %1089 = vmatpush.msra.mxu0 %v1052
        %1090 = vmatpush.msra.mxu0 %v1050
        %1091 = vmatpush.msra.mxu0 %v1048
        %1092 = vmatpush.msra.mxu0 %v1046
        %1093 = vmatpush.msra.mxu0 %v1044
        %1094 = vmatpush.msra.mxu0 %v1042
        %1095 = vmatpush.msra.mxu0 %v1040
        %1096 = vmatpush.msra.mxu0 %v1038
        %1097 = vmatpush.msra.mxu0 %v1036
        %1098 = vmatpush.msra.mxu0 %v1034
        %1099 = vmatpush.msra.mxu0 %v1032
        %1100 = vmatmul.f32.gmra.mxu0 %v853
        %v1101 = vpop.f32.mrf.mxu0
        %v1102 = vadd.f32 %v1082, %v1101
        %1103 = vdwg.mxu0
        %1104 = vmatpush.msra.mxu0 %v1031
        %1105 = vmatpush.msra.mxu0 %v1029
        %1106 = vmatpush.msra.mxu0 %v1027
        %1107 = vmatpush.msra.mxu0 %v1025
        %1108 = vmatpush.msra.mxu0 %v1023
        %1109 = vmatpush.msra.mxu0 %v1021
        %1110 = vmatpush.msra.mxu0 %v1019
        %1111 = vmatpush.msra.mxu0 %v1017
        %1112 = vmatpush.msra.mxu0 %v1015
        %1113 = vmatpush.msra.mxu0 %v1013
        %1114 = vmatpush.msra.mxu0 %v1011
        %1115 = vmatpush.msra.mxu0 %v1009
        %1116 = vmatpush.msra.mxu0 %v1007
        %1117 = vmatpush.msra.mxu0 %v1005
        %1118 = vmatpush.msra.mxu0 %v1003
        %1119 = vmatpush.msra.mxu0 %v1001
        %1120 = vmatmul.f32.gmra.mxu0 %v852
        %v1121 = vpop.f32.mrf.mxu0
        %v1122 = vadd.f32 0.0, %v1121
        %1123 = vdwg.mxu0
        %1124 = vmatpush.msra.mxu0 %v1063
        %1125 = vmatpush.msra.mxu0 %v1061
        %1126 = vmatpush.msra.mxu0 %v1059
        %1127 = vmatpush.msra.mxu0 %v1057
        %1128 = vmatpush.msra.mxu0 %v1055
        %1129 = vmatpush.msra.mxu0 %v1053
        %1130 = vmatpush.msra.mxu0 %v1051
        %1131 = vmatpush.msra.mxu0 %v1049
        %1132 = vmatpush.msra.mxu0 %v1047
        %1133 = vmatpush.msra.mxu0 %v1045
        %1134 = vmatpush.msra.mxu0 %v1043
        %1135 = vmatpush.msra.mxu0 %v1041
        %1136 = vmatpush.msra.mxu0 %v1039
        %1137 = vmatpush.msra.mxu0 %v1037
        %1138 = vmatpush.msra.mxu0 %v1035
        %1139 = vmatpush.msra.mxu0 %v1033
        %1140 = vmatmul.f32.gmra.mxu0 %v853
        %v1141 = vpop.f32.mrf.mxu0
        %v1142 = vadd.f32 %v1122, %v1141
        %1143 = vdwg.mxu0
        %s1144 = scalar_lea.vmem %s6, 4
        %v1145 = vld [vmem:[%s1144] sm:$0xf]
        %vm1146 = vcmask 31744
        %v1148 = vsel %vm1146, %v1145, 0
        %vm1150 = vcmask 1043456
        %v1152 = vsel %vm1150, %v1102, 0
        %v1155 = vsel %vm1150, %v1142, 0
        %1157 = vmatpush.msra.mxu0 0.0
        %1158 = vmatpush.msra.mxu0 0.0
        %1159 = vmatpush.msra.mxu0 0.0
        %1160 = vmatpush.msra.mxu0 0.0
        %1161 = vmatpush.msra.mxu0 0.0
        %1162 = vmatpush.msra.mxu0 0.0
        %1163 = vmatpush.msra.mxu0 0.0
        %1164 = vmatpush.msra.mxu0 0.0
        %1165 = vmatpush.msra.mxu0 0.0
        %1166 = vmatpush.msra.mxu0 0.0
        %1167 = vmatpush.msra.mxu0 0.0
        %1168 = vmatpush.msra.mxu0 0.0
        %1169 = vmatpush.msra.mxu0 0.0
        %1170 = vmatpush.msra.mxu0 0.0
        %1171 = vmatpush.msra.mxu0 0.0
        %1172 = vmatpush.msra.mxu0 %v1152
        %1173 = vmatmul.f32.gmra.mxu0 %v1148
        %v1174 = vpop.f32.mrf.mxu0
        %v1175 = vadd.f32 0.0, %v1174
        %1176 = vdwg.mxu0
        %1177 = vmatpush.msra.mxu0 0.0
        %1178 = vmatpush.msra.mxu0 0.0
        %1179 = vmatpush.msra.mxu0 0.0
        %1180 = vmatpush.msra.mxu0 0.0
        %1181 = vmatpush.msra.mxu0 0.0
        %1182 = vmatpush.msra.mxu0 0.0
        %1183 = vmatpush.msra.mxu0 0.0
        %1184 = vmatpush.msra.mxu0 0.0
        %1185 = vmatpush.msra.mxu0 0.0
        %1186 = vmatpush.msra.mxu0 0.0
        %1187 = vmatpush.msra.mxu0 0.0
        %1188 = vmatpush.msra.mxu0 0.0
        %1189 = vmatpush.msra.mxu0 0.0
        %1190 = vmatpush.msra.mxu0 0.0
        %1191 = vmatpush.msra.mxu0 0.0
        %1192 = vmatpush.msra.mxu0 %v1155
        %1193 = vmatmul.f32.gmra.mxu0 %v1148
        %v1194 = vpop.f32.mrf.mxu0
        %v1195 = vadd.f32 0.0, %v1194
        %1196 = vdwg.mxu0
        %v1198 = vsel %vm1146, %v998, 0
        %v1201 = vsel %vm1150, %v956, 0
        %v1204 = vsel %vm1150, %v996, 0
        %1206 = vmatpush.msra.mxu0 0.0
        %1207 = vmatpush.msra.mxu0 0.0
        %1208 = vmatpush.msra.mxu0 0.0
        %1209 = vmatpush.msra.mxu0 0.0
        %1210 = vmatpush.msra.mxu0 0.0
        %1211 = vmatpush.msra.mxu0 0.0
        %1212 = vmatpush.msra.mxu0 0.0
        %1213 = vmatpush.msra.mxu0 0.0
        %1214 = vmatpush.msra.mxu0 0.0
        %1215 = vmatpush.msra.mxu0 0.0
        %1216 = vmatpush.msra.mxu0 0.0
        %1217 = vmatpush.msra.mxu0 0.0
        %1218 = vmatpush.msra.mxu0 0.0
        %1219 = vmatpush.msra.mxu0 0.0
        %1220 = vmatpush.msra.mxu0 0.0
        %1221 = vmatpush.msra.mxu0 %v1201
        %1222 = vmatmul.f32.gmra.mxu0 %v1198
        %v1223 = vpop.f32.mrf.mxu0
        %v1224 = vadd.f32 %v1175, %v1223
        %1225 = vdwg.mxu0
        %1226 = vmatpush.msra.mxu0 0.0
        %1227 = vmatpush.msra.mxu0 0.0
        %1228 = vmatpush.msra.mxu0 0.0
        %1229 = vmatpush.msra.mxu0 0.0
        %1230 = vmatpush.msra.mxu0 0.0
        %1231 = vmatpush.msra.mxu0 0.0
        %1232 = vmatpush.msra.mxu0 0.0
        %1233 = vmatpush.msra.mxu0 0.0
        %1234 = vmatpush.msra.mxu0 0.0
        %1235 = vmatpush.msra.mxu0 0.0
        %1236 = vmatpush.msra.mxu0 0.0
        %1237 = vmatpush.msra.mxu0 0.0
        %1238 = vmatpush.msra.mxu0 0.0
        %1239 = vmatpush.msra.mxu0 0.0
        %1240 = vmatpush.msra.mxu0 0.0
        %1241 = vmatpush.msra.mxu0 %v1204
        %1242 = vmatmul.f32.gmra.mxu0 %v1198
        %v1243 = vpop.f32.mrf.mxu0
        %v1244 = vadd.f32 %v1195, %v1243
        %1245 = vdwg.mxu0
        %s1246 = scalar_lea.vmem [#allocation4], 1024
        %v1247 = vld [vmem:[%s1246] sm:$0xff]
        %v1248 = vld [vmem:[%s1246 + $0x8] sm:$0xff]
        %v1249 = vld [vmem:[%s1246 + $0x10] sm:$0xff]
        %v1250 = vld [vmem:[%s1246 + $0x18] sm:$0xff]
        %v1251 = vld [vmem:[%s1246 + $0x20] sm:$0xff]
        %v1252 = vld [vmem:[%s1246 + $0x28] sm:$0xff]
        %v1253 = vld [vmem:[%s1246 + $0x30] sm:$0xff]
        %v1254 = vld [vmem:[%s1246 + $0x38] sm:$0xff]
        %v1255 = vld [vmem:[%s1246 + $0x40] sm:$0xff]
        %v1256 = vld [vmem:[%s1246 + $0x48] sm:$0xff]
        %v1257 = vld [vmem:[%s1246 + $0x50] sm:$0xff]
        %v1258 = vld [vmem:[%s1246 + $0x58] sm:$0xff]
        %v1259 = vld [vmem:[%s1246 + $0x60] sm:$0xff]
        %v1260 = vld [vmem:[%s1246 + $0x68] sm:$0xff]
        %v1261 = vld [vmem:[%s1246 + $0x70] sm:$0xff]
        %v1262 = vld [vmem:[%s1246 + $0x78] sm:$0xff]
        %v1263 = vld [vmem:[%s1246 + $0x80] sm:$0xff]
        %v1264 = vld [vmem:[%s1246 + $0x88] sm:$0xff]
        %v1265 = vld [vmem:[%s1246 + $0x90] sm:$0xff]
        %v1266 = vld [vmem:[%s1246 + $0x98] sm:$0xff]
        %v1267 = vld [vmem:[%s1246 + $0xa0] sm:$0xff]
        %v1268 = vld [vmem:[%s1246 + $0xa8] sm:$0xff]
        %v1269 = vld [vmem:[%s1246 + $0xb0] sm:$0xff]
        %v1270 = vld [vmem:[%s1246 + $0xb8] sm:$0xff]
        %v1271 = vld [vmem:[%s1246 + $0xc0] sm:$0xff]
        %v1272 = vld [vmem:[%s1246 + $0xc8] sm:$0xff]
        %v1273 = vld [vmem:[%s1246 + $0xd0] sm:$0xff]
        %v1274 = vld [vmem:[%s1246 + $0xd8] sm:$0xff]
        %v1275 = vld [vmem:[%s1246 + $0xe0] sm:$0xff]
        %v1276 = vld [vmem:[%s1246 + $0xe8] sm:$0xff]
        %v1277 = vld [vmem:[%s1246 + $0xf0] sm:$0xff]
        %v1278 = vld [vmem:[%s1246 + $0xf8] sm:$0xff]
        %v1279 = vld [vmem:[%s1246 + $0x100] sm:$0xff]
        %v1280 = vld [vmem:[%s1246 + $0x108] sm:$0xff]
        %v1281 = vld [vmem:[%s1246 + $0x110] sm:$0xff]
        %v1282 = vld [vmem:[%s1246 + $0x118] sm:$0xff]
        %v1283 = vld [vmem:[%s1246 + $0x120] sm:$0xff]
        %v1284 = vld [vmem:[%s1246 + $0x128] sm:$0xff]
        %v1285 = vld [vmem:[%s1246 + $0x130] sm:$0xff]
        %v1286 = vld [vmem:[%s1246 + $0x138] sm:$0xff]
        %v1287 = vld [vmem:[%s1246 + $0x140] sm:$0xff]
        %v1288 = vld [vmem:[%s1246 + $0x148] sm:$0xff]
        %v1289 = vld [vmem:[%s1246 + $0x150] sm:$0xff]
        %v1290 = vld [vmem:[%s1246 + $0x158] sm:$0xff]
        %v1291 = vld [vmem:[%s1246 + $0x160] sm:$0xff]
        %v1292 = vld [vmem:[%s1246 + $0x168] sm:$0xff]
        %v1293 = vld [vmem:[%s1246 + $0x170] sm:$0xff]
        %v1294 = vld [vmem:[%s1246 + $0x178] sm:$0xff]
        %v1295 = vld [vmem:[%s1246 + $0x180] sm:$0xff]
        %v1296 = vld [vmem:[%s1246 + $0x188] sm:$0xff]
        %v1297 = vld [vmem:[%s1246 + $0x190] sm:$0xff]
        %v1298 = vld [vmem:[%s1246 + $0x198] sm:$0xff]
        %v1299 = vld [vmem:[%s1246 + $0x1a0] sm:$0xff]
        %v1300 = vld [vmem:[%s1246 + $0x1a8] sm:$0xff]
        %v1301 = vld [vmem:[%s1246 + $0x1b0] sm:$0xff]
        %v1302 = vld [vmem:[%s1246 + $0x1b8] sm:$0xff]
        %v1303 = vld [vmem:[%s1246 + $0x1c0] sm:$0xff]
        %v1304 = vld [vmem:[%s1246 + $0x1c8] sm:$0xff]
        %v1305 = vld [vmem:[%s1246 + $0x1d0] sm:$0xff]
        %v1306 = vld [vmem:[%s1246 + $0x1d8] sm:$0xff]
        %v1307 = vld [vmem:[%s1246 + $0x1e0] sm:$0xff]
        %v1308 = vld [vmem:[%s1246 + $0x1e8] sm:$0xff]
        %v1309 = vld [vmem:[%s1246 + $0x1f0] sm:$0xff]
        %v1310 = vld [vmem:[%s1246 + $0x1f8] sm:$0xff]
        %1311 = vmatpush.msra.mxu0 %v1277
        %1312 = vmatpush.msra.mxu0 %v1275
        %1313 = vmatpush.msra.mxu0 %v1273
        %1314 = vmatpush.msra.mxu0 %v1271
        %1315 = vmatpush.msra.mxu0 %v1269
        %1316 = vmatpush.msra.mxu0 %v1267
        %1317 = vmatpush.msra.mxu0 %v1265
        %1318 = vmatpush.msra.mxu0 %v1263
        %1319 = vmatpush.msra.mxu0 %v1261
        %1320 = vmatpush.msra.mxu0 %v1259
        %1321 = vmatpush.msra.mxu0 %v1257
        %1322 = vmatpush.msra.mxu0 %v1255
        %1323 = vmatpush.msra.mxu0 %v1253
        %1324 = vmatpush.msra.mxu0 %v1251
        %1325 = vmatpush.msra.mxu0 %v1249
        %1326 = vmatpush.msra.mxu0 %v1247
        %1327 = vmatmul.f32.gmra.mxu0 %v852
        %v1328 = vpop.f32.mrf.mxu0
        %v1329 = vadd.f32 0.0, %v1328
        %1330 = vdwg.mxu0
        %1331 = vmatpush.msra.mxu0 %v1309
        %1332 = vmatpush.msra.mxu0 %v1307
        %1333 = vmatpush.msra.mxu0 %v1305
        %1334 = vmatpush.msra.mxu0 %v1303
        %1335 = vmatpush.msra.mxu0 %v1301
        %1336 = vmatpush.msra.mxu0 %v1299
        %1337 = vmatpush.msra.mxu0 %v1297
        %1338 = vmatpush.msra.mxu0 %v1295
        %1339 = vmatpush.msra.mxu0 %v1293
        %1340 = vmatpush.msra.mxu0 %v1291
        %1341 = vmatpush.msra.mxu0 %v1289
        %1342 = vmatpush.msra.mxu0 %v1287
        %1343 = vmatpush.msra.mxu0 %v1285
        %1344 = vmatpush.msra.mxu0 %v1283
        %1345 = vmatpush.msra.mxu0 %v1281
        %1346 = vmatpush.msra.mxu0 %v1279
        %1347 = vmatmul.f32.gmra.mxu0 %v853
        %v1348 = vpop.f32.mrf.mxu0
        %v1349 = vadd.f32 %v1329, %v1348
        %1350 = vdwg.mxu0
        %1351 = vmatpush.msra.mxu0 %v1278
        %1352 = vmatpush.msra.mxu0 %v1276
        %1353 = vmatpush.msra.mxu0 %v1274
        %1354 = vmatpush.msra.mxu0 %v1272
        %1355 = vmatpush.msra.mxu0 %v1270
        %1356 = vmatpush.msra.mxu0 %v1268
        %1357 = vmatpush.msra.mxu0 %v1266
        %1358 = vmatpush.msra.mxu0 %v1264
        %1359 = vmatpush.msra.mxu0 %v1262
        %1360 = vmatpush.msra.mxu0 %v1260
        %1361 = vmatpush.msra.mxu0 %v1258
        %1362 = vmatpush.msra.mxu0 %v1256
        %1363 = vmatpush.msra.mxu0 %v1254
        %1364 = vmatpush.msra.mxu0 %v1252
        %1365 = vmatpush.msra.mxu0 %v1250
        %1366 = vmatpush.msra.mxu0 %v1248
        %1367 = vmatmul.f32.gmra.mxu0 %v852
        %v1368 = vpop.f32.mrf.mxu0
        %v1369 = vadd.f32 0.0, %v1368
        %1370 = vdwg.mxu0
        %1371 = vmatpush.msra.mxu0 %v1310
        %1372 = vmatpush.msra.mxu0 %v1308
        %1373 = vmatpush.msra.mxu0 %v1306
        %1374 = vmatpush.msra.mxu0 %v1304
        %1375 = vmatpush.msra.mxu0 %v1302
        %1376 = vmatpush.msra.mxu0 %v1300
        %1377 = vmatpush.msra.mxu0 %v1298
        %1378 = vmatpush.msra.mxu0 %v1296
        %1379 = vmatpush.msra.mxu0 %v1294
        %1380 = vmatpush.msra.mxu0 %v1292
        %1381 = vmatpush.msra.mxu0 %v1290
        %1382 = vmatpush.msra.mxu0 %v1288
        %1383 = vmatpush.msra.mxu0 %v1286
        %1384 = vmatpush.msra.mxu0 %v1284
        %1385 = vmatpush.msra.mxu0 %v1282
        %1386 = vmatpush.msra.mxu0 %v1280
        %1387 = vmatmul.f32.gmra.mxu0 %v853
        %v1388 = vpop.f32.mrf.mxu0
        %v1389 = vadd.f32 %v1369, %v1388
        %1390 = vdwg.mxu0
        %s1391 = scalar_lea.vmem %s6, 8
        %v1392 = vld [vmem:[%s1391] sm:$0xf]
        %v1394 = vsel %vm1146, %v1392, 0
        %v1397 = vsel %vm1150, %v1349, 0
        %v1400 = vsel %vm1150, %v1389, 0
        %1402 = vmatpush.msra.mxu0 0.0
        %1403 = vmatpush.msra.mxu0 0.0
        %1404 = vmatpush.msra.mxu0 0.0
        %1405 = vmatpush.msra.mxu0 0.0
        %1406 = vmatpush.msra.mxu0 0.0
        %1407 = vmatpush.msra.mxu0 0.0
        %1408 = vmatpush.msra.mxu0 0.0
        %1409 = vmatpush.msra.mxu0 0.0
        %1410 = vmatpush.msra.mxu0 0.0
        %1411 = vmatpush.msra.mxu0 0.0
        %1412 = vmatpush.msra.mxu0 0.0
        %1413 = vmatpush.msra.mxu0 0.0
        %1414 = vmatpush.msra.mxu0 0.0
        %1415 = vmatpush.msra.mxu0 0.0
        %1416 = vmatpush.msra.mxu0 0.0
        %1417 = vmatpush.msra.mxu0 %v1397
        %1418 = vmatmul.f32.gmra.mxu0 %v1394
        %v1419 = vpop.f32.mrf.mxu0
        %v1420 = vadd.f32 0.0, %v1419
        %1421 = vdwg.mxu0
        %1422 = vmatpush.msra.mxu0 0.0
        %1423 = vmatpush.msra.mxu0 0.0
        %1424 = vmatpush.msra.mxu0 0.0
        %1425 = vmatpush.msra.mxu0 0.0
        %1426 = vmatpush.msra.mxu0 0.0
        %1427 = vmatpush.msra.mxu0 0.0
        %1428 = vmatpush.msra.mxu0 0.0
        %1429 = vmatpush.msra.mxu0 0.0
        %1430 = vmatpush.msra.mxu0 0.0
        %1431 = vmatpush.msra.mxu0 0.0
        %1432 = vmatpush.msra.mxu0 0.0
        %1433 = vmatpush.msra.mxu0 0.0
        %1434 = vmatpush.msra.mxu0 0.0
        %1435 = vmatpush.msra.mxu0 0.0
        %1436 = vmatpush.msra.mxu0 0.0
        %1437 = vmatpush.msra.mxu0 %v1400
        %1438 = vmatmul.f32.gmra.mxu0 %v1394
        %v1439 = vpop.f32.mrf.mxu0
        %v1440 = vadd.f32 0.0, %v1439
        %1441 = vdwg.mxu0
        %v1442 = vadd.f32 %v1224, %v1420
        %v1443 = vadd.f32 %v1244, %v1440
        %s1444 = scalar_lea.vmem [#allocation4], 1536
        %v1445 = vld [vmem:[%s1444] sm:$0xff]
        %v1446 = vld [vmem:[%s1444 + $0x8] sm:$0xff]
        %v1447 = vld [vmem:[%s1444 + $0x10] sm:$0xff]
        %v1448 = vld [vmem:[%s1444 + $0x18] sm:$0xff]
        %v1449 = vld [vmem:[%s1444 + $0x20] sm:$0xff]
        %v1450 = vld [vmem:[%s1444 + $0x28] sm:$0xff]
        %v1451 = vld [vmem:[%s1444 + $0x30] sm:$0xff]
        %v1452 = vld [vmem:[%s1444 + $0x38] sm:$0xff]
        %v1453 = vld [vmem:[%s1444 + $0x40] sm:$0xff]
        %v1454 = vld [vmem:[%s1444 + $0x48] sm:$0xff]
        %v1455 = vld [vmem:[%s1444 + $0x50] sm:$0xff]
        %v1456 = vld [vmem:[%s1444 + $0x58] sm:$0xff]
        %v1457 = vld [vmem:[%s1444 + $0x60] sm:$0xff]
        %v1458 = vld [vmem:[%s1444 + $0x68] sm:$0xff]
        %v1459 = vld [vmem:[%s1444 + $0x70] sm:$0xff]
        %v1460 = vld [vmem:[%s1444 + $0x78] sm:$0xff]
        %v1461 = vld [vmem:[%s1444 + $0x80] sm:$0xff]
        %v1462 = vld [vmem:[%s1444 + $0x88] sm:$0xff]
        %v1463 = vld [vmem:[%s1444 + $0x90] sm:$0xff]
        %v1464 = vld [vmem:[%s1444 + $0x98] sm:$0xff]
        %v1465 = vld [vmem:[%s1444 + $0xa0] sm:$0xff]
        %v1466 = vld [vmem:[%s1444 + $0xa8] sm:$0xff]
        %v1467 = vld [vmem:[%s1444 + $0xb0] sm:$0xff]
        %v1468 = vld [vmem:[%s1444 + $0xb8] sm:$0xff]
        %v1469 = vld [vmem:[%s1444 + $0xc0] sm:$0xff]
        %v1470 = vld [vmem:[%s1444 + $0xc8] sm:$0xff]
        %v1471 = vld [vmem:[%s1444 + $0xd0] sm:$0xff]
        %v1472 = vld [vmem:[%s1444 + $0xd8] sm:$0xff]
        %v1473 = vld [vmem:[%s1444 + $0xe0] sm:$0xff]
        %v1474 = vld [vmem:[%s1444 + $0xe8] sm:$0xff]
        %v1475 = vld [vmem:[%s1444 + $0xf0] sm:$0xff]
        %v1476 = vld [vmem:[%s1444 + $0xf8] sm:$0xff]
        %v1477 = vld [vmem:[%s1444 + $0x100] sm:$0xff]
        %v1478 = vld [vmem:[%s1444 + $0x108] sm:$0xff]
        %v1479 = vld [vmem:[%s1444 + $0x110] sm:$0xff]
        %v1480 = vld [vmem:[%s1444 + $0x118] sm:$0xff]
        %v1481 = vld [vmem:[%s1444 + $0x120] sm:$0xff]
        %v1482 = vld [vmem:[%s1444 + $0x128] sm:$0xff]
        %v1483 = vld [vmem:[%s1444 + $0x130] sm:$0xff]
        %v1484 = vld [vmem:[%s1444 + $0x138] sm:$0xff]
        %v1485 = vld [vmem:[%s1444 + $0x140] sm:$0xff]
        %v1486 = vld [vmem:[%s1444 + $0x148] sm:$0xff]
        %v1487 = vld [vmem:[%s1444 + $0x150] sm:$0xff]
        %v1488 = vld [vmem:[%s1444 + $0x158] sm:$0xff]
        %v1489 = vld [vmem:[%s1444 + $0x160] sm:$0xff]
        %v1490 = vld [vmem:[%s1444 + $0x168] sm:$0xff]
        %v1491 = vld [vmem:[%s1444 + $0x170] sm:$0xff]
        %v1492 = vld [vmem:[%s1444 + $0x178] sm:$0xff]
        %v1493 = vld [vmem:[%s1444 + $0x180] sm:$0xff]
        %v1494 = vld [vmem:[%s1444 + $0x188] sm:$0xff]
        %v1495 = vld [vmem:[%s1444 + $0x190] sm:$0xff]
        %v1496 = vld [vmem:[%s1444 + $0x198] sm:$0xff]
        %v1497 = vld [vmem:[%s1444 + $0x1a0] sm:$0xff]
        %v1498 = vld [vmem:[%s1444 + $0x1a8] sm:$0xff]
        %v1499 = vld [vmem:[%s1444 + $0x1b0] sm:$0xff]
        %v1500 = vld [vmem:[%s1444 + $0x1b8] sm:$0xff]
        %v1501 = vld [vmem:[%s1444 + $0x1c0] sm:$0xff]
        %v1502 = vld [vmem:[%s1444 + $0x1c8] sm:$0xff]
        %v1503 = vld [vmem:[%s1444 + $0x1d0] sm:$0xff]
        %v1504 = vld [vmem:[%s1444 + $0x1d8] sm:$0xff]
        %v1505 = vld [vmem:[%s1444 + $0x1e0] sm:$0xff]
        %v1506 = vld [vmem:[%s1444 + $0x1e8] sm:$0xff]
        %v1507 = vld [vmem:[%s1444 + $0x1f0] sm:$0xff]
        %v1508 = vld [vmem:[%s1444 + $0x1f8] sm:$0xff]
        %1509 = vmatpush.msra.mxu0 %v1475
        %1510 = vmatpush.msra.mxu0 %v1473
        %1511 = vmatpush.msra.mxu0 %v1471
        %1512 = vmatpush.msra.mxu0 %v1469
        %1513 = vmatpush.msra.mxu0 %v1467
        %1514 = vmatpush.msra.mxu0 %v1465
        %1515 = vmatpush.msra.mxu0 %v1463
        %1516 = vmatpush.msra.mxu0 %v1461
        %1517 = vmatpush.msra.mxu0 %v1459
        %1518 = vmatpush.msra.mxu0 %v1457
        %1519 = vmatpush.msra.mxu0 %v1455
        %1520 = vmatpush.msra.mxu0 %v1453
        %1521 = vmatpush.msra.mxu0 %v1451
        %1522 = vmatpush.msra.mxu0 %v1449
        %1523 = vmatpush.msra.mxu0 %v1447
        %1524 = vmatpush.msra.mxu0 %v1445
        %1525 = vmatmul.f32.gmra.mxu0 %v852
        %v1526 = vpop.f32.mrf.mxu0
        %v1527 = vadd.f32 0.0, %v1526
        %1528 = vdwg.mxu0
        %1529 = vmatpush.msra.mxu0 %v1507
        %1530 = vmatpush.msra.mxu0 %v1505
        %1531 = vmatpush.msra.mxu0 %v1503
        %1532 = vmatpush.msra.mxu0 %v1501
        %1533 = vmatpush.msra.mxu0 %v1499
        %1534 = vmatpush.msra.mxu0 %v1497
        %1535 = vmatpush.msra.mxu0 %v1495
        %1536 = vmatpush.msra.mxu0 %v1493
        %1537 = vmatpush.msra.mxu0 %v1491
        %1538 = vmatpush.msra.mxu0 %v1489
        %1539 = vmatpush.msra.mxu0 %v1487
        %1540 = vmatpush.msra.mxu0 %v1485
        %1541 = vmatpush.msra.mxu0 %v1483
        %1542 = vmatpush.msra.mxu0 %v1481
        %1543 = vmatpush.msra.mxu0 %v1479
        %1544 = vmatpush.msra.mxu0 %v1477
        %1545 = vmatmul.f32.gmra.mxu0 %v853
        %v1546 = vpop.f32.mrf.mxu0
        %v1547 = vadd.f32 %v1527, %v1546
        %1548 = vdwg.mxu0
        %1549 = vmatpush.msra.mxu0 %v1476
        %1550 = vmatpush.msra.mxu0 %v1474
        %1551 = vmatpush.msra.mxu0 %v1472
        %1552 = vmatpush.msra.mxu0 %v1470
        %1553 = vmatpush.msra.mxu0 %v1468
        %1554 = vmatpush.msra.mxu0 %v1466
        %1555 = vmatpush.msra.mxu0 %v1464
        %1556 = vmatpush.msra.mxu0 %v1462
        %1557 = vmatpush.msra.mxu0 %v1460
        %1558 = vmatpush.msra.mxu0 %v1458
        %1559 = vmatpush.msra.mxu0 %v1456
        %1560 = vmatpush.msra.mxu0 %v1454
        %1561 = vmatpush.msra.mxu0 %v1452
        %1562 = vmatpush.msra.mxu0 %v1450
        %1563 = vmatpush.msra.mxu0 %v1448
        %1564 = vmatpush.msra.mxu0 %v1446
        %1565 = vmatmul.f32.gmra.mxu0 %v852
        %v1566 = vpop.f32.mrf.mxu0
        %v1567 = vadd.f32 0.0, %v1566
        %1568 = vdwg.mxu0
        %1569 = vmatpush.msra.mxu0 %v1508
        %1570 = vmatpush.msra.mxu0 %v1506
        %1571 = vmatpush.msra.mxu0 %v1504
        %1572 = vmatpush.msra.mxu0 %v1502
        %1573 = vmatpush.msra.mxu0 %v1500
        %1574 = vmatpush.msra.mxu0 %v1498
        %1575 = vmatpush.msra.mxu0 %v1496
        %1576 = vmatpush.msra.mxu0 %v1494
        %1577 = vmatpush.msra.mxu0 %v1492
        %1578 = vmatpush.msra.mxu0 %v1490
        %1579 = vmatpush.msra.mxu0 %v1488
        %1580 = vmatpush.msra.mxu0 %v1486
        %1581 = vmatpush.msra.mxu0 %v1484
        %1582 = vmatpush.msra.mxu0 %v1482
        %1583 = vmatpush.msra.mxu0 %v1480
        %1584 = vmatpush.msra.mxu0 %v1478
        %1585 = vmatmul.f32.gmra.mxu0 %v853
        %v1586 = vpop.f32.mrf.mxu0
        %v1587 = vadd.f32 %v1567, %v1586
        %1588 = vdwg.mxu0
        %s1589 = scalar_lea.vmem %s6, 12
        %v1590 = vld [vmem:[%s1589] sm:$0xf]
        %v1592 = vsel %vm1146, %v1590, 0
        %v1595 = vsel %vm1150, %v1547, 0
        %v1598 = vsel %vm1150, %v1587, 0
        %1600 = vmatpush.msra.mxu0 0.0
        %1601 = vmatpush.msra.mxu0 0.0
        %1602 = vmatpush.msra.mxu0 0.0
        %1603 = vmatpush.msra.mxu0 0.0
        %1604 = vmatpush.msra.mxu0 0.0
        %1605 = vmatpush.msra.mxu0 0.0
        %1606 = vmatpush.msra.mxu0 0.0
        %1607 = vmatpush.msra.mxu0 0.0
        %1608 = vmatpush.msra.mxu0 0.0
        %1609 = vmatpush.msra.mxu0 0.0
        %1610 = vmatpush.msra.mxu0 0.0
        %1611 = vmatpush.msra.mxu0 0.0
        %1612 = vmatpush.msra.mxu0 0.0
        %1613 = vmatpush.msra.mxu0 0.0
        %1614 = vmatpush.msra.mxu0 0.0
        %1615 = vmatpush.msra.mxu0 %v1595
        %1616 = vmatmul.f32.gmra.mxu0 %v1592
        %v1617 = vpop.f32.mrf.mxu0
        %v1618 = vadd.f32 0.0, %v1617
        %1619 = vdwg.mxu0
        %1620 = vmatpush.msra.mxu0 0.0
        %1621 = vmatpush.msra.mxu0 0.0
        %1622 = vmatpush.msra.mxu0 0.0
        %1623 = vmatpush.msra.mxu0 0.0
        %1624 = vmatpush.msra.mxu0 0.0
        %1625 = vmatpush.msra.mxu0 0.0
        %1626 = vmatpush.msra.mxu0 0.0
        %1627 = vmatpush.msra.mxu0 0.0
        %1628 = vmatpush.msra.mxu0 0.0
        %1629 = vmatpush.msra.mxu0 0.0
        %1630 = vmatpush.msra.mxu0 0.0
        %1631 = vmatpush.msra.mxu0 0.0
        %1632 = vmatpush.msra.mxu0 0.0
        %1633 = vmatpush.msra.mxu0 0.0
        %1634 = vmatpush.msra.mxu0 0.0
        %1635 = vmatpush.msra.mxu0 %v1598
        %1636 = vmatmul.f32.gmra.mxu0 %v1592
        %v1637 = vpop.f32.mrf.mxu0
        %v1638 = vadd.f32 0.0, %v1637
        %1639 = vdwg.mxu0
        %v1640 = vadd.f32 %v1442, %v1618
        %v1641 = vadd.f32 %v1443, %v1638
        %s1642 = scalar_lea.vmem [#allocation4], 2048
        %v1643 = vld [vmem:[%s1642] sm:$0xff]
        %v1644 = vld [vmem:[%s1642 + $0x8] sm:$0xff]
        %v1645 = vld [vmem:[%s1642 + $0x10] sm:$0xff]
        %v1646 = vld [vmem:[%s1642 + $0x18] sm:$0xff]
        %v1647 = vld [vmem:[%s1642 + $0x20] sm:$0xff]
        %v1648 = vld [vmem:[%s1642 + $0x28] sm:$0xff]
        %v1649 = vld [vmem:[%s1642 + $0x30] sm:$0xff]
        %v1650 = vld [vmem:[%s1642 + $0x38] sm:$0xff]
        %v1651 = vld [vmem:[%s1642 + $0x40] sm:$0xff]
        %v1652 = vld [vmem:[%s1642 + $0x48] sm:$0xff]
        %v1653 = vld [vmem:[%s1642 + $0x50] sm:$0xff]
        %v1654 = vld [vmem:[%s1642 + $0x58] sm:$0xff]
        %v1655 = vld [vmem:[%s1642 + $0x60] sm:$0xff]
        %v1656 = vld [vmem:[%s1642 + $0x68] sm:$0xff]
        %v1657 = vld [vmem:[%s1642 + $0x70] sm:$0xff]
        %v1658 = vld [vmem:[%s1642 + $0x78] sm:$0xff]
        %v1659 = vld [vmem:[%s1642 + $0x80] sm:$0xff]
        %v1660 = vld [vmem:[%s1642 + $0x88] sm:$0xff]
        %v1661 = vld [vmem:[%s1642 + $0x90] sm:$0xff]
        %v1662 = vld [vmem:[%s1642 + $0x98] sm:$0xff]
        %v1663 = vld [vmem:[%s1642 + $0xa0] sm:$0xff]
        %v1664 = vld [vmem:[%s1642 + $0xa8] sm:$0xff]
        %v1665 = vld [vmem:[%s1642 + $0xb0] sm:$0xff]
        %v1666 = vld [vmem:[%s1642 + $0xb8] sm:$0xff]
        %v1667 = vld [vmem:[%s1642 + $0xc0] sm:$0xff]
        %v1668 = vld [vmem:[%s1642 + $0xc8] sm:$0xff]
        %v1669 = vld [vmem:[%s1642 + $0xd0] sm:$0xff]
        %v1670 = vld [vmem:[%s1642 + $0xd8] sm:$0xff]
        %v1671 = vld [vmem:[%s1642 + $0xe0] sm:$0xff]
        %v1672 = vld [vmem:[%s1642 + $0xe8] sm:$0xff]
        %v1673 = vld [vmem:[%s1642 + $0xf0] sm:$0xff]
        %v1674 = vld [vmem:[%s1642 + $0xf8] sm:$0xff]
        %v1675 = vld [vmem:[%s1642 + $0x100] sm:$0xff]
        %v1676 = vld [vmem:[%s1642 + $0x108] sm:$0xff]
        %v1677 = vld [vmem:[%s1642 + $0x110] sm:$0xff]
        %v1678 = vld [vmem:[%s1642 + $0x118] sm:$0xff]
        %v1679 = vld [vmem:[%s1642 + $0x120] sm:$0xff]
        %v1680 = vld [vmem:[%s1642 + $0x128] sm:$0xff]
        %v1681 = vld [vmem:[%s1642 + $0x130] sm:$0xff]
        %v1682 = vld [vmem:[%s1642 + $0x138] sm:$0xff]
        %v1683 = vld [vmem:[%s1642 + $0x140] sm:$0xff]
        %v1684 = vld [vmem:[%s1642 + $0x148] sm:$0xff]
        %v1685 = vld [vmem:[%s1642 + $0x150] sm:$0xff]
        %v1686 = vld [vmem:[%s1642 + $0x158] sm:$0xff]
        %v1687 = vld [vmem:[%s1642 + $0x160] sm:$0xff]
        %v1688 = vld [vmem:[%s1642 + $0x168] sm:$0xff]
        %v1689 = vld [vmem:[%s1642 + $0x170] sm:$0xff]
        %v1690 = vld [vmem:[%s1642 + $0x178] sm:$0xff]
        %v1691 = vld [vmem:[%s1642 + $0x180] sm:$0xff]
        %v1692 = vld [vmem:[%s1642 + $0x188] sm:$0xff]
        %v1693 = vld [vmem:[%s1642 + $0x190] sm:$0xff]
        %v1694 = vld [vmem:[%s1642 + $0x198] sm:$0xff]
        %v1695 = vld [vmem:[%s1642 + $0x1a0] sm:$0xff]
        %v1696 = vld [vmem:[%s1642 + $0x1a8] sm:$0xff]
        %v1697 = vld [vmem:[%s1642 + $0x1b0] sm:$0xff]
        %v1698 = vld [vmem:[%s1642 + $0x1b8] sm:$0xff]
        %v1699 = vld [vmem:[%s1642 + $0x1c0] sm:$0xff]
        %v1700 = vld [vmem:[%s1642 + $0x1c8] sm:$0xff]
        %v1701 = vld [vmem:[%s1642 + $0x1d0] sm:$0xff]
        %v1702 = vld [vmem:[%s1642 + $0x1d8] sm:$0xff]
        %v1703 = vld [vmem:[%s1642 + $0x1e0] sm:$0xff]
        %v1704 = vld [vmem:[%s1642 + $0x1e8] sm:$0xff]
        %v1705 = vld [vmem:[%s1642 + $0x1f0] sm:$0xff]
        %v1706 = vld [vmem:[%s1642 + $0x1f8] sm:$0xff]
        %1707 = vmatpush.msra.mxu0 %v1673
        %1708 = vmatpush.msra.mxu0 %v1671
        %1709 = vmatpush.msra.mxu0 %v1669
        %1710 = vmatpush.msra.mxu0 %v1667
        %1711 = vmatpush.msra.mxu0 %v1665
        %1712 = vmatpush.msra.mxu0 %v1663
        %1713 = vmatpush.msra.mxu0 %v1661
        %1714 = vmatpush.msra.mxu0 %v1659
        %1715 = vmatpush.msra.mxu0 %v1657
        %1716 = vmatpush.msra.mxu0 %v1655
        %1717 = vmatpush.msra.mxu0 %v1653
        %1718 = vmatpush.msra.mxu0 %v1651
        %1719 = vmatpush.msra.mxu0 %v1649
        %1720 = vmatpush.msra.mxu0 %v1647
        %1721 = vmatpush.msra.mxu0 %v1645
        %1722 = vmatpush.msra.mxu0 %v1643
        %1723 = vmatmul.f32.gmra.mxu0 %v852
        %v1724 = vpop.f32.mrf.mxu0
        %v1725 = vadd.f32 0.0, %v1724
        %1726 = vdwg.mxu0
        %1727 = vmatpush.msra.mxu0 %v1705
        %1728 = vmatpush.msra.mxu0 %v1703
        %1729 = vmatpush.msra.mxu0 %v1701
        %1730 = vmatpush.msra.mxu0 %v1699
        %1731 = vmatpush.msra.mxu0 %v1697
        %1732 = vmatpush.msra.mxu0 %v1695
        %1733 = vmatpush.msra.mxu0 %v1693
        %1734 = vmatpush.msra.mxu0 %v1691
        %1735 = vmatpush.msra.mxu0 %v1689
        %1736 = vmatpush.msra.mxu0 %v1687
        %1737 = vmatpush.msra.mxu0 %v1685
        %1738 = vmatpush.msra.mxu0 %v1683
        %1739 = vmatpush.msra.mxu0 %v1681
        %1740 = vmatpush.msra.mxu0 %v1679
        %1741 = vmatpush.msra.mxu0 %v1677
        %1742 = vmatpush.msra.mxu0 %v1675
        %1743 = vmatmul.f32.gmra.mxu0 %v853
        %v1744 = vpop.f32.mrf.mxu0
        %v1745 = vadd.f32 %v1725, %v1744
        %1746 = vdwg.mxu0
        %1747 = vmatpush.msra.mxu0 %v1674
        %1748 = vmatpush.msra.mxu0 %v1672
        %1749 = vmatpush.msra.mxu0 %v1670
        %1750 = vmatpush.msra.mxu0 %v1668
        %1751 = vmatpush.msra.mxu0 %v1666
        %1752 = vmatpush.msra.mxu0 %v1664
        %1753 = vmatpush.msra.mxu0 %v1662
        %1754 = vmatpush.msra.mxu0 %v1660
        %1755 = vmatpush.msra.mxu0 %v1658
        %1756 = vmatpush.msra.mxu0 %v1656
        %1757 = vmatpush.msra.mxu0 %v1654
        %1758 = vmatpush.msra.mxu0 %v1652
        %1759 = vmatpush.msra.mxu0 %v1650
        %1760 = vmatpush.msra.mxu0 %v1648
        %1761 = vmatpush.msra.mxu0 %v1646
        %1762 = vmatpush.msra.mxu0 %v1644
        %1763 = vmatmul.f32.gmra.mxu0 %v852
        %v1764 = vpop.f32.mrf.mxu0
        %v1765 = vadd.f32 0.0, %v1764
        %1766 = vdwg.mxu0
        %1767 = vmatpush.msra.mxu0 %v1706
        %1768 = vmatpush.msra.mxu0 %v1704
        %1769 = vmatpush.msra.mxu0 %v1702
        %1770 = vmatpush.msra.mxu0 %v1700
        %1771 = vmatpush.msra.mxu0 %v1698
        %1772 = vmatpush.msra.mxu0 %v1696
        %1773 = vmatpush.msra.mxu0 %v1694
        %1774 = vmatpush.msra.mxu0 %v1692
        %1775 = vmatpush.msra.mxu0 %v1690
        %1776 = vmatpush.msra.mxu0 %v1688
        %1777 = vmatpush.msra.mxu0 %v1686
        %1778 = vmatpush.msra.mxu0 %v1684
        %1779 = vmatpush.msra.mxu0 %v1682
        %1780 = vmatpush.msra.mxu0 %v1680
        %1781 = vmatpush.msra.mxu0 %v1678
        %1782 = vmatpush.msra.mxu0 %v1676
        %1783 = vmatmul.f32.gmra.mxu0 %v853
        %v1784 = vpop.f32.mrf.mxu0
        %v1785 = vadd.f32 %v1765, %v1784
        %1786 = vdwg.mxu0
        %s1787 = scalar_lea.vmem %s6, 16
        %v1788 = vld [vmem:[%s1787] sm:$0xf]
        %v1790 = vsel %vm1146, %v1788, 0
        %v1793 = vsel %vm1150, %v1745, 0
        %v1796 = vsel %vm1150, %v1785, 0
        %1798 = vmatpush.msra.mxu0 0.0
        %1799 = vmatpush.msra.mxu0 0.0
        %1800 = vmatpush.msra.mxu0 0.0
        %1801 = vmatpush.msra.mxu0 0.0
        %1802 = vmatpush.msra.mxu0 0.0
        %1803 = vmatpush.msra.mxu0 0.0
        %1804 = vmatpush.msra.mxu0 0.0
        %1805 = vmatpush.msra.mxu0 0.0
        %1806 = vmatpush.msra.mxu0 0.0
        %1807 = vmatpush.msra.mxu0 0.0
        %1808 = vmatpush.msra.mxu0 0.0
        %1809 = vmatpush.msra.mxu0 0.0
        %1810 = vmatpush.msra.mxu0 0.0
        %1811 = vmatpush.msra.mxu0 0.0
        %1812 = vmatpush.msra.mxu0 0.0
        %1813 = vmatpush.msra.mxu0 %v1793
        %1814 = vmatmul.f32.gmra.mxu0 %v1790
        %v1815 = vpop.f32.mrf.mxu0
        %v1816 = vadd.f32 0.0, %v1815
        %1817 = vdwg.mxu0
        %1818 = vmatpush.msra.mxu0 0.0
        %1819 = vmatpush.msra.mxu0 0.0
        %1820 = vmatpush.msra.mxu0 0.0
        %1821 = vmatpush.msra.mxu0 0.0
        %1822 = vmatpush.msra.mxu0 0.0
        %1823 = vmatpush.msra.mxu0 0.0
        %1824 = vmatpush.msra.mxu0 0.0
        %1825 = vmatpush.msra.mxu0 0.0
        %1826 = vmatpush.msra.mxu0 0.0
        %1827 = vmatpush.msra.mxu0 0.0
        %1828 = vmatpush.msra.mxu0 0.0
        %1829 = vmatpush.msra.mxu0 0.0
        %1830 = vmatpush.msra.mxu0 0.0
        %1831 = vmatpush.msra.mxu0 0.0
        %1832 = vmatpush.msra.mxu0 0.0
        %1833 = vmatpush.msra.mxu0 %v1796
        %1834 = vmatmul.f32.gmra.mxu0 %v1790
        %v1835 = vpop.f32.mrf.mxu0
        %v1836 = vadd.f32 0.0, %v1835
        %1837 = vdwg.mxu0
        %v1838 = vadd.f32 %v1640, %v1816
        %v1839 = vadd.f32 %v1641, %v1836
        %s1840 = scalar_lea.vmem [#allocation4], 2560
        %v1841 = vld [vmem:[%s1840] sm:$0xff]
        %v1842 = vld [vmem:[%s1840 + $0x8] sm:$0xff]
        %v1843 = vld [vmem:[%s1840 + $0x10] sm:$0xff]
        %v1844 = vld [vmem:[%s1840 + $0x18] sm:$0xff]
        %v1845 = vld [vmem:[%s1840 + $0x20] sm:$0xff]
        %v1846 = vld [vmem:[%s1840 + $0x28] sm:$0xff]
        %v1847 = vld [vmem:[%s1840 + $0x30] sm:$0xff]
        %v1848 = vld [vmem:[%s1840 + $0x38] sm:$0xff]
        %v1849 = vld [vmem:[%s1840 + $0x40] sm:$0xff]
        %v1850 = vld [vmem:[%s1840 + $0x48] sm:$0xff]
        %v1851 = vld [vmem:[%s1840 + $0x50] sm:$0xff]
        %v1852 = vld [vmem:[%s1840 + $0x58] sm:$0xff]
        %v1853 = vld [vmem:[%s1840 + $0x60] sm:$0xff]
        %v1854 = vld [vmem:[%s1840 + $0x68] sm:$0xff]
        %v1855 = vld [vmem:[%s1840 + $0x70] sm:$0xff]
        %v1856 = vld [vmem:[%s1840 + $0x78] sm:$0xff]
        %v1857 = vld [vmem:[%s1840 + $0x80] sm:$0xff]
        %v1858 = vld [vmem:[%s1840 + $0x88] sm:$0xff]
        %v1859 = vld [vmem:[%s1840 + $0x90] sm:$0xff]
        %v1860 = vld [vmem:[%s1840 + $0x98] sm:$0xff]
        %v1861 = vld [vmem:[%s1840 + $0xa0] sm:$0xff]
        %v1862 = vld [vmem:[%s1840 + $0xa8] sm:$0xff]
        %v1863 = vld [vmem:[%s1840 + $0xb0] sm:$0xff]
        %v1864 = vld [vmem:[%s1840 + $0xb8] sm:$0xff]
        %v1865 = vld [vmem:[%s1840 + $0xc0] sm:$0xff]
        %v1866 = vld [vmem:[%s1840 + $0xc8] sm:$0xff]
        %v1867 = vld [vmem:[%s1840 + $0xd0] sm:$0xff]
        %v1868 = vld [vmem:[%s1840 + $0xd8] sm:$0xff]
        %v1869 = vld [vmem:[%s1840 + $0xe0] sm:$0xff]
        %v1870 = vld [vmem:[%s1840 + $0xe8] sm:$0xff]
        %v1871 = vld [vmem:[%s1840 + $0xf0] sm:$0xff]
        %v1872 = vld [vmem:[%s1840 + $0xf8] sm:$0xff]
        %v1873 = vld [vmem:[%s1840 + $0x100] sm:$0xff]
        %v1874 = vld [vmem:[%s1840 + $0x108] sm:$0xff]
        %v1875 = vld [vmem:[%s1840 + $0x110] sm:$0xff]
        %v1876 = vld [vmem:[%s1840 + $0x118] sm:$0xff]
        %v1877 = vld [vmem:[%s1840 + $0x120] sm:$0xff]
        %v1878 = vld [vmem:[%s1840 + $0x128] sm:$0xff]
        %v1879 = vld [vmem:[%s1840 + $0x130] sm:$0xff]
        %v1880 = vld [vmem:[%s1840 + $0x138] sm:$0xff]
        %v1881 = vld [vmem:[%s1840 + $0x140] sm:$0xff]
        %v1882 = vld [vmem:[%s1840 + $0x148] sm:$0xff]
        %v1883 = vld [vmem:[%s1840 + $0x150] sm:$0xff]
        %v1884 = vld [vmem:[%s1840 + $0x158] sm:$0xff]
        %v1885 = vld [vmem:[%s1840 + $0x160] sm:$0xff]
        %v1886 = vld [vmem:[%s1840 + $0x168] sm:$0xff]
        %v1887 = vld [vmem:[%s1840 + $0x170] sm:$0xff]
        %v1888 = vld [vmem:[%s1840 + $0x178] sm:$0xff]
        %v1889 = vld [vmem:[%s1840 + $0x180] sm:$0xff]
        %v1890 = vld [vmem:[%s1840 + $0x188] sm:$0xff]
        %v1891 = vld [vmem:[%s1840 + $0x190] sm:$0xff]
        %v1892 = vld [vmem:[%s1840 + $0x198] sm:$0xff]
        %v1893 = vld [vmem:[%s1840 + $0x1a0] sm:$0xff]
        %v1894 = vld [vmem:[%s1840 + $0x1a8] sm:$0xff]
        %v1895 = vld [vmem:[%s1840 + $0x1b0] sm:$0xff]
        %v1896 = vld [vmem:[%s1840 + $0x1b8] sm:$0xff]
        %v1897 = vld [vmem:[%s1840 + $0x1c0] sm:$0xff]
        %v1898 = vld [vmem:[%s1840 + $0x1c8] sm:$0xff]
        %v1899 = vld [vmem:[%s1840 + $0x1d0] sm:$0xff]
        %v1900 = vld [vmem:[%s1840 + $0x1d8] sm:$0xff]
        %v1901 = vld [vmem:[%s1840 + $0x1e0] sm:$0xff]
        %v1902 = vld [vmem:[%s1840 + $0x1e8] sm:$0xff]
        %v1903 = vld [vmem:[%s1840 + $0x1f0] sm:$0xff]
        %v1904 = vld [vmem:[%s1840 + $0x1f8] sm:$0xff]
        %1905 = vmatpush.msra.mxu0 %v1871
        %1906 = vmatpush.msra.mxu0 %v1869
        %1907 = vmatpush.msra.mxu0 %v1867
        %1908 = vmatpush.msra.mxu0 %v1865
        %1909 = vmatpush.msra.mxu0 %v1863
        %1910 = vmatpush.msra.mxu0 %v1861
        %1911 = vmatpush.msra.mxu0 %v1859
        %1912 = vmatpush.msra.mxu0 %v1857
        %1913 = vmatpush.msra.mxu0 %v1855
        %1914 = vmatpush.msra.mxu0 %v1853
        %1915 = vmatpush.msra.mxu0 %v1851
        %1916 = vmatpush.msra.mxu0 %v1849
        %1917 = vmatpush.msra.mxu0 %v1847
        %1918 = vmatpush.msra.mxu0 %v1845
        %1919 = vmatpush.msra.mxu0 %v1843
        %1920 = vmatpush.msra.mxu0 %v1841
        %1921 = vmatmul.f32.gmra.mxu0 %v852
        %v1922 = vpop.f32.mrf.mxu0
        %v1923 = vadd.f32 0.0, %v1922
        %1924 = vdwg.mxu0
        %1925 = vmatpush.msra.mxu0 %v1903
        %1926 = vmatpush.msra.mxu0 %v1901
        %1927 = vmatpush.msra.mxu0 %v1899
        %1928 = vmatpush.msra.mxu0 %v1897
        %1929 = vmatpush.msra.mxu0 %v1895
        %1930 = vmatpush.msra.mxu0 %v1893
        %1931 = vmatpush.msra.mxu0 %v1891
        %1932 = vmatpush.msra.mxu0 %v1889
        %1933 = vmatpush.msra.mxu0 %v1887
        %1934 = vmatpush.msra.mxu0 %v1885
        %1935 = vmatpush.msra.mxu0 %v1883
        %1936 = vmatpush.msra.mxu0 %v1881
        %1937 = vmatpush.msra.mxu0 %v1879
        %1938 = vmatpush.msra.mxu0 %v1877
        %1939 = vmatpush.msra.mxu0 %v1875
        %1940 = vmatpush.msra.mxu0 %v1873
        %1941 = vmatmul.f32.gmra.mxu0 %v853
        %v1942 = vpop.f32.mrf.mxu0
        %v1943 = vadd.f32 %v1923, %v1942
        %1944 = vdwg.mxu0
        %1945 = vmatpush.msra.mxu0 %v1872
        %1946 = vmatpush.msra.mxu0 %v1870
        %1947 = vmatpush.msra.mxu0 %v1868
        %1948 = vmatpush.msra.mxu0 %v1866
        %1949 = vmatpush.msra.mxu0 %v1864
        %1950 = vmatpush.msra.mxu0 %v1862
        %1951 = vmatpush.msra.mxu0 %v1860
        %1952 = vmatpush.msra.mxu0 %v1858
        %1953 = vmatpush.msra.mxu0 %v1856
        %1954 = vmatpush.msra.mxu0 %v1854
        %1955 = vmatpush.msra.mxu0 %v1852
        %1956 = vmatpush.msra.mxu0 %v1850
        %1957 = vmatpush.msra.mxu0 %v1848
        %1958 = vmatpush.msra.mxu0 %v1846
        %1959 = vmatpush.msra.mxu0 %v1844
        %1960 = vmatpush.msra.mxu0 %v1842
        %1961 = vmatmul.f32.gmra.mxu0 %v852
        %v1962 = vpop.f32.mrf.mxu0
        %v1963 = vadd.f32 0.0, %v1962
        %1964 = vdwg.mxu0
        %1965 = vmatpush.msra.mxu0 %v1904
        %1966 = vmatpush.msra.mxu0 %v1902
        %1967 = vmatpush.msra.mxu0 %v1900
        %1968 = vmatpush.msra.mxu0 %v1898
        %1969 = vmatpush.msra.mxu0 %v1896
        %1970 = vmatpush.msra.mxu0 %v1894
        %1971 = vmatpush.msra.mxu0 %v1892
        %1972 = vmatpush.msra.mxu0 %v1890
        %1973 = vmatpush.msra.mxu0 %v1888
        %1974 = vmatpush.msra.mxu0 %v1886
        %1975 = vmatpush.msra.mxu0 %v1884
        %1976 = vmatpush.msra.mxu0 %v1882
        %1977 = vmatpush.msra.mxu0 %v1880
        %1978 = vmatpush.msra.mxu0 %v1878
        %1979 = vmatpush.msra.mxu0 %v1876
        %1980 = vmatpush.msra.mxu0 %v1874
        %1981 = vmatmul.f32.gmra.mxu0 %v853
        %v1982 = vpop.f32.mrf.mxu0
        %v1983 = vadd.f32 %v1963, %v1982
        %1984 = vdwg.mxu0
        %s1985 = scalar_lea.vmem %s6, 20
        %v1986 = vld [vmem:[%s1985] sm:$0xf]
        %v1988 = vsel %vm1146, %v1986, 0
        %v1991 = vsel %vm1150, %v1943, 0
        %v1994 = vsel %vm1150, %v1983, 0
        %1996 = vmatpush.msra.mxu0 0.0
        %1997 = vmatpush.msra.mxu0 0.0
        %1998 = vmatpush.msra.mxu0 0.0
        %1999 = vmatpush.msra.mxu0 0.0
        %2000 = vmatpush.msra.mxu0 0.0
        %2001 = vmatpush.msra.mxu0 0.0
        %2002 = vmatpush.msra.mxu0 0.0
        %2003 = vmatpush.msra.mxu0 0.0
        %2004 = vmatpush.msra.mxu0 0.0
        %2005 = vmatpush.msra.mxu0 0.0
        %2006 = vmatpush.msra.mxu0 0.0
        %2007 = vmatpush.msra.mxu0 0.0
        %2008 = vmatpush.msra.mxu0 0.0
        %2009 = vmatpush.msra.mxu0 0.0
        %2010 = vmatpush.msra.mxu0 0.0
        %2011 = vmatpush.msra.mxu0 %v1991
        %2012 = vmatmul.f32.gmra.mxu0 %v1988
        %v2013 = vpop.f32.mrf.mxu0
        %v2014 = vadd.f32 0.0, %v2013
        %2015 = vdwg.mxu0
        %2016 = vmatpush.msra.mxu0 0.0
        %2017 = vmatpush.msra.mxu0 0.0
        %2018 = vmatpush.msra.mxu0 0.0
        %2019 = vmatpush.msra.mxu0 0.0
        %2020 = vmatpush.msra.mxu0 0.0
        %2021 = vmatpush.msra.mxu0 0.0
        %2022 = vmatpush.msra.mxu0 0.0
        %2023 = vmatpush.msra.mxu0 0.0
        %2024 = vmatpush.msra.mxu0 0.0
        %2025 = vmatpush.msra.mxu0 0.0
        %2026 = vmatpush.msra.mxu0 0.0
        %2027 = vmatpush.msra.mxu0 0.0
        %2028 = vmatpush.msra.mxu0 0.0
        %2029 = vmatpush.msra.mxu0 0.0
        %2030 = vmatpush.msra.mxu0 0.0
        %2031 = vmatpush.msra.mxu0 %v1994
        %2032 = vmatmul.f32.gmra.mxu0 %v1988
        %v2033 = vpop.f32.mrf.mxu0
        %v2034 = vadd.f32 0.0, %v2033
        %2035 = vdwg.mxu0
        %v2036 = vadd.f32 %v1838, %v2014
        %v2037 = vadd.f32 %v1839, %v2034
        %s2038 = scalar_lea.vmem [#allocation4], 3072
        %v2039 = vld [vmem:[%s2038] sm:$0xff]
        %v2040 = vld [vmem:[%s2038 + $0x8] sm:$0xff]
        %v2041 = vld [vmem:[%s2038 + $0x10] sm:$0xff]
        %v2042 = vld [vmem:[%s2038 + $0x18] sm:$0xff]
        %v2043 = vld [vmem:[%s2038 + $0x20] sm:$0xff]
        %v2044 = vld [vmem:[%s2038 + $0x28] sm:$0xff]
        %v2045 = vld [vmem:[%s2038 + $0x30] sm:$0xff]
        %v2046 = vld [vmem:[%s2038 + $0x38] sm:$0xff]
        %v2047 = vld [vmem:[%s2038 + $0x40] sm:$0xff]
        %v2048 = vld [vmem:[%s2038 + $0x48] sm:$0xff]
        %v2049 = vld [vmem:[%s2038 + $0x50] sm:$0xff]
        %v2050 = vld [vmem:[%s2038 + $0x58] sm:$0xff]
        %v2051 = vld [vmem:[%s2038 + $0x60] sm:$0xff]
        %v2052 = vld [vmem:[%s2038 + $0x68] sm:$0xff]
        %v2053 = vld [vmem:[%s2038 + $0x70] sm:$0xff]
        %v2054 = vld [vmem:[%s2038 + $0x78] sm:$0xff]
        %v2055 = vld [vmem:[%s2038 + $0x80] sm:$0xff]
        %v2056 = vld [vmem:[%s2038 + $0x88] sm:$0xff]
        %v2057 = vld [vmem:[%s2038 + $0x90] sm:$0xff]
        %v2058 = vld [vmem:[%s2038 + $0x98] sm:$0xff]
        %v2059 = vld [vmem:[%s2038 + $0xa0] sm:$0xff]
        %v2060 = vld [vmem:[%s2038 + $0xa8] sm:$0xff]
        %v2061 = vld [vmem:[%s2038 + $0xb0] sm:$0xff]
        %v2062 = vld [vmem:[%s2038 + $0xb8] sm:$0xff]
        %v2063 = vld [vmem:[%s2038 + $0xc0] sm:$0xff]
        %v2064 = vld [vmem:[%s2038 + $0xc8] sm:$0xff]
        %v2065 = vld [vmem:[%s2038 + $0xd0] sm:$0xff]
        %v2066 = vld [vmem:[%s2038 + $0xd8] sm:$0xff]
        %v2067 = vld [vmem:[%s2038 + $0xe0] sm:$0xff]
        %v2068 = vld [vmem:[%s2038 + $0xe8] sm:$0xff]
        %v2069 = vld [vmem:[%s2038 + $0xf0] sm:$0xff]
        %v2070 = vld [vmem:[%s2038 + $0xf8] sm:$0xff]
        %v2071 = vld [vmem:[%s2038 + $0x100] sm:$0xff]
        %v2072 = vld [vmem:[%s2038 + $0x108] sm:$0xff]
        %v2073 = vld [vmem:[%s2038 + $0x110] sm:$0xff]
        %v2074 = vld [vmem:[%s2038 + $0x118] sm:$0xff]
        %v2075 = vld [vmem:[%s2038 + $0x120] sm:$0xff]
        %v2076 = vld [vmem:[%s2038 + $0x128] sm:$0xff]
        %v2077 = vld [vmem:[%s2038 + $0x130] sm:$0xff]
        %v2078 = vld [vmem:[%s2038 + $0x138] sm:$0xff]
        %v2079 = vld [vmem:[%s2038 + $0x140] sm:$0xff]
        %v2080 = vld [vmem:[%s2038 + $0x148] sm:$0xff]
        %v2081 = vld [vmem:[%s2038 + $0x150] sm:$0xff]
        %v2082 = vld [vmem:[%s2038 + $0x158] sm:$0xff]
        %v2083 = vld [vmem:[%s2038 + $0x160] sm:$0xff]
        %v2084 = vld [vmem:[%s2038 + $0x168] sm:$0xff]
        %v2085 = vld [vmem:[%s2038 + $0x170] sm:$0xff]
        %v2086 = vld [vmem:[%s2038 + $0x178] sm:$0xff]
        %v2087 = vld [vmem:[%s2038 + $0x180] sm:$0xff]
        %v2088 = vld [vmem:[%s2038 + $0x188] sm:$0xff]
        %v2089 = vld [vmem:[%s2038 + $0x190] sm:$0xff]
        %v2090 = vld [vmem:[%s2038 + $0x198] sm:$0xff]
        %v2091 = vld [vmem:[%s2038 + $0x1a0] sm:$0xff]
        %v2092 = vld [vmem:[%s2038 + $0x1a8] sm:$0xff]
        %v2093 = vld [vmem:[%s2038 + $0x1b0] sm:$0xff]
        %v2094 = vld [vmem:[%s2038 + $0x1b8] sm:$0xff]
        %v2095 = vld [vmem:[%s2038 + $0x1c0] sm:$0xff]
        %v2096 = vld [vmem:[%s2038 + $0x1c8] sm:$0xff]
        %v2097 = vld [vmem:[%s2038 + $0x1d0] sm:$0xff]
        %v2098 = vld [vmem:[%s2038 + $0x1d8] sm:$0xff]
        %v2099 = vld [vmem:[%s2038 + $0x1e0] sm:$0xff]
        %v2100 = vld [vmem:[%s2038 + $0x1e8] sm:$0xff]
        %v2101 = vld [vmem:[%s2038 + $0x1f0] sm:$0xff]
        %v2102 = vld [vmem:[%s2038 + $0x1f8] sm:$0xff]
        %2103 = vmatpush.msra.mxu0 %v2069
        %2104 = vmatpush.msra.mxu0 %v2067
        %2105 = vmatpush.msra.mxu0 %v2065
        %2106 = vmatpush.msra.mxu0 %v2063
        %2107 = vmatpush.msra.mxu0 %v2061
        %2108 = vmatpush.msra.mxu0 %v2059
        %2109 = vmatpush.msra.mxu0 %v2057
        %2110 = vmatpush.msra.mxu0 %v2055
        %2111 = vmatpush.msra.mxu0 %v2053
        %2112 = vmatpush.msra.mxu0 %v2051
        %2113 = vmatpush.msra.mxu0 %v2049
        %2114 = vmatpush.msra.mxu0 %v2047
        %2115 = vmatpush.msra.mxu0 %v2045
        %2116 = vmatpush.msra.mxu0 %v2043
        %2117 = vmatpush.msra.mxu0 %v2041
        %2118 = vmatpush.msra.mxu0 %v2039
        %2119 = vmatmul.f32.gmra.mxu0 %v852
        %v2120 = vpop.f32.mrf.mxu0
        %v2121 = vadd.f32 0.0, %v2120
        %2122 = vdwg.mxu0
        %2123 = vmatpush.msra.mxu0 %v2101
        %2124 = vmatpush.msra.mxu0 %v2099
        %2125 = vmatpush.msra.mxu0 %v2097
        %2126 = vmatpush.msra.mxu0 %v2095
        %2127 = vmatpush.msra.mxu0 %v2093
        %2128 = vmatpush.msra.mxu0 %v2091
        %2129 = vmatpush.msra.mxu0 %v2089
        %2130 = vmatpush.msra.mxu0 %v2087
        %2131 = vmatpush.msra.mxu0 %v2085
        %2132 = vmatpush.msra.mxu0 %v2083
        %2133 = vmatpush.msra.mxu0 %v2081
        %2134 = vmatpush.msra.mxu0 %v2079
        %2135 = vmatpush.msra.mxu0 %v2077
        %2136 = vmatpush.msra.mxu0 %v2075
        %2137 = vmatpush.msra.mxu0 %v2073
        %2138 = vmatpush.msra.mxu0 %v2071
        %2139 = vmatmul.f32.gmra.mxu0 %v853
        %v2140 = vpop.f32.mrf.mxu0
        %v2141 = vadd.f32 %v2121, %v2140
        %2142 = vdwg.mxu0
        %2143 = vmatpush.msra.mxu0 %v2070
        %2144 = vmatpush.msra.mxu0 %v2068
        %2145 = vmatpush.msra.mxu0 %v2066
        %2146 = vmatpush.msra.mxu0 %v2064
        %2147 = vmatpush.msra.mxu0 %v2062
        %2148 = vmatpush.msra.mxu0 %v2060
        %2149 = vmatpush.msra.mxu0 %v2058
        %2150 = vmatpush.msra.mxu0 %v2056
        %2151 = vmatpush.msra.mxu0 %v2054
        %2152 = vmatpush.msra.mxu0 %v2052
        %2153 = vmatpush.msra.mxu0 %v2050
        %2154 = vmatpush.msra.mxu0 %v2048
        %2155 = vmatpush.msra.mxu0 %v2046
        %2156 = vmatpush.msra.mxu0 %v2044
        %2157 = vmatpush.msra.mxu0 %v2042
        %2158 = vmatpush.msra.mxu0 %v2040
        %2159 = vmatmul.f32.gmra.mxu0 %v852
        %v2160 = vpop.f32.mrf.mxu0
        %v2161 = vadd.f32 0.0, %v2160
        %2162 = vdwg.mxu0
        %2163 = vmatpush.msra.mxu0 %v2102
        %2164 = vmatpush.msra.mxu0 %v2100
        %2165 = vmatpush.msra.mxu0 %v2098
        %2166 = vmatpush.msra.mxu0 %v2096
        %2167 = vmatpush.msra.mxu0 %v2094
        %2168 = vmatpush.msra.mxu0 %v2092
        %2169 = vmatpush.msra.mxu0 %v2090
        %2170 = vmatpush.msra.mxu0 %v2088
        %2171 = vmatpush.msra.mxu0 %v2086
        %2172 = vmatpush.msra.mxu0 %v2084
        %2173 = vmatpush.msra.mxu0 %v2082
        %2174 = vmatpush.msra.mxu0 %v2080
        %2175 = vmatpush.msra.mxu0 %v2078
        %2176 = vmatpush.msra.mxu0 %v2076
        %2177 = vmatpush.msra.mxu0 %v2074
        %2178 = vmatpush.msra.mxu0 %v2072
        %2179 = vmatmul.f32.gmra.mxu0 %v853
        %v2180 = vpop.f32.mrf.mxu0
        %v2181 = vadd.f32 %v2161, %v2180
        %2182 = vdwg.mxu0
        %s2183 = scalar_lea.vmem %s6, 24
        %v2184 = vld [vmem:[%s2183] sm:$0xf]
        %v2186 = vsel %vm1146, %v2184, 0
        %v2189 = vsel %vm1150, %v2141, 0
        %v2192 = vsel %vm1150, %v2181, 0
        %2194 = vmatpush.msra.mxu0 0.0
        %2195 = vmatpush.msra.mxu0 0.0
        %2196 = vmatpush.msra.mxu0 0.0
        %2197 = vmatpush.msra.mxu0 0.0
        %2198 = vmatpush.msra.mxu0 0.0
        %2199 = vmatpush.msra.mxu0 0.0
        %2200 = vmatpush.msra.mxu0 0.0
        %2201 = vmatpush.msra.mxu0 0.0
        %2202 = vmatpush.msra.mxu0 0.0
        %2203 = vmatpush.msra.mxu0 0.0
        %2204 = vmatpush.msra.mxu0 0.0
        %2205 = vmatpush.msra.mxu0 0.0
        %2206 = vmatpush.msra.mxu0 0.0
        %2207 = vmatpush.msra.mxu0 0.0
        %2208 = vmatpush.msra.mxu0 0.0
        %2209 = vmatpush.msra.mxu0 %v2189
        %2210 = vmatmul.f32.gmra.mxu0 %v2186
        %v2211 = vpop.f32.mrf.mxu0
        %v2212 = vadd.f32 0.0, %v2211
        %2213 = vdwg.mxu0
        %2214 = vmatpush.msra.mxu0 0.0
        %2215 = vmatpush.msra.mxu0 0.0
        %2216 = vmatpush.msra.mxu0 0.0
        %2217 = vmatpush.msra.mxu0 0.0
        %2218 = vmatpush.msra.mxu0 0.0
        %2219 = vmatpush.msra.mxu0 0.0
        %2220 = vmatpush.msra.mxu0 0.0
        %2221 = vmatpush.msra.mxu0 0.0
        %2222 = vmatpush.msra.mxu0 0.0
        %2223 = vmatpush.msra.mxu0 0.0
        %2224 = vmatpush.msra.mxu0 0.0
        %2225 = vmatpush.msra.mxu0 0.0
        %2226 = vmatpush.msra.mxu0 0.0
        %2227 = vmatpush.msra.mxu0 0.0
        %2228 = vmatpush.msra.mxu0 0.0
        %2229 = vmatpush.msra.mxu0 %v2192
        %2230 = vmatmul.f32.gmra.mxu0 %v2186
        %v2231 = vpop.f32.mrf.mxu0
        %v2232 = vadd.f32 0.0, %v2231
        %2233 = vdwg.mxu0
        %v2234 = vadd.f32 %v2036, %v2212
        %v2235 = vadd.f32 %v2037, %v2232
        %s2236 = scalar_lea.vmem [#allocation4], 3584
        %v2237 = vld [vmem:[%s2236] sm:$0xff]
        %v2238 = vld [vmem:[%s2236 + $0x8] sm:$0xff]
        %v2239 = vld [vmem:[%s2236 + $0x10] sm:$0xff]
        %v2240 = vld [vmem:[%s2236 + $0x18] sm:$0xff]
        %v2241 = vld [vmem:[%s2236 + $0x20] sm:$0xff]
        %v2242 = vld [vmem:[%s2236 + $0x28] sm:$0xff]
        %v2243 = vld [vmem:[%s2236 + $0x30] sm:$0xff]
        %v2244 = vld [vmem:[%s2236 + $0x38] sm:$0xff]
        %v2245 = vld [vmem:[%s2236 + $0x40] sm:$0xff]
        %v2246 = vld [vmem:[%s2236 + $0x48] sm:$0xff]
        %v2247 = vld [vmem:[%s2236 + $0x50] sm:$0xff]
        %v2248 = vld [vmem:[%s2236 + $0x58] sm:$0xff]
        %v2249 = vld [vmem:[%s2236 + $0x60] sm:$0xff]
        %v2250 = vld [vmem:[%s2236 + $0x68] sm:$0xff]
        %v2251 = vld [vmem:[%s2236 + $0x70] sm:$0xff]
        %v2252 = vld [vmem:[%s2236 + $0x78] sm:$0xff]
        %v2253 = vld [vmem:[%s2236 + $0x80] sm:$0xff]
        %v2254 = vld [vmem:[%s2236 + $0x88] sm:$0xff]
        %v2255 = vld [vmem:[%s2236 + $0x90] sm:$0xff]
        %v2256 = vld [vmem:[%s2236 + $0x98] sm:$0xff]
        %v2257 = vld [vmem:[%s2236 + $0xa0] sm:$0xff]
        %v2258 = vld [vmem:[%s2236 + $0xa8] sm:$0xff]
        %v2259 = vld [vmem:[%s2236 + $0xb0] sm:$0xff]
        %v2260 = vld [vmem:[%s2236 + $0xb8] sm:$0xff]
        %v2261 = vld [vmem:[%s2236 + $0xc0] sm:$0xff]
        %v2262 = vld [vmem:[%s2236 + $0xc8] sm:$0xff]
        %v2263 = vld [vmem:[%s2236 + $0xd0] sm:$0xff]
        %v2264 = vld [vmem:[%s2236 + $0xd8] sm:$0xff]
        %v2265 = vld [vmem:[%s2236 + $0xe0] sm:$0xff]
        %v2266 = vld [vmem:[%s2236 + $0xe8] sm:$0xff]
        %v2267 = vld [vmem:[%s2236 + $0xf0] sm:$0xff]
        %v2268 = vld [vmem:[%s2236 + $0xf8] sm:$0xff]
        %v2269 = vld [vmem:[%s2236 + $0x100] sm:$0xff]
        %v2270 = vld [vmem:[%s2236 + $0x108] sm:$0xff]
        %v2271 = vld [vmem:[%s2236 + $0x110] sm:$0xff]
        %v2272 = vld [vmem:[%s2236 + $0x118] sm:$0xff]
        %v2273 = vld [vmem:[%s2236 + $0x120] sm:$0xff]
        %v2274 = vld [vmem:[%s2236 + $0x128] sm:$0xff]
        %v2275 = vld [vmem:[%s2236 + $0x130] sm:$0xff]
        %v2276 = vld [vmem:[%s2236 + $0x138] sm:$0xff]
        %v2277 = vld [vmem:[%s2236 + $0x140] sm:$0xff]
        %v2278 = vld [vmem:[%s2236 + $0x148] sm:$0xff]
        %v2279 = vld [vmem:[%s2236 + $0x150] sm:$0xff]
        %v2280 = vld [vmem:[%s2236 + $0x158] sm:$0xff]
        %v2281 = vld [vmem:[%s2236 + $0x160] sm:$0xff]
        %v2282 = vld [vmem:[%s2236 + $0x168] sm:$0xff]
        %v2283 = vld [vmem:[%s2236 + $0x170] sm:$0xff]
        %v2284 = vld [vmem:[%s2236 + $0x178] sm:$0xff]
        %v2285 = vld [vmem:[%s2236 + $0x180] sm:$0xff]
        %v2286 = vld [vmem:[%s2236 + $0x188] sm:$0xff]
        %v2287 = vld [vmem:[%s2236 + $0x190] sm:$0xff]
        %v2288 = vld [vmem:[%s2236 + $0x198] sm:$0xff]
        %v2289 = vld [vmem:[%s2236 + $0x1a0] sm:$0xff]
        %v2290 = vld [vmem:[%s2236 + $0x1a8] sm:$0xff]
        %v2291 = vld [vmem:[%s2236 + $0x1b0] sm:$0xff]
        %v2292 = vld [vmem:[%s2236 + $0x1b8] sm:$0xff]
        %v2293 = vld [vmem:[%s2236 + $0x1c0] sm:$0xff]
        %v2294 = vld [vmem:[%s2236 + $0x1c8] sm:$0xff]
        %v2295 = vld [vmem:[%s2236 + $0x1d0] sm:$0xff]
        %v2296 = vld [vmem:[%s2236 + $0x1d8] sm:$0xff]
        %v2297 = vld [vmem:[%s2236 + $0x1e0] sm:$0xff]
        %v2298 = vld [vmem:[%s2236 + $0x1e8] sm:$0xff]
        %v2299 = vld [vmem:[%s2236 + $0x1f0] sm:$0xff]
        %v2300 = vld [vmem:[%s2236 + $0x1f8] sm:$0xff]
        %2301 = vmatpush.msra.mxu0 %v2267
        %2302 = vmatpush.msra.mxu0 %v2265
        %2303 = vmatpush.msra.mxu0 %v2263
        %2304 = vmatpush.msra.mxu0 %v2261
        %2305 = vmatpush.msra.mxu0 %v2259
        %2306 = vmatpush.msra.mxu0 %v2257
        %2307 = vmatpush.msra.mxu0 %v2255
        %2308 = vmatpush.msra.mxu0 %v2253
        %2309 = vmatpush.msra.mxu0 %v2251
        %2310 = vmatpush.msra.mxu0 %v2249
        %2311 = vmatpush.msra.mxu0 %v2247
        %2312 = vmatpush.msra.mxu0 %v2245
        %2313 = vmatpush.msra.mxu0 %v2243
        %2314 = vmatpush.msra.mxu0 %v2241
        %2315 = vmatpush.msra.mxu0 %v2239
        %2316 = vmatpush.msra.mxu0 %v2237
        %2317 = vmatmul.f32.gmra.mxu0 %v852
        %v2318 = vpop.f32.mrf.mxu0
        %v2319 = vadd.f32 0.0, %v2318
        %2320 = vdwg.mxu0
        %2321 = vmatpush.msra.mxu0 %v2299
        %2322 = vmatpush.msra.mxu0 %v2297
        %2323 = vmatpush.msra.mxu0 %v2295
        %2324 = vmatpush.msra.mxu0 %v2293
        %2325 = vmatpush.msra.mxu0 %v2291
        %2326 = vmatpush.msra.mxu0 %v2289
        %2327 = vmatpush.msra.mxu0 %v2287
        %2328 = vmatpush.msra.mxu0 %v2285
        %2329 = vmatpush.msra.mxu0 %v2283
        %2330 = vmatpush.msra.mxu0 %v2281
        %2331 = vmatpush.msra.mxu0 %v2279
        %2332 = vmatpush.msra.mxu0 %v2277
        %2333 = vmatpush.msra.mxu0 %v2275
        %2334 = vmatpush.msra.mxu0 %v2273
        %2335 = vmatpush.msra.mxu0 %v2271
        %2336 = vmatpush.msra.mxu0 %v2269
        %2337 = vmatmul.f32.gmra.mxu0 %v853
        %v2338 = vpop.f32.mrf.mxu0
        %v2339 = vadd.f32 %v2319, %v2338
        %2340 = vdwg.mxu0
        %2341 = vmatpush.msra.mxu0 %v2268
        %2342 = vmatpush.msra.mxu0 %v2266
        %2343 = vmatpush.msra.mxu0 %v2264
        %2344 = vmatpush.msra.mxu0 %v2262
        %2345 = vmatpush.msra.mxu0 %v2260
        %2346 = vmatpush.msra.mxu0 %v2258
        %2347 = vmatpush.msra.mxu0 %v2256
        %2348 = vmatpush.msra.mxu0 %v2254
        %2349 = vmatpush.msra.mxu0 %v2252
        %2350 = vmatpush.msra.mxu0 %v2250
        %2351 = vmatpush.msra.mxu0 %v2248
        %2352 = vmatpush.msra.mxu0 %v2246
        %2353 = vmatpush.msra.mxu0 %v2244
        %2354 = vmatpush.msra.mxu0 %v2242
        %2355 = vmatpush.msra.mxu0 %v2240
        %2356 = vmatpush.msra.mxu0 %v2238
        %2357 = vmatmul.f32.gmra.mxu0 %v852
        %v2358 = vpop.f32.mrf.mxu0
        %v2359 = vadd.f32 0.0, %v2358
        %2360 = vdwg.mxu0
        %2361 = vmatpush.msra.mxu0 %v2300
        %2362 = vmatpush.msra.mxu0 %v2298
        %2363 = vmatpush.msra.mxu0 %v2296
        %2364 = vmatpush.msra.mxu0 %v2294
        %2365 = vmatpush.msra.mxu0 %v2292
        %2366 = vmatpush.msra.mxu0 %v2290
        %2367 = vmatpush.msra.mxu0 %v2288
        %2368 = vmatpush.msra.mxu0 %v2286
        %2369 = vmatpush.msra.mxu0 %v2284
        %2370 = vmatpush.msra.mxu0 %v2282
        %2371 = vmatpush.msra.mxu0 %v2280
        %2372 = vmatpush.msra.mxu0 %v2278
        %2373 = vmatpush.msra.mxu0 %v2276
        %2374 = vmatpush.msra.mxu0 %v2274
        %2375 = vmatpush.msra.mxu0 %v2272
        %2376 = vmatpush.msra.mxu0 %v2270
        %2377 = vmatmul.f32.gmra.mxu0 %v853
        %v2378 = vpop.f32.mrf.mxu0
        %v2379 = vadd.f32 %v2359, %v2378
        %2380 = vdwg.mxu0
        %s2381 = scalar_lea.vmem %s6, 28
        %v2382 = vld [vmem:[%s2381] sm:$0xf]
        %v2384 = vsel %vm1146, %v2382, 0
        %v2387 = vsel %vm1150, %v2339, 0
        %v2390 = vsel %vm1150, %v2379, 0
        %2392 = vmatpush.msra.mxu0 0.0
        %2393 = vmatpush.msra.mxu0 0.0
        %2394 = vmatpush.msra.mxu0 0.0
        %2395 = vmatpush.msra.mxu0 0.0
        %2396 = vmatpush.msra.mxu0 0.0
        %2397 = vmatpush.msra.mxu0 0.0
        %2398 = vmatpush.msra.mxu0 0.0
        %2399 = vmatpush.msra.mxu0 0.0
        %2400 = vmatpush.msra.mxu0 0.0
        %2401 = vmatpush.msra.mxu0 0.0
        %2402 = vmatpush.msra.mxu0 0.0
        %2403 = vmatpush.msra.mxu0 0.0
        %2404 = vmatpush.msra.mxu0 0.0
        %2405 = vmatpush.msra.mxu0 0.0
        %2406 = vmatpush.msra.mxu0 0.0
        %2407 = vmatpush.msra.mxu0 %v2387
        %2408 = vmatmul.f32.gmra.mxu0 %v2384
        %v2409 = vpop.f32.mrf.mxu0
        %v2410 = vadd.f32 0.0, %v2409
        %2411 = vdwg.mxu0
        %2412 = vmatpush.msra.mxu0 0.0
        %2413 = vmatpush.msra.mxu0 0.0
        %2414 = vmatpush.msra.mxu0 0.0
        %2415 = vmatpush.msra.mxu0 0.0
        %2416 = vmatpush.msra.mxu0 0.0
        %2417 = vmatpush.msra.mxu0 0.0
        %2418 = vmatpush.msra.mxu0 0.0
        %2419 = vmatpush.msra.mxu0 0.0
        %2420 = vmatpush.msra.mxu0 0.0
        %2421 = vmatpush.msra.mxu0 0.0
        %2422 = vmatpush.msra.mxu0 0.0
        %2423 = vmatpush.msra.mxu0 0.0
        %2424 = vmatpush.msra.mxu0 0.0
        %2425 = vmatpush.msra.mxu0 0.0
        %2426 = vmatpush.msra.mxu0 0.0
        %2427 = vmatpush.msra.mxu0 %v2390
        %2428 = vmatmul.f32.gmra.mxu0 %v2384
        %v2429 = vpop.f32.mrf.mxu0
        %v2430 = vadd.f32 0.0, %v2429
        %2431 = vdwg.mxu0
        %v2432 = vadd.f32 %v2234, %v2410
        %v2433 = vadd.f32 %v2235, %v2430
        %s2434 = scalar_lea.vmem [#allocation4], 4096
        %v2435 = vld [vmem:[%s2434] sm:$0xff]
        %v2436 = vld [vmem:[%s2434 + $0x8] sm:$0xff]
        %v2437 = vld [vmem:[%s2434 + $0x10] sm:$0xff]
        %v2438 = vld [vmem:[%s2434 + $0x18] sm:$0xff]
        %v2439 = vld [vmem:[%s2434 + $0x20] sm:$0xff]
        %v2440 = vld [vmem:[%s2434 + $0x28] sm:$0xff]
        %v2441 = vld [vmem:[%s2434 + $0x30] sm:$0xff]
        %v2442 = vld [vmem:[%s2434 + $0x38] sm:$0xff]
        %v2443 = vld [vmem:[%s2434 + $0x40] sm:$0xff]
        %v2444 = vld [vmem:[%s2434 + $0x48] sm:$0xff]
        %v2445 = vld [vmem:[%s2434 + $0x50] sm:$0xff]
        %v2446 = vld [vmem:[%s2434 + $0x58] sm:$0xff]
        %v2447 = vld [vmem:[%s2434 + $0x60] sm:$0xff]
        %v2448 = vld [vmem:[%s2434 + $0x68] sm:$0xff]
        %v2449 = vld [vmem:[%s2434 + $0x70] sm:$0xff]
        %v2450 = vld [vmem:[%s2434 + $0x78] sm:$0xff]
        %v2451 = vld [vmem:[%s2434 + $0x80] sm:$0xff]
        %v2452 = vld [vmem:[%s2434 + $0x88] sm:$0xff]
        %v2453 = vld [vmem:[%s2434 + $0x90] sm:$0xff]
        %v2454 = vld [vmem:[%s2434 + $0x98] sm:$0xff]
        %v2455 = vld [vmem:[%s2434 + $0xa0] sm:$0xff]
        %v2456 = vld [vmem:[%s2434 + $0xa8] sm:$0xff]
        %v2457 = vld [vmem:[%s2434 + $0xb0] sm:$0xff]
        %v2458 = vld [vmem:[%s2434 + $0xb8] sm:$0xff]
        %v2459 = vld [vmem:[%s2434 + $0xc0] sm:$0xff]
        %v2460 = vld [vmem:[%s2434 + $0xc8] sm:$0xff]
        %v2461 = vld [vmem:[%s2434 + $0xd0] sm:$0xff]
        %v2462 = vld [vmem:[%s2434 + $0xd8] sm:$0xff]
        %v2463 = vld [vmem:[%s2434 + $0xe0] sm:$0xff]
        %v2464 = vld [vmem:[%s2434 + $0xe8] sm:$0xff]
        %v2465 = vld [vmem:[%s2434 + $0xf0] sm:$0xff]
        %v2466 = vld [vmem:[%s2434 + $0xf8] sm:$0xff]
        %v2467 = vld [vmem:[%s2434 + $0x100] sm:$0xff]
        %v2468 = vld [vmem:[%s2434 + $0x108] sm:$0xff]
        %v2469 = vld [vmem:[%s2434 + $0x110] sm:$0xff]
        %v2470 = vld [vmem:[%s2434 + $0x118] sm:$0xff]
        %v2471 = vld [vmem:[%s2434 + $0x120] sm:$0xff]
        %v2472 = vld [vmem:[%s2434 + $0x128] sm:$0xff]
        %v2473 = vld [vmem:[%s2434 + $0x130] sm:$0xff]
        %v2474 = vld [vmem:[%s2434 + $0x138] sm:$0xff]
        %v2475 = vld [vmem:[%s2434 + $0x140] sm:$0xff]
        %v2476 = vld [vmem:[%s2434 + $0x148] sm:$0xff]
        %v2477 = vld [vmem:[%s2434 + $0x150] sm:$0xff]
        %v2478 = vld [vmem:[%s2434 + $0x158] sm:$0xff]
        %v2479 = vld [vmem:[%s2434 + $0x160] sm:$0xff]
        %v2480 = vld [vmem:[%s2434 + $0x168] sm:$0xff]
        %v2481 = vld [vmem:[%s2434 + $0x170] sm:$0xff]
        %v2482 = vld [vmem:[%s2434 + $0x178] sm:$0xff]
        %v2483 = vld [vmem:[%s2434 + $0x180] sm:$0xff]
        %v2484 = vld [vmem:[%s2434 + $0x188] sm:$0xff]
        %v2485 = vld [vmem:[%s2434 + $0x190] sm:$0xff]
        %v2486 = vld [vmem:[%s2434 + $0x198] sm:$0xff]
        %v2487 = vld [vmem:[%s2434 + $0x1a0] sm:$0xff]
        %v2488 = vld [vmem:[%s2434 + $0x1a8] sm:$0xff]
        %v2489 = vld [vmem:[%s2434 + $0x1b0] sm:$0xff]
        %v2490 = vld [vmem:[%s2434 + $0x1b8] sm:$0xff]
        %v2491 = vld [vmem:[%s2434 + $0x1c0] sm:$0xff]
        %v2492 = vld [vmem:[%s2434 + $0x1c8] sm:$0xff]
        %v2493 = vld [vmem:[%s2434 + $0x1d0] sm:$0xff]
        %v2494 = vld [vmem:[%s2434 + $0x1d8] sm:$0xff]
        %v2495 = vld [vmem:[%s2434 + $0x1e0] sm:$0xff]
        %v2496 = vld [vmem:[%s2434 + $0x1e8] sm:$0xff]
        %v2497 = vld [vmem:[%s2434 + $0x1f0] sm:$0xff]
        %v2498 = vld [vmem:[%s2434 + $0x1f8] sm:$0xff]
        %2499 = vmatpush.msra.mxu0 %v2465
        %2500 = vmatpush.msra.mxu0 %v2463
        %2501 = vmatpush.msra.mxu0 %v2461
        %2502 = vmatpush.msra.mxu0 %v2459
        %2503 = vmatpush.msra.mxu0 %v2457
        %2504 = vmatpush.msra.mxu0 %v2455
        %2505 = vmatpush.msra.mxu0 %v2453
        %2506 = vmatpush.msra.mxu0 %v2451
        %2507 = vmatpush.msra.mxu0 %v2449
        %2508 = vmatpush.msra.mxu0 %v2447
        %2509 = vmatpush.msra.mxu0 %v2445
        %2510 = vmatpush.msra.mxu0 %v2443
        %2511 = vmatpush.msra.mxu0 %v2441
        %2512 = vmatpush.msra.mxu0 %v2439
        %2513 = vmatpush.msra.mxu0 %v2437
        %2514 = vmatpush.msra.mxu0 %v2435
        %2515 = vmatmul.f32.gmra.mxu0 %v852
        %v2516 = vpop.f32.mrf.mxu0
        %v2517 = vadd.f32 0.0, %v2516
        %2518 = vdwg.mxu0
        %2519 = vmatpush.msra.mxu0 %v2497
        %2520 = vmatpush.msra.mxu0 %v2495
        %2521 = vmatpush.msra.mxu0 %v2493
        %2522 = vmatpush.msra.mxu0 %v2491
        %2523 = vmatpush.msra.mxu0 %v2489
        %2524 = vmatpush.msra.mxu0 %v2487
        %2525 = vmatpush.msra.mxu0 %v2485
        %2526 = vmatpush.msra.mxu0 %v2483
        %2527 = vmatpush.msra.mxu0 %v2481
        %2528 = vmatpush.msra.mxu0 %v2479
        %2529 = vmatpush.msra.mxu0 %v2477
        %2530 = vmatpush.msra.mxu0 %v2475
        %2531 = vmatpush.msra.mxu0 %v2473
        %2532 = vmatpush.msra.mxu0 %v2471
        %2533 = vmatpush.msra.mxu0 %v2469
        %2534 = vmatpush.msra.mxu0 %v2467
        %2535 = vmatmul.f32.gmra.mxu0 %v853
        %v2536 = vpop.f32.mrf.mxu0
        %v2537 = vadd.f32 %v2517, %v2536
        %2538 = vdwg.mxu0
        %2539 = vmatpush.msra.mxu0 %v2466
        %2540 = vmatpush.msra.mxu0 %v2464
        %2541 = vmatpush.msra.mxu0 %v2462
        %2542 = vmatpush.msra.mxu0 %v2460
        %2543 = vmatpush.msra.mxu0 %v2458
        %2544 = vmatpush.msra.mxu0 %v2456
        %2545 = vmatpush.msra.mxu0 %v2454
        %2546 = vmatpush.msra.mxu0 %v2452
        %2547 = vmatpush.msra.mxu0 %v2450
        %2548 = vmatpush.msra.mxu0 %v2448
        %2549 = vmatpush.msra.mxu0 %v2446
        %2550 = vmatpush.msra.mxu0 %v2444
        %2551 = vmatpush.msra.mxu0 %v2442
        %2552 = vmatpush.msra.mxu0 %v2440
        %2553 = vmatpush.msra.mxu0 %v2438
        %2554 = vmatpush.msra.mxu0 %v2436
        %2555 = vmatmul.f32.gmra.mxu0 %v852
        %v2556 = vpop.f32.mrf.mxu0
        %v2557 = vadd.f32 0.0, %v2556
        %2558 = vdwg.mxu0
        %2559 = vmatpush.msra.mxu0 %v2498
        %2560 = vmatpush.msra.mxu0 %v2496
        %2561 = vmatpush.msra.mxu0 %v2494
        %2562 = vmatpush.msra.mxu0 %v2492
        %2563 = vmatpush.msra.mxu0 %v2490
        %2564 = vmatpush.msra.mxu0 %v2488
        %2565 = vmatpush.msra.mxu0 %v2486
        %2566 = vmatpush.msra.mxu0 %v2484
        %2567 = vmatpush.msra.mxu0 %v2482
        %2568 = vmatpush.msra.mxu0 %v2480
        %2569 = vmatpush.msra.mxu0 %v2478
        %2570 = vmatpush.msra.mxu0 %v2476
        %2571 = vmatpush.msra.mxu0 %v2474
        %2572 = vmatpush.msra.mxu0 %v2472
        %2573 = vmatpush.msra.mxu0 %v2470
        %2574 = vmatpush.msra.mxu0 %v2468
        %2575 = vmatmul.f32.gmra.mxu0 %v853
        %v2576 = vpop.f32.mrf.mxu0
        %v2577 = vadd.f32 %v2557, %v2576
        %2578 = vdwg.mxu0
        %s2579 = scalar_lea.vmem %s6, 32
        %v2580 = vld [vmem:[%s2579] sm:$0xf]
        %v2582 = vsel %vm1146, %v2580, 0
        %v2585 = vsel %vm1150, %v2537, 0
        %v2588 = vsel %vm1150, %v2577, 0
        %2590 = vmatpush.msra.mxu0 0.0
        %2591 = vmatpush.msra.mxu0 0.0
        %2592 = vmatpush.msra.mxu0 0.0
        %2593 = vmatpush.msra.mxu0 0.0
        %2594 = vmatpush.msra.mxu0 0.0
        %2595 = vmatpush.msra.mxu0 0.0
        %2596 = vmatpush.msra.mxu0 0.0
        %2597 = vmatpush.msra.mxu0 0.0
        %2598 = vmatpush.msra.mxu0 0.0
        %2599 = vmatpush.msra.mxu0 0.0
        %2600 = vmatpush.msra.mxu0 0.0
        %2601 = vmatpush.msra.mxu0 0.0
        %2602 = vmatpush.msra.mxu0 0.0
        %2603 = vmatpush.msra.mxu0 0.0
        %2604 = vmatpush.msra.mxu0 0.0
        %2605 = vmatpush.msra.mxu0 %v2585
        %2606 = vmatmul.f32.gmra.mxu0 %v2582
        %v2607 = vpop.f32.mrf.mxu0
        %v2608 = vadd.f32 0.0, %v2607
        %2609 = vdwg.mxu0
        %2610 = vmatpush.msra.mxu0 0.0
        %2611 = vmatpush.msra.mxu0 0.0
        %2612 = vmatpush.msra.mxu0 0.0
        %2613 = vmatpush.msra.mxu0 0.0
        %2614 = vmatpush.msra.mxu0 0.0
        %2615 = vmatpush.msra.mxu0 0.0
        %2616 = vmatpush.msra.mxu0 0.0
        %2617 = vmatpush.msra.mxu0 0.0
        %2618 = vmatpush.msra.mxu0 0.0
        %2619 = vmatpush.msra.mxu0 0.0
        %2620 = vmatpush.msra.mxu0 0.0
        %2621 = vmatpush.msra.mxu0 0.0
        %2622 = vmatpush.msra.mxu0 0.0
        %2623 = vmatpush.msra.mxu0 0.0
        %2624 = vmatpush.msra.mxu0 0.0
        %2625 = vmatpush.msra.mxu0 %v2588
        %2626 = vmatmul.f32.gmra.mxu0 %v2582
        %v2627 = vpop.f32.mrf.mxu0
        %v2628 = vadd.f32 0.0, %v2627
        %2629 = vdwg.mxu0
        %v2630 = vadd.f32 %v2432, %v2608
        %v2631 = vadd.f32 %v2433, %v2628
        %v2632 = vld [vmem:[%s7] sm:$0xf]
        %2634 = vset.pattern.permute.xlu0 0
        %2635 = vperm.xlu0 %2634, %v2632
        %v2636 = vpop.permute.xlu0 %2635
        %v2638 = vadd.f32 %v2630, %v2636
        %v2639 = vadd.f32 %v2631, %v2636
        %v2640 = vmax.f32 %v2638, 0.0
        %v2641 = vmax.f32 %v2639, 0.0
        %2643 = vset.pattern.permute.xlu0 0
        %2644 = vperm.xlu0 %2643, %v802
        %v2645 = vpop.permute.xlu0 %2644
        %2648 = vset.pattern.permute.xlu0 0
        %2649 = vperm.xlu0 %2648, %v803
        %v2650 = vpop.permute.xlu0 %2649
        %v2653 = vsel %vm1146, %v800, 0
        %v2656 = vsel %vm1146, %v801, 0
        %v2659 = vsel %vm1150, %v2640, 0
        %v2662 = vsel %vm1150, %v2641, 0
        %2664 = vmatpush.msra.mxu0 0.0
        %2665 = vmatpush.msra.mxu0 0.0
        %2666 = vmatpush.msra.mxu0 0.0
        %2667 = vmatpush.msra.mxu0 0.0
        %2668 = vmatpush.msra.mxu0 0.0
        %2669 = vmatpush.msra.mxu0 0.0
        %2670 = vmatpush.msra.mxu0 0.0
        %2671 = vmatpush.msra.mxu0 0.0
        %2672 = vmatpush.msra.mxu0 0.0
        %2673 = vmatpush.msra.mxu0 0.0
        %2674 = vmatpush.msra.mxu0 0.0
        %2675 = vmatpush.msra.mxu0 0.0
        %2676 = vmatpush.msra.mxu0 0.0
        %2677 = vmatpush.msra.mxu0 0.0
        %2678 = vmatpush.msra.mxu0 0.0
        %2679 = vmatpush.msra.mxu0 %v2659
        %2680 = vmatmul.f32.gmra.mxu0 %v2653
        %v2681 = vpop.f32.mrf.mxu0
        %v2682 = vadd.f32 %v2645, %v2681
        %2683 = vmatmul.f32.gmra.mxu0 %v2656
        %v2684 = vpop.f32.mrf.mxu0
        %v2685 = vadd.f32 %v2650, %v2684
        %2686 = vdwg.mxu0
        %2687 = vmatpush.msra.mxu0 0.0
        %2688 = vmatpush.msra.mxu0 0.0
        %2689 = vmatpush.msra.mxu0 0.0
        %2690 = vmatpush.msra.mxu0 0.0
        %2691 = vmatpush.msra.mxu0 0.0
        %2692 = vmatpush.msra.mxu0 0.0
        %2693 = vmatpush.msra.mxu0 0.0
        %2694 = vmatpush.msra.mxu0 0.0
        %2695 = vmatpush.msra.mxu0 0.0
        %2696 = vmatpush.msra.mxu0 0.0
        %2697 = vmatpush.msra.mxu0 0.0
        %2698 = vmatpush.msra.mxu0 0.0
        %2699 = vmatpush.msra.mxu0 0.0
        %2700 = vmatpush.msra.mxu0 0.0
        %2701 = vmatpush.msra.mxu0 0.0
        %2702 = vmatpush.msra.mxu0 %v2662
        %2703 = vmatmul.f32.gmra.mxu0 %v2653
        %v2704 = vpop.f32.mrf.mxu0
        %v2705 = vadd.f32 %v2645, %v2704
        %2706 = vmatmul.f32.gmra.mxu0 %v2656
        %v2707 = vpop.f32.mrf.mxu0
        %v2708 = vadd.f32 %v2650, %v2707
        %2709 = vdwg.mxu0
        %v2710 = vadd.f32 %v2682, %v770
        %v2711 = vadd.f32 %v2705, %v793
        %v2712 = vadd.f32 %v2685, %v773
        %v2713 = vadd.f32 %v2708, %v796
        %v2714 = vmax.f32 %v2710, 0.0
        %v2715 = vmax.f32 %v2711, 0.0
        %v2716 = vmax.f32 %v2712, 0.0
        %v2717 = vmax.f32 %v2713, 0.0
        %v2718 = vadd.f32 %v2714, %v652
        %v2719 = vadd.f32 %v2715, %v653
        %v2720 = vadd.f32 %v2716, %v654
        %v2721 = vadd.f32 %v2717, %v655
        %v2722 = vld [vmem:[#allocation9] sm:$0xf]
        %v2723 = vld [vmem:[%s12] sm:$0xf]
        %v2724 = vld [vmem:[%s15] sm:$0xff]
        %v2725 = vld [vmem:[%s15 + $0x8] sm:$0xff]
        %v2726 = vld [vmem:[%s16] sm:$0xff]
        %v2727 = vld [vmem:[%s16 + $0x8] sm:$0xff]
        %2729 = vset.pattern.permute.xlu0 0
        %2730 = vperm.xlu0 %2729, %v2723
        %v2731 = vpop.permute.xlu0 %2730
        %vm2733 = vcmask 130048
        %v2735 = vsel %vm2733, %v2722, 0
        %2737 = vmatpush.msra.mxu0 0.0
        %2738 = vmatpush.msra.mxu0 0.0
        %2739 = vmatpush.msra.mxu0 0.0
        %2740 = vmatpush.msra.mxu0 0.0
        %2741 = vmatpush.msra.mxu0 0.0
        %2742 = vmatpush.msra.mxu0 0.0
        %2743 = vmatpush.msra.mxu0 0.0
        %2744 = vmatpush.msra.mxu0 0.0
        %2745 = vmatpush.msra.mxu0 0.0
        %2746 = vmatpush.msra.mxu0 0.0
        %2747 = vmatpush.msra.mxu0 0.0
        %2748 = vmatpush.msra.mxu0 0.0
        %2749 = vmatpush.msra.mxu0 0.0
        %2750 = vmatpush.msra.mxu0 0.0
        %2751 = vmatpush.msra.mxu0 %v2720
        %2752 = vmatpush.msra.mxu0 %v2718
        %2753 = vmatmul.f32.gmra.mxu0 %v2735
        %v2754 = vpop.f32.mrf.mxu0
        %v2755 = vadd.f32 %v2731, %v2754
        %2756 = vdwg.mxu0
        %2757 = vmatpush.msra.mxu0 0.0
        %2758 = vmatpush.msra.mxu0 0.0
        %2759 = vmatpush.msra.mxu0 0.0
        %2760 = vmatpush.msra.mxu0 0.0
        %2761 = vmatpush.msra.mxu0 0.0
        %2762 = vmatpush.msra.mxu0 0.0
        %2763 = vmatpush.msra.mxu0 0.0
        %2764 = vmatpush.msra.mxu0 0.0
        %2765 = vmatpush.msra.mxu0 0.0
        %2766 = vmatpush.msra.mxu0 0.0
        %2767 = vmatpush.msra.mxu0 0.0
        %2768 = vmatpush.msra.mxu0 0.0
        %2769 = vmatpush.msra.mxu0 0.0
        %2770 = vmatpush.msra.mxu0 0.0
        %2771 = vmatpush.msra.mxu0 %v2721
        %2772 = vmatpush.msra.mxu0 %v2719
        %2773 = vmatmul.f32.gmra.mxu0 %v2735
        %v2774 = vpop.f32.mrf.mxu0
        %v2775 = vadd.f32 %v2731, %v2774
        %2776 = vdwg.mxu0
        %v2777 = vmax.f32 %v2755, 0.0
        %v2778 = vmax.f32 %v2775, 0.0
        %2779 = vmatpush.msra.mxu0 %v884
        %2780 = vmatpush.msra.mxu0 %v882
        %2781 = vmatpush.msra.mxu0 %v880
        %2782 = vmatpush.msra.mxu0 %v878
        %2783 = vmatpush.msra.mxu0 %v876
        %2784 = vmatpush.msra.mxu0 %v874
        %2785 = vmatpush.msra.mxu0 %v872
        %2786 = vmatpush.msra.mxu0 %v870
        %2787 = vmatpush.msra.mxu0 %v868
        %2788 = vmatpush.msra.mxu0 %v866
        %2789 = vmatpush.msra.mxu0 %v864
        %2790 = vmatpush.msra.mxu0 %v862
        %2791 = vmatpush.msra.mxu0 %v860
        %2792 = vmatpush.msra.mxu0 %v858
        %2793 = vmatpush.msra.mxu0 %v856
        %2794 = vmatpush.msra.mxu0 %v854
        %2795 = vmatmul.f32.gmra.mxu0 %v2777
        %v2796 = vpop.f32.mrf.mxu0
        %v2797 = vadd.f32 0.0, %v2796
        %2798 = vdwg.mxu0
        %2799 = vmatpush.msra.mxu0 %v916
        %2800 = vmatpush.msra.mxu0 %v914
        %2801 = vmatpush.msra.mxu0 %v912
        %2802 = vmatpush.msra.mxu0 %v910
        %2803 = vmatpush.msra.mxu0 %v908
        %2804 = vmatpush.msra.mxu0 %v906
        %2805 = vmatpush.msra.mxu0 %v904
        %2806 = vmatpush.msra.mxu0 %v902
        %2807 = vmatpush.msra.mxu0 %v900
        %2808 = vmatpush.msra.mxu0 %v898
        %2809 = vmatpush.msra.mxu0 %v896
        %2810 = vmatpush.msra.mxu0 %v894
        %2811 = vmatpush.msra.mxu0 %v892
        %2812 = vmatpush.msra.mxu0 %v890
        %2813 = vmatpush.msra.mxu0 %v888
        %2814 = vmatpush.msra.mxu0 %v886
        %2815 = vmatmul.f32.gmra.mxu0 %v2778
        %v2816 = vpop.f32.mrf.mxu0
        %v2817 = vadd.f32 %v2797, %v2816
        %2818 = vdwg.mxu0
        %2819 = vmatpush.msra.mxu0 %v885
        %2820 = vmatpush.msra.mxu0 %v883
        %2821 = vmatpush.msra.mxu0 %v881
        %2822 = vmatpush.msra.mxu0 %v879
        %2823 = vmatpush.msra.mxu0 %v877
        %2824 = vmatpush.msra.mxu0 %v875
        %2825 = vmatpush.msra.mxu0 %v873
        %2826 = vmatpush.msra.mxu0 %v871
        %2827 = vmatpush.msra.mxu0 %v869
        %2828 = vmatpush.msra.mxu0 %v867
        %2829 = vmatpush.msra.mxu0 %v865
        %2830 = vmatpush.msra.mxu0 %v863
        %2831 = vmatpush.msra.mxu0 %v861
        %2832 = vmatpush.msra.mxu0 %v859
        %2833 = vmatpush.msra.mxu0 %v857
        %2834 = vmatpush.msra.mxu0 %v855
        %2835 = vmatmul.f32.gmra.mxu0 %v2777
        %v2836 = vpop.f32.mrf.mxu0
        %v2837 = vadd.f32 0.0, %v2836
        %2838 = vdwg.mxu0
        %2839 = vmatpush.msra.mxu0 %v917
        %2840 = vmatpush.msra.mxu0 %v915
        %2841 = vmatpush.msra.mxu0 %v913
        %2842 = vmatpush.msra.mxu0 %v911
        %2843 = vmatpush.msra.mxu0 %v909
        %2844 = vmatpush.msra.mxu0 %v907
        %2845 = vmatpush.msra.mxu0 %v905
        %2846 = vmatpush.msra.mxu0 %v903
        %2847 = vmatpush.msra.mxu0 %v901
        %2848 = vmatpush.msra.mxu0 %v899
        %2849 = vmatpush.msra.mxu0 %v897
        %2850 = vmatpush.msra.mxu0 %v895
        %2851 = vmatpush.msra.mxu0 %v893
        %2852 = vmatpush.msra.mxu0 %v891
        %2853 = vmatpush.msra.mxu0 %v889
        %2854 = vmatpush.msra.mxu0 %v887
        %2855 = vmatmul.f32.gmra.mxu0 %v2778
        %v2856 = vpop.f32.mrf.mxu0
        %v2857 = vadd.f32 %v2837, %v2856
        %2858 = vdwg.mxu0
        %v2859 = vld [vmem:[%s13] sm:$0xf]
        %2860 = vmatpush.msra.mxu0 %v1030
        %2861 = vmatpush.msra.mxu0 %v1028
        %2862 = vmatpush.msra.mxu0 %v1026
        %2863 = vmatpush.msra.mxu0 %v1024
        %2864 = vmatpush.msra.mxu0 %v1022
        %2865 = vmatpush.msra.mxu0 %v1020
        %2866 = vmatpush.msra.mxu0 %v1018
        %2867 = vmatpush.msra.mxu0 %v1016
        %2868 = vmatpush.msra.mxu0 %v1014
        %2869 = vmatpush.msra.mxu0 %v1012
        %2870 = vmatpush.msra.mxu0 %v1010
        %2871 = vmatpush.msra.mxu0 %v1008
        %2872 = vmatpush.msra.mxu0 %v1006
        %2873 = vmatpush.msra.mxu0 %v1004
        %2874 = vmatpush.msra.mxu0 %v1002
        %2875 = vmatpush.msra.mxu0 %v1000
        %2876 = vmatmul.f32.gmra.mxu0 %v2777
        %v2877 = vpop.f32.mrf.mxu0
        %v2878 = vadd.f32 0.0, %v2877
        %2879 = vdwg.mxu0
        %2880 = vmatpush.msra.mxu0 %v1062
        %2881 = vmatpush.msra.mxu0 %v1060
        %2882 = vmatpush.msra.mxu0 %v1058
        %2883 = vmatpush.msra.mxu0 %v1056
        %2884 = vmatpush.msra.mxu0 %v1054
        %2885 = vmatpush.msra.mxu0 %v1052
        %2886 = vmatpush.msra.mxu0 %v1050
        %2887 = vmatpush.msra.mxu0 %v1048
        %2888 = vmatpush.msra.mxu0 %v1046
        %2889 = vmatpush.msra.mxu0 %v1044
        %2890 = vmatpush.msra.mxu0 %v1042
        %2891 = vmatpush.msra.mxu0 %v1040
        %2892 = vmatpush.msra.mxu0 %v1038
        %2893 = vmatpush.msra.mxu0 %v1036
        %2894 = vmatpush.msra.mxu0 %v1034
        %2895 = vmatpush.msra.mxu0 %v1032
        %2896 = vmatmul.f32.gmra.mxu0 %v2778
        %v2897 = vpop.f32.mrf.mxu0
        %v2898 = vadd.f32 %v2878, %v2897
        %2899 = vdwg.mxu0
        %2900 = vmatpush.msra.mxu0 %v1031
        %2901 = vmatpush.msra.mxu0 %v1029
        %2902 = vmatpush.msra.mxu0 %v1027
        %2903 = vmatpush.msra.mxu0 %v1025
        %2904 = vmatpush.msra.mxu0 %v1023
        %2905 = vmatpush.msra.mxu0 %v1021
        %2906 = vmatpush.msra.mxu0 %v1019
        %2907 = vmatpush.msra.mxu0 %v1017
        %2908 = vmatpush.msra.mxu0 %v1015
        %2909 = vmatpush.msra.mxu0 %v1013
        %2910 = vmatpush.msra.mxu0 %v1011
        %2911 = vmatpush.msra.mxu0 %v1009
        %2912 = vmatpush.msra.mxu0 %v1007
        %2913 = vmatpush.msra.mxu0 %v1005
        %2914 = vmatpush.msra.mxu0 %v1003
        %2915 = vmatpush.msra.mxu0 %v1001
        %2916 = vmatmul.f32.gmra.mxu0 %v2777
        %v2917 = vpop.f32.mrf.mxu0
        %v2918 = vadd.f32 0.0, %v2917
        %2919 = vdwg.mxu0
        %2920 = vmatpush.msra.mxu0 %v1063
        %2921 = vmatpush.msra.mxu0 %v1061
        %2922 = vmatpush.msra.mxu0 %v1059
        %2923 = vmatpush.msra.mxu0 %v1057
        %2924 = vmatpush.msra.mxu0 %v1055
        %2925 = vmatpush.msra.mxu0 %v1053
        %2926 = vmatpush.msra.mxu0 %v1051
        %2927 = vmatpush.msra.mxu0 %v1049
        %2928 = vmatpush.msra.mxu0 %v1047
        %2929 = vmatpush.msra.mxu0 %v1045
        %2930 = vmatpush.msra.mxu0 %v1043
        %2931 = vmatpush.msra.mxu0 %v1041
        %2932 = vmatpush.msra.mxu0 %v1039
        %2933 = vmatpush.msra.mxu0 %v1037
        %2934 = vmatpush.msra.mxu0 %v1035
        %2935 = vmatpush.msra.mxu0 %v1033
        %2936 = vmatmul.f32.gmra.mxu0 %v2778
        %v2937 = vpop.f32.mrf.mxu0
        %v2938 = vadd.f32 %v2918, %v2937
        %2939 = vdwg.mxu0
        %s2940 = scalar_lea.vmem %s13, 4
        %v2941 = vld [vmem:[%s2940] sm:$0xf]
        %v2943 = vsel %vm1146, %v2941, 0
        %v2946 = vsel %vm1150, %v2898, 0
        %v2949 = vsel %vm1150, %v2938, 0
        %2951 = vmatpush.msra.mxu0 0.0
        %2952 = vmatpush.msra.mxu0 0.0
        %2953 = vmatpush.msra.mxu0 0.0
        %2954 = vmatpush.msra.mxu0 0.0
        %2955 = vmatpush.msra.mxu0 0.0
        %2956 = vmatpush.msra.mxu0 0.0
        %2957 = vmatpush.msra.mxu0 0.0
        %2958 = vmatpush.msra.mxu0 0.0
        %2959 = vmatpush.msra.mxu0 0.0
        %2960 = vmatpush.msra.mxu0 0.0
        %2961 = vmatpush.msra.mxu0 0.0
        %2962 = vmatpush.msra.mxu0 0.0
        %2963 = vmatpush.msra.mxu0 0.0
        %2964 = vmatpush.msra.mxu0 0.0
        %2965 = vmatpush.msra.mxu0 0.0
        %2966 = vmatpush.msra.mxu0 %v2946
        %2967 = vmatmul.f32.gmra.mxu0 %v2943
        %v2968 = vpop.f32.mrf.mxu0
        %v2969 = vadd.f32 0.0, %v2968
        %2970 = vdwg.mxu0
        %2971 = vmatpush.msra.mxu0 0.0
        %2972 = vmatpush.msra.mxu0 0.0
        %2973 = vmatpush.msra.mxu0 0.0
        %2974 = vmatpush.msra.mxu0 0.0
        %2975 = vmatpush.msra.mxu0 0.0
        %2976 = vmatpush.msra.mxu0 0.0
        %2977 = vmatpush.msra.mxu0 0.0
        %2978 = vmatpush.msra.mxu0 0.0
        %2979 = vmatpush.msra.mxu0 0.0
        %2980 = vmatpush.msra.mxu0 0.0
        %2981 = vmatpush.msra.mxu0 0.0
        %2982 = vmatpush.msra.mxu0 0.0
        %2983 = vmatpush.msra.mxu0 0.0
        %2984 = vmatpush.msra.mxu0 0.0
        %2985 = vmatpush.msra.mxu0 0.0
        %2986 = vmatpush.msra.mxu0 %v2949
        %2987 = vmatmul.f32.gmra.mxu0 %v2943
        %v2988 = vpop.f32.mrf.mxu0
        %v2989 = vadd.f32 0.0, %v2988
        %2990 = vdwg.mxu0
        %v2992 = vsel %vm1146, %v2859, 0
        %v2995 = vsel %vm1150, %v2817, 0
        %v2998 = vsel %vm1150, %v2857, 0
        %3000 = vmatpush.msra.mxu0 0.0
        %3001 = vmatpush.msra.mxu0 0.0
        %3002 = vmatpush.msra.mxu0 0.0
        %3003 = vmatpush.msra.mxu0 0.0
        %3004 = vmatpush.msra.mxu0 0.0
        %3005 = vmatpush.msra.mxu0 0.0
        %3006 = vmatpush.msra.mxu0 0.0
        %3007 = vmatpush.msra.mxu0 0.0
        %3008 = vmatpush.msra.mxu0 0.0
        %3009 = vmatpush.msra.mxu0 0.0
        %3010 = vmatpush.msra.mxu0 0.0
        %3011 = vmatpush.msra.mxu0 0.0
        %3012 = vmatpush.msra.mxu0 0.0
        %3013 = vmatpush.msra.mxu0 0.0
        %3014 = vmatpush.msra.mxu0 0.0
        %3015 = vmatpush.msra.mxu0 %v2995
        %3016 = vmatmul.f32.gmra.mxu0 %v2992
        %v3017 = vpop.f32.mrf.mxu0
        %v3018 = vadd.f32 %v2969, %v3017
        %3019 = vdwg.mxu0
        %3020 = vmatpush.msra.mxu0 0.0
        %3021 = vmatpush.msra.mxu0 0.0
        %3022 = vmatpush.msra.mxu0 0.0
        %3023 = vmatpush.msra.mxu0 0.0
        %3024 = vmatpush.msra.mxu0 0.0
        %3025 = vmatpush.msra.mxu0 0.0
        %3026 = vmatpush.msra.mxu0 0.0
        %3027 = vmatpush.msra.mxu0 0.0
        %3028 = vmatpush.msra.mxu0 0.0
        %3029 = vmatpush.msra.mxu0 0.0
        %3030 = vmatpush.msra.mxu0 0.0
        %3031 = vmatpush.msra.mxu0 0.0
        %3032 = vmatpush.msra.mxu0 0.0
        %3033 = vmatpush.msra.mxu0 0.0
        %3034 = vmatpush.msra.mxu0 0.0
        %3035 = vmatpush.msra.mxu0 %v2998
        %3036 = vmatmul.f32.gmra.mxu0 %v2992
        %v3037 = vpop.f32.mrf.mxu0
        %v3038 = vadd.f32 %v2989, %v3037
        %3039 = vdwg.mxu0
        %3040 = vmatpush.msra.mxu0 %v1277
        %3041 = vmatpush.msra.mxu0 %v1275
        %3042 = vmatpush.msra.mxu0 %v1273
        %3043 = vmatpush.msra.mxu0 %v1271
        %3044 = vmatpush.msra.mxu0 %v1269
        %3045 = vmatpush.msra.mxu0 %v1267
        %3046 = vmatpush.msra.mxu0 %v1265
        %3047 = vmatpush.msra.mxu0 %v1263
        %3048 = vmatpush.msra.mxu0 %v1261
        %3049 = vmatpush.msra.mxu0 %v1259
        %3050 = vmatpush.msra.mxu0 %v1257
        %3051 = vmatpush.msra.mxu0 %v1255
        %3052 = vmatpush.msra.mxu0 %v1253
        %3053 = vmatpush.msra.mxu0 %v1251
        %3054 = vmatpush.msra.mxu0 %v1249
        %3055 = vmatpush.msra.mxu0 %v1247
        %3056 = vmatmul.f32.gmra.mxu0 %v2777
        %v3057 = vpop.f32.mrf.mxu0
        %v3058 = vadd.f32 0.0, %v3057
        %3059 = vdwg.mxu0
        %3060 = vmatpush.msra.mxu0 %v1309
        %3061 = vmatpush.msra.mxu0 %v1307
        %3062 = vmatpush.msra.mxu0 %v1305
        %3063 = vmatpush.msra.mxu0 %v1303
        %3064 = vmatpush.msra.mxu0 %v1301
        %3065 = vmatpush.msra.mxu0 %v1299
        %3066 = vmatpush.msra.mxu0 %v1297
        %3067 = vmatpush.msra.mxu0 %v1295
        %3068 = vmatpush.msra.mxu0 %v1293
        %3069 = vmatpush.msra.mxu0 %v1291
        %3070 = vmatpush.msra.mxu0 %v1289
        %3071 = vmatpush.msra.mxu0 %v1287
        %3072 = vmatpush.msra.mxu0 %v1285
        %3073 = vmatpush.msra.mxu0 %v1283
        %3074 = vmatpush.msra.mxu0 %v1281
        %3075 = vmatpush.msra.mxu0 %v1279
        %3076 = vmatmul.f32.gmra.mxu0 %v2778
        %v3077 = vpop.f32.mrf.mxu0
        %v3078 = vadd.f32 %v3058, %v3077
        %3079 = vdwg.mxu0
        %3080 = vmatpush.msra.mxu0 %v1278
        %3081 = vmatpush.msra.mxu0 %v1276
        %3082 = vmatpush.msra.mxu0 %v1274
        %3083 = vmatpush.msra.mxu0 %v1272
        %3084 = vmatpush.msra.mxu0 %v1270
        %3085 = vmatpush.msra.mxu0 %v1268
        %3086 = vmatpush.msra.mxu0 %v1266
        %3087 = vmatpush.msra.mxu0 %v1264
        %3088 = vmatpush.msra.mxu0 %v1262
        %3089 = vmatpush.msra.mxu0 %v1260
        %3090 = vmatpush.msra.mxu0 %v1258
        %3091 = vmatpush.msra.mxu0 %v1256
        %3092 = vmatpush.msra.mxu0 %v1254
        %3093 = vmatpush.msra.mxu0 %v1252
        %3094 = vmatpush.msra.mxu0 %v1250
        %3095 = vmatpush.msra.mxu0 %v1248
        %3096 = vmatmul.f32.gmra.mxu0 %v2777
        %v3097 = vpop.f32.mrf.mxu0
        %v3098 = vadd.f32 0.0, %v3097
        %3099 = vdwg.mxu0
        %3100 = vmatpush.msra.mxu0 %v1310
        %3101 = vmatpush.msra.mxu0 %v1308
        %3102 = vmatpush.msra.mxu0 %v1306
        %3103 = vmatpush.msra.mxu0 %v1304
        %3104 = vmatpush.msra.mxu0 %v1302
        %3105 = vmatpush.msra.mxu0 %v1300
        %3106 = vmatpush.msra.mxu0 %v1298
        %3107 = vmatpush.msra.mxu0 %v1296
        %3108 = vmatpush.msra.mxu0 %v1294
        %3109 = vmatpush.msra.mxu0 %v1292
        %3110 = vmatpush.msra.mxu0 %v1290
        %3111 = vmatpush.msra.mxu0 %v1288
        %3112 = vmatpush.msra.mxu0 %v1286
        %3113 = vmatpush.msra.mxu0 %v1284
        %3114 = vmatpush.msra.mxu0 %v1282
        %3115 = vmatpush.msra.mxu0 %v1280
        %3116 = vmatmul.f32.gmra.mxu0 %v2778
        %v3117 = vpop.f32.mrf.mxu0
        %v3118 = vadd.f32 %v3098, %v3117
        %3119 = vdwg.mxu0
        %s3120 = scalar_lea.vmem %s13, 8
        %v3121 = vld [vmem:[%s3120] sm:$0xf]
        %v3123 = vsel %vm1146, %v3121, 0
        %v3126 = vsel %vm1150, %v3078, 0
        %v3129 = vsel %vm1150, %v3118, 0
        %3131 = vmatpush.msra.mxu0 0.0
        %3132 = vmatpush.msra.mxu0 0.0
        %3133 = vmatpush.msra.mxu0 0.0
        %3134 = vmatpush.msra.mxu0 0.0
        %3135 = vmatpush.msra.mxu0 0.0
        %3136 = vmatpush.msra.mxu0 0.0
        %3137 = vmatpush.msra.mxu0 0.0
        %3138 = vmatpush.msra.mxu0 0.0
        %3139 = vmatpush.msra.mxu0 0.0
        %3140 = vmatpush.msra.mxu0 0.0
        %3141 = vmatpush.msra.mxu0 0.0
        %3142 = vmatpush.msra.mxu0 0.0
        %3143 = vmatpush.msra.mxu0 0.0
        %3144 = vmatpush.msra.mxu0 0.0
        %3145 = vmatpush.msra.mxu0 0.0
        %3146 = vmatpush.msra.mxu0 %v3126
        %3147 = vmatmul.f32.gmra.mxu0 %v3123
        %v3148 = vpop.f32.mrf.mxu0
        %v3149 = vadd.f32 0.0, %v3148
        %3150 = vdwg.mxu0
        %3151 = vmatpush.msra.mxu0 0.0
        %3152 = vmatpush.msra.mxu0 0.0
        %3153 = vmatpush.msra.mxu0 0.0
        %3154 = vmatpush.msra.mxu0 0.0
        %3155 = vmatpush.msra.mxu0 0.0
        %3156 = vmatpush.msra.mxu0 0.0
        %3157 = vmatpush.msra.mxu0 0.0
        %3158 = vmatpush.msra.mxu0 0.0
        %3159 = vmatpush.msra.mxu0 0.0
        %3160 = vmatpush.msra.mxu0 0.0
        %3161 = vmatpush.msra.mxu0 0.0
        %3162 = vmatpush.msra.mxu0 0.0
        %3163 = vmatpush.msra.mxu0 0.0
        %3164 = vmatpush.msra.mxu0 0.0
        %3165 = vmatpush.msra.mxu0 0.0
        %3166 = vmatpush.msra.mxu0 %v3129
        %3167 = vmatmul.f32.gmra.mxu0 %v3123
        %v3168 = vpop.f32.mrf.mxu0
        %v3169 = vadd.f32 0.0, %v3168
        %3170 = vdwg.mxu0
        %v3171 = vadd.f32 %v3018, %v3149
        %v3172 = vadd.f32 %v3038, %v3169
        %3173 = vmatpush.msra.mxu0 %v1475
        %3174 = vmatpush.msra.mxu0 %v1473
        %3175 = vmatpush.msra.mxu0 %v1471
        %3176 = vmatpush.msra.mxu0 %v1469
        %3177 = vmatpush.msra.mxu0 %v1467
        %3178 = vmatpush.msra.mxu0 %v1465
        %3179 = vmatpush.msra.mxu0 %v1463
        %3180 = vmatpush.msra.mxu0 %v1461
        %3181 = vmatpush.msra.mxu0 %v1459
        %3182 = vmatpush.msra.mxu0 %v1457
        %3183 = vmatpush.msra.mxu0 %v1455
        %3184 = vmatpush.msra.mxu0 %v1453
        %3185 = vmatpush.msra.mxu0 %v1451
        %3186 = vmatpush.msra.mxu0 %v1449
        %3187 = vmatpush.msra.mxu0 %v1447
        %3188 = vmatpush.msra.mxu0 %v1445
        %3189 = vmatmul.f32.gmra.mxu0 %v2777
        %v3190 = vpop.f32.mrf.mxu0
        %v3191 = vadd.f32 0.0, %v3190
        %3192 = vdwg.mxu0
        %3193 = vmatpush.msra.mxu0 %v1507
        %3194 = vmatpush.msra.mxu0 %v1505
        %3195 = vmatpush.msra.mxu0 %v1503
        %3196 = vmatpush.msra.mxu0 %v1501
        %3197 = vmatpush.msra.mxu0 %v1499
        %3198 = vmatpush.msra.mxu0 %v1497
        %3199 = vmatpush.msra.mxu0 %v1495
        %3200 = vmatpush.msra.mxu0 %v1493
        %3201 = vmatpush.msra.mxu0 %v1491
        %3202 = vmatpush.msra.mxu0 %v1489
        %3203 = vmatpush.msra.mxu0 %v1487
        %3204 = vmatpush.msra.mxu0 %v1485
        %3205 = vmatpush.msra.mxu0 %v1483
        %3206 = vmatpush.msra.mxu0 %v1481
        %3207 = vmatpush.msra.mxu0 %v1479
        %3208 = vmatpush.msra.mxu0 %v1477
        %3209 = vmatmul.f32.gmra.mxu0 %v2778
        %v3210 = vpop.f32.mrf.mxu0
        %v3211 = vadd.f32 %v3191, %v3210
        %3212 = vdwg.mxu0
        %3213 = vmatpush.msra.mxu0 %v1476
        %3214 = vmatpush.msra.mxu0 %v1474
        %3215 = vmatpush.msra.mxu0 %v1472
        %3216 = vmatpush.msra.mxu0 %v1470
        %3217 = vmatpush.msra.mxu0 %v1468
        %3218 = vmatpush.msra.mxu0 %v1466
        %3219 = vmatpush.msra.mxu0 %v1464
        %3220 = vmatpush.msra.mxu0 %v1462
        %3221 = vmatpush.msra.mxu0 %v1460
        %3222 = vmatpush.msra.mxu0 %v1458
        %3223 = vmatpush.msra.mxu0 %v1456
        %3224 = vmatpush.msra.mxu0 %v1454
        %3225 = vmatpush.msra.mxu0 %v1452
        %3226 = vmatpush.msra.mxu0 %v1450
        %3227 = vmatpush.msra.mxu0 %v1448
        %3228 = vmatpush.msra.mxu0 %v1446
        %3229 = vmatmul.f32.gmra.mxu0 %v2777
        %v3230 = vpop.f32.mrf.mxu0
        %v3231 = vadd.f32 0.0, %v3230
        %3232 = vdwg.mxu0
        %3233 = vmatpush.msra.mxu0 %v1508
        %3234 = vmatpush.msra.mxu0 %v1506
        %3235 = vmatpush.msra.mxu0 %v1504
        %3236 = vmatpush.msra.mxu0 %v1502
        %3237 = vmatpush.msra.mxu0 %v1500
        %3238 = vmatpush.msra.mxu0 %v1498
        %3239 = vmatpush.msra.mxu0 %v1496
        %3240 = vmatpush.msra.mxu0 %v1494
        %3241 = vmatpush.msra.mxu0 %v1492
        %3242 = vmatpush.msra.mxu0 %v1490
        %3243 = vmatpush.msra.mxu0 %v1488
        %3244 = vmatpush.msra.mxu0 %v1486
        %3245 = vmatpush.msra.mxu0 %v1484
        %3246 = vmatpush.msra.mxu0 %v1482
        %3247 = vmatpush.msra.mxu0 %v1480
        %3248 = vmatpush.msra.mxu0 %v1478
        %3249 = vmatmul.f32.gmra.mxu0 %v2778
        %v3250 = vpop.f32.mrf.mxu0
        %v3251 = vadd.f32 %v3231, %v3250
        %3252 = vdwg.mxu0
        %s3253 = scalar_lea.vmem %s13, 12
        %v3254 = vld [vmem:[%s3253] sm:$0xf]
        %v3256 = vsel %vm1146, %v3254, 0
        %v3259 = vsel %vm1150, %v3211, 0
        %v3262 = vsel %vm1150, %v3251, 0
        %3264 = vmatpush.msra.mxu0 0.0
        %3265 = vmatpush.msra.mxu0 0.0
        %3266 = vmatpush.msra.mxu0 0.0
        %3267 = vmatpush.msra.mxu0 0.0
        %3268 = vmatpush.msra.mxu0 0.0
        %3269 = vmatpush.msra.mxu0 0.0
        %3270 = vmatpush.msra.mxu0 0.0
        %3271 = vmatpush.msra.mxu0 0.0
        %3272 = vmatpush.msra.mxu0 0.0
        %3273 = vmatpush.msra.mxu0 0.0
        %3274 = vmatpush.msra.mxu0 0.0
        %3275 = vmatpush.msra.mxu0 0.0
        %3276 = vmatpush.msra.mxu0 0.0
        %3277 = vmatpush.msra.mxu0 0.0
        %3278 = vmatpush.msra.mxu0 0.0
        %3279 = vmatpush.msra.mxu0 %v3259
        %3280 = vmatmul.f32.gmra.mxu0 %v3256
        %v3281 = vpop.f32.mrf.mxu0
        %v3282 = vadd.f32 0.0, %v3281
        %3283 = vdwg.mxu0
        %3284 = vmatpush.msra.mxu0 0.0
        %3285 = vmatpush.msra.mxu0 0.0
        %3286 = vmatpush.msra.mxu0 0.0
        %3287 = vmatpush.msra.mxu0 0.0
        %3288 = vmatpush.msra.mxu0 0.0
        %3289 = vmatpush.msra.mxu0 0.0
        %3290 = vmatpush.msra.mxu0 0.0
        %3291 = vmatpush.msra.mxu0 0.0
        %3292 = vmatpush.msra.mxu0 0.0
        %3293 = vmatpush.msra.mxu0 0.0
        %3294 = vmatpush.msra.mxu0 0.0
        %3295 = vmatpush.msra.mxu0 0.0
        %3296 = vmatpush.msra.mxu0 0.0
        %3297 = vmatpush.msra.mxu0 0.0
        %3298 = vmatpush.msra.mxu0 0.0
        %3299 = vmatpush.msra.mxu0 %v3262
        %3300 = vmatmul.f32.gmra.mxu0 %v3256
        %v3301 = vpop.f32.mrf.mxu0
        %v3302 = vadd.f32 0.0, %v3301
        %3303 = vdwg.mxu0
        %v3304 = vadd.f32 %v3171, %v3282
        %v3305 = vadd.f32 %v3172, %v3302
        %3306 = vmatpush.msra.mxu0 %v1673
        %3307 = vmatpush.msra.mxu0 %v1671
        %3308 = vmatpush.msra.mxu0 %v1669
        %3309 = vmatpush.msra.mxu0 %v1667
        %3310 = vmatpush.msra.mxu0 %v1665
        %3311 = vmatpush.msra.mxu0 %v1663
        %3312 = vmatpush.msra.mxu0 %v1661
        %3313 = vmatpush.msra.mxu0 %v1659
        %3314 = vmatpush.msra.mxu0 %v1657
        %3315 = vmatpush.msra.mxu0 %v1655
        %3316 = vmatpush.msra.mxu0 %v1653
        %3317 = vmatpush.msra.mxu0 %v1651
        %3318 = vmatpush.msra.mxu0 %v1649
        %3319 = vmatpush.msra.mxu0 %v1647
        %3320 = vmatpush.msra.mxu0 %v1645
        %3321 = vmatpush.msra.mxu0 %v1643
        %3322 = vmatmul.f32.gmra.mxu0 %v2777
        %v3323 = vpop.f32.mrf.mxu0
        %v3324 = vadd.f32 0.0, %v3323
        %3325 = vdwg.mxu0
        %3326 = vmatpush.msra.mxu0 %v1705
        %3327 = vmatpush.msra.mxu0 %v1703
        %3328 = vmatpush.msra.mxu0 %v1701
        %3329 = vmatpush.msra.mxu0 %v1699
        %3330 = vmatpush.msra.mxu0 %v1697
        %3331 = vmatpush.msra.mxu0 %v1695
        %3332 = vmatpush.msra.mxu0 %v1693
        %3333 = vmatpush.msra.mxu0 %v1691
        %3334 = vmatpush.msra.mxu0 %v1689
        %3335 = vmatpush.msra.mxu0 %v1687
        %3336 = vmatpush.msra.mxu0 %v1685
        %3337 = vmatpush.msra.mxu0 %v1683
        %3338 = vmatpush.msra.mxu0 %v1681
        %3339 = vmatpush.msra.mxu0 %v1679
        %3340 = vmatpush.msra.mxu0 %v1677
        %3341 = vmatpush.msra.mxu0 %v1675
        %3342 = vmatmul.f32.gmra.mxu0 %v2778
        %v3343 = vpop.f32.mrf.mxu0
        %v3344 = vadd.f32 %v3324, %v3343
        %3345 = vdwg.mxu0
        %3346 = vmatpush.msra.mxu0 %v1674
        %3347 = vmatpush.msra.mxu0 %v1672
        %3348 = vmatpush.msra.mxu0 %v1670
        %3349 = vmatpush.msra.mxu0 %v1668
        %3350 = vmatpush.msra.mxu0 %v1666
        %3351 = vmatpush.msra.mxu0 %v1664
        %3352 = vmatpush.msra.mxu0 %v1662
        %3353 = vmatpush.msra.mxu0 %v1660
        %3354 = vmatpush.msra.mxu0 %v1658
        %3355 = vmatpush.msra.mxu0 %v1656
        %3356 = vmatpush.msra.mxu0 %v1654
        %3357 = vmatpush.msra.mxu0 %v1652
        %3358 = vmatpush.msra.mxu0 %v1650
        %3359 = vmatpush.msra.mxu0 %v1648
        %3360 = vmatpush.msra.mxu0 %v1646
        %3361 = vmatpush.msra.mxu0 %v1644
        %3362 = vmatmul.f32.gmra.mxu0 %v2777
        %v3363 = vpop.f32.mrf.mxu0
        %v3364 = vadd.f32 0.0, %v3363
        %3365 = vdwg.mxu0
        %3366 = vmatpush.msra.mxu0 %v1706
        %3367 = vmatpush.msra.mxu0 %v1704
        %3368 = vmatpush.msra.mxu0 %v1702
        %3369 = vmatpush.msra.mxu0 %v1700
        %3370 = vmatpush.msra.mxu0 %v1698
        %3371 = vmatpush.msra.mxu0 %v1696
        %3372 = vmatpush.msra.mxu0 %v1694
        %3373 = vmatpush.msra.mxu0 %v1692
        %3374 = vmatpush.msra.mxu0 %v1690
        %3375 = vmatpush.msra.mxu0 %v1688
        %3376 = vmatpush.msra.mxu0 %v1686
        %3377 = vmatpush.msra.mxu0 %v1684
        %3378 = vmatpush.msra.mxu0 %v1682
        %3379 = vmatpush.msra.mxu0 %v1680
        %3380 = vmatpush.msra.mxu0 %v1678
        %3381 = vmatpush.msra.mxu0 %v1676
        %3382 = vmatmul.f32.gmra.mxu0 %v2778
        %v3383 = vpop.f32.mrf.mxu0
        %v3384 = vadd.f32 %v3364, %v3383
        %3385 = vdwg.mxu0
        %s3386 = scalar_lea.vmem %s13, 16
        %v3387 = vld [vmem:[%s3386] sm:$0xf]
        %v3389 = vsel %vm1146, %v3387, 0
        %v3392 = vsel %vm1150, %v3344, 0
        %v3395 = vsel %vm1150, %v3384, 0
        %3397 = vmatpush.msra.mxu0 0.0
        %3398 = vmatpush.msra.mxu0 0.0
        %3399 = vmatpush.msra.mxu0 0.0
        %3400 = vmatpush.msra.mxu0 0.0
        %3401 = vmatpush.msra.mxu0 0.0
        %3402 = vmatpush.msra.mxu0 0.0
        %3403 = vmatpush.msra.mxu0 0.0
        %3404 = vmatpush.msra.mxu0 0.0
        %3405 = vmatpush.msra.mxu0 0.0
        %3406 = vmatpush.msra.mxu0 0.0
        %3407 = vmatpush.msra.mxu0 0.0
        %3408 = vmatpush.msra.mxu0 0.0
        %3409 = vmatpush.msra.mxu0 0.0
        %3410 = vmatpush.msra.mxu0 0.0
        %3411 = vmatpush.msra.mxu0 0.0
        %3412 = vmatpush.msra.mxu0 %v3392
        %3413 = vmatmul.f32.gmra.mxu0 %v3389
        %v3414 = vpop.f32.mrf.mxu0
        %v3415 = vadd.f32 0.0, %v3414
        %3416 = vdwg.mxu0
        %3417 = vmatpush.msra.mxu0 0.0
        %3418 = vmatpush.msra.mxu0 0.0
        %3419 = vmatpush.msra.mxu0 0.0
        %3420 = vmatpush.msra.mxu0 0.0
        %3421 = vmatpush.msra.mxu0 0.0
        %3422 = vmatpush.msra.mxu0 0.0
        %3423 = vmatpush.msra.mxu0 0.0
        %3424 = vmatpush.msra.mxu0 0.0
        %3425 = vmatpush.msra.mxu0 0.0
        %3426 = vmatpush.msra.mxu0 0.0
        %3427 = vmatpush.msra.mxu0 0.0
        %3428 = vmatpush.msra.mxu0 0.0
        %3429 = vmatpush.msra.mxu0 0.0
        %3430 = vmatpush.msra.mxu0 0.0
        %3431 = vmatpush.msra.mxu0 0.0
        %3432 = vmatpush.msra.mxu0 %v3395
        %3433 = vmatmul.f32.gmra.mxu0 %v3389
        %v3434 = vpop.f32.mrf.mxu0
        %v3435 = vadd.f32 0.0, %v3434
        %3436 = vdwg.mxu0
        %v3437 = vadd.f32 %v3304, %v3415
        %v3438 = vadd.f32 %v3305, %v3435
        %3439 = vmatpush.msra.mxu0 %v1871
        %3440 = vmatpush.msra.mxu0 %v1869
        %3441 = vmatpush.msra.mxu0 %v1867
        %3442 = vmatpush.msra.mxu0 %v1865
        %3443 = vmatpush.msra.mxu0 %v1863
        %3444 = vmatpush.msra.mxu0 %v1861
        %3445 = vmatpush.msra.mxu0 %v1859
        %3446 = vmatpush.msra.mxu0 %v1857
        %3447 = vmatpush.msra.mxu0 %v1855
        %3448 = vmatpush.msra.mxu0 %v1853
        %3449 = vmatpush.msra.mxu0 %v1851
        %3450 = vmatpush.msra.mxu0 %v1849
        %3451 = vmatpush.msra.mxu0 %v1847
        %3452 = vmatpush.msra.mxu0 %v1845
        %3453 = vmatpush.msra.mxu0 %v1843
        %3454 = vmatpush.msra.mxu0 %v1841
        %3455 = vmatmul.f32.gmra.mxu0 %v2777
        %v3456 = vpop.f32.mrf.mxu0
        %v3457 = vadd.f32 0.0, %v3456
        %3458 = vdwg.mxu0
        %3459 = vmatpush.msra.mxu0 %v1903
        %3460 = vmatpush.msra.mxu0 %v1901
        %3461 = vmatpush.msra.mxu0 %v1899
        %3462 = vmatpush.msra.mxu0 %v1897
        %3463 = vmatpush.msra.mxu0 %v1895
        %3464 = vmatpush.msra.mxu0 %v1893
        %3465 = vmatpush.msra.mxu0 %v1891
        %3466 = vmatpush.msra.mxu0 %v1889
        %3467 = vmatpush.msra.mxu0 %v1887
        %3468 = vmatpush.msra.mxu0 %v1885
        %3469 = vmatpush.msra.mxu0 %v1883
        %3470 = vmatpush.msra.mxu0 %v1881
        %3471 = vmatpush.msra.mxu0 %v1879
        %3472 = vmatpush.msra.mxu0 %v1877
        %3473 = vmatpush.msra.mxu0 %v1875
        %3474 = vmatpush.msra.mxu0 %v1873
        %3475 = vmatmul.f32.gmra.mxu0 %v2778
        %v3476 = vpop.f32.mrf.mxu0
        %v3477 = vadd.f32 %v3457, %v3476
        %3478 = vdwg.mxu0
        %3479 = vmatpush.msra.mxu0 %v1872
        %3480 = vmatpush.msra.mxu0 %v1870
        %3481 = vmatpush.msra.mxu0 %v1868
        %3482 = vmatpush.msra.mxu0 %v1866
        %3483 = vmatpush.msra.mxu0 %v1864
        %3484 = vmatpush.msra.mxu0 %v1862
        %3485 = vmatpush.msra.mxu0 %v1860
        %3486 = vmatpush.msra.mxu0 %v1858
        %3487 = vmatpush.msra.mxu0 %v1856
        %3488 = vmatpush.msra.mxu0 %v1854
        %3489 = vmatpush.msra.mxu0 %v1852
        %3490 = vmatpush.msra.mxu0 %v1850
        %3491 = vmatpush.msra.mxu0 %v1848
        %3492 = vmatpush.msra.mxu0 %v1846
        %3493 = vmatpush.msra.mxu0 %v1844
        %3494 = vmatpush.msra.mxu0 %v1842
        %3495 = vmatmul.f32.gmra.mxu0 %v2777
        %v3496 = vpop.f32.mrf.mxu0
        %v3497 = vadd.f32 0.0, %v3496
        %3498 = vdwg.mxu0
        %3499 = vmatpush.msra.mxu0 %v1904
        %3500 = vmatpush.msra.mxu0 %v1902
        %3501 = vmatpush.msra.mxu0 %v1900
        %3502 = vmatpush.msra.mxu0 %v1898
        %3503 = vmatpush.msra.mxu0 %v1896
        %3504 = vmatpush.msra.mxu0 %v1894
        %3505 = vmatpush.msra.mxu0 %v1892
        %3506 = vmatpush.msra.mxu0 %v1890
        %3507 = vmatpush.msra.mxu0 %v1888
        %3508 = vmatpush.msra.mxu0 %v1886
        %3509 = vmatpush.msra.mxu0 %v1884
        %3510 = vmatpush.msra.mxu0 %v1882
        %3511 = vmatpush.msra.mxu0 %v1880
        %3512 = vmatpush.msra.mxu0 %v1878
        %3513 = vmatpush.msra.mxu0 %v1876
        %3514 = vmatpush.msra.mxu0 %v1874
        %3515 = vmatmul.f32.gmra.mxu0 %v2778
        %v3516 = vpop.f32.mrf.mxu0
        %v3517 = vadd.f32 %v3497, %v3516
        %3518 = vdwg.mxu0
        %s3519 = scalar_lea.vmem %s13, 20
        %v3520 = vld [vmem:[%s3519] sm:$0xf]
        %v3522 = vsel %vm1146, %v3520, 0
        %v3525 = vsel %vm1150, %v3477, 0
        %v3528 = vsel %vm1150, %v3517, 0
        %3530 = vmatpush.msra.mxu0 0.0
        %3531 = vmatpush.msra.mxu0 0.0
        %3532 = vmatpush.msra.mxu0 0.0
        %3533 = vmatpush.msra.mxu0 0.0
        %3534 = vmatpush.msra.mxu0 0.0
        %3535 = vmatpush.msra.mxu0 0.0
        %3536 = vmatpush.msra.mxu0 0.0
        %3537 = vmatpush.msra.mxu0 0.0
        %3538 = vmatpush.msra.mxu0 0.0
        %3539 = vmatpush.msra.mxu0 0.0
        %3540 = vmatpush.msra.mxu0 0.0
        %3541 = vmatpush.msra.mxu0 0.0
        %3542 = vmatpush.msra.mxu0 0.0
        %3543 = vmatpush.msra.mxu0 0.0
        %3544 = vmatpush.msra.mxu0 0.0
        %3545 = vmatpush.msra.mxu0 %v3525
        %3546 = vmatmul.f32.gmra.mxu0 %v3522
        %v3547 = vpop.f32.mrf.mxu0
        %v3548 = vadd.f32 0.0, %v3547
        %3549 = vdwg.mxu0
        %3550 = vmatpush.msra.mxu0 0.0
        %3551 = vmatpush.msra.mxu0 0.0
        %3552 = vmatpush.msra.mxu0 0.0
        %3553 = vmatpush.msra.mxu0 0.0
        %3554 = vmatpush.msra.mxu0 0.0
        %3555 = vmatpush.msra.mxu0 0.0
        %3556 = vmatpush.msra.mxu0 0.0
        %3557 = vmatpush.msra.mxu0 0.0
        %3558 = vmatpush.msra.mxu0 0.0
        %3559 = vmatpush.msra.mxu0 0.0
        %3560 = vmatpush.msra.mxu0 0.0
        %3561 = vmatpush.msra.mxu0 0.0
        %3562 = vmatpush.msra.mxu0 0.0
        %3563 = vmatpush.msra.mxu0 0.0
        %3564 = vmatpush.msra.mxu0 0.0
        %3565 = vmatpush.msra.mxu0 %v3528
        %3566 = vmatmul.f32.gmra.mxu0 %v3522
        %v3567 = vpop.f32.mrf.mxu0
        %v3568 = vadd.f32 0.0, %v3567
        %3569 = vdwg.mxu0
        %v3570 = vadd.f32 %v3437, %v3548
        %v3571 = vadd.f32 %v3438, %v3568
        %3572 = vmatpush.msra.mxu0 %v2069
        %3573 = vmatpush.msra.mxu0 %v2067
        %3574 = vmatpush.msra.mxu0 %v2065
        %3575 = vmatpush.msra.mxu0 %v2063
        %3576 = vmatpush.msra.mxu0 %v2061
        %3577 = vmatpush.msra.mxu0 %v2059
        %3578 = vmatpush.msra.mxu0 %v2057
        %3579 = vmatpush.msra.mxu0 %v2055
        %3580 = vmatpush.msra.mxu0 %v2053
        %3581 = vmatpush.msra.mxu0 %v2051
        %3582 = vmatpush.msra.mxu0 %v2049
        %3583 = vmatpush.msra.mxu0 %v2047
        %3584 = vmatpush.msra.mxu0 %v2045
        %3585 = vmatpush.msra.mxu0 %v2043
        %3586 = vmatpush.msra.mxu0 %v2041
        %3587 = vmatpush.msra.mxu0 %v2039
        %3588 = vmatmul.f32.gmra.mxu0 %v2777
        %v3589 = vpop.f32.mrf.mxu0
        %v3590 = vadd.f32 0.0, %v3589
        %3591 = vdwg.mxu0
        %3592 = vmatpush.msra.mxu0 %v2101
        %3593 = vmatpush.msra.mxu0 %v2099
        %3594 = vmatpush.msra.mxu0 %v2097
        %3595 = vmatpush.msra.mxu0 %v2095
        %3596 = vmatpush.msra.mxu0 %v2093
        %3597 = vmatpush.msra.mxu0 %v2091
        %3598 = vmatpush.msra.mxu0 %v2089
        %3599 = vmatpush.msra.mxu0 %v2087
        %3600 = vmatpush.msra.mxu0 %v2085
        %3601 = vmatpush.msra.mxu0 %v2083
        %3602 = vmatpush.msra.mxu0 %v2081
        %3603 = vmatpush.msra.mxu0 %v2079
        %3604 = vmatpush.msra.mxu0 %v2077
        %3605 = vmatpush.msra.mxu0 %v2075
        %3606 = vmatpush.msra.mxu0 %v2073
        %3607 = vmatpush.msra.mxu0 %v2071
        %3608 = vmatmul.f32.gmra.mxu0 %v2778
        %v3609 = vpop.f32.mrf.mxu0
        %v3610 = vadd.f32 %v3590, %v3609
        %3611 = vdwg.mxu0
        %3612 = vmatpush.msra.mxu0 %v2070
        %3613 = vmatpush.msra.mxu0 %v2068
        %3614 = vmatpush.msra.mxu0 %v2066
        %3615 = vmatpush.msra.mxu0 %v2064
        %3616 = vmatpush.msra.mxu0 %v2062
        %3617 = vmatpush.msra.mxu0 %v2060
        %3618 = vmatpush.msra.mxu0 %v2058
        %3619 = vmatpush.msra.mxu0 %v2056
        %3620 = vmatpush.msra.mxu0 %v2054
        %3621 = vmatpush.msra.mxu0 %v2052
        %3622 = vmatpush.msra.mxu0 %v2050
        %3623 = vmatpush.msra.mxu0 %v2048
        %3624 = vmatpush.msra.mxu0 %v2046
        %3625 = vmatpush.msra.mxu0 %v2044
        %3626 = vmatpush.msra.mxu0 %v2042
        %3627 = vmatpush.msra.mxu0 %v2040
        %3628 = vmatmul.f32.gmra.mxu0 %v2777
        %v3629 = vpop.f32.mrf.mxu0
        %v3630 = vadd.f32 0.0, %v3629
        %3631 = vdwg.mxu0
        %3632 = vmatpush.msra.mxu0 %v2102
        %3633 = vmatpush.msra.mxu0 %v2100
        %3634 = vmatpush.msra.mxu0 %v2098
        %3635 = vmatpush.msra.mxu0 %v2096
        %3636 = vmatpush.msra.mxu0 %v2094
        %3637 = vmatpush.msra.mxu0 %v2092
        %3638 = vmatpush.msra.mxu0 %v2090
        %3639 = vmatpush.msra.mxu0 %v2088
        %3640 = vmatpush.msra.mxu0 %v2086
        %3641 = vmatpush.msra.mxu0 %v2084
        %3642 = vmatpush.msra.mxu0 %v2082
        %3643 = vmatpush.msra.mxu0 %v2080
        %3644 = vmatpush.msra.mxu0 %v2078
        %3645 = vmatpush.msra.mxu0 %v2076
        %3646 = vmatpush.msra.mxu0 %v2074
        %3647 = vmatpush.msra.mxu0 %v2072
        %3648 = vmatmul.f32.gmra.mxu0 %v2778
        %v3649 = vpop.f32.mrf.mxu0
        %v3650 = vadd.f32 %v3630, %v3649
        %3651 = vdwg.mxu0
        %s3652 = scalar_lea.vmem %s13, 24
        %v3653 = vld [vmem:[%s3652] sm:$0xf]
        %v3655 = vsel %vm1146, %v3653, 0
        %v3658 = vsel %vm1150, %v3610, 0
        %v3661 = vsel %vm1150, %v3650, 0
        %3663 = vmatpush.msra.mxu0 0.0
        %3664 = vmatpush.msra.mxu0 0.0
        %3665 = vmatpush.msra.mxu0 0.0
        %3666 = vmatpush.msra.mxu0 0.0
        %3667 = vmatpush.msra.mxu0 0.0
        %3668 = vmatpush.msra.mxu0 0.0
        %3669 = vmatpush.msra.mxu0 0.0
        %3670 = vmatpush.msra.mxu0 0.0
        %3671 = vmatpush.msra.mxu0 0.0
        %3672 = vmatpush.msra.mxu0 0.0
        %3673 = vmatpush.msra.mxu0 0.0
        %3674 = vmatpush.msra.mxu0 0.0
        %3675 = vmatpush.msra.mxu0 0.0
        %3676 = vmatpush.msra.mxu0 0.0
        %3677 = vmatpush.msra.mxu0 0.0
        %3678 = vmatpush.msra.mxu0 %v3658
        %3679 = vmatmul.f32.gmra.mxu0 %v3655
        %v3680 = vpop.f32.mrf.mxu0
        %v3681 = vadd.f32 0.0, %v3680
        %3682 = vdwg.mxu0
        %3683 = vmatpush.msra.mxu0 0.0
        %3684 = vmatpush.msra.mxu0 0.0
        %3685 = vmatpush.msra.mxu0 0.0
        %3686 = vmatpush.msra.mxu0 0.0
        %3687 = vmatpush.msra.mxu0 0.0
        %3688 = vmatpush.msra.mxu0 0.0
        %3689 = vmatpush.msra.mxu0 0.0
        %3690 = vmatpush.msra.mxu0 0.0
        %3691 = vmatpush.msra.mxu0 0.0
        %3692 = vmatpush.msra.mxu0 0.0
        %3693 = vmatpush.msra.mxu0 0.0
        %3694 = vmatpush.msra.mxu0 0.0
        %3695 = vmatpush.msra.mxu0 0.0
        %3696 = vmatpush.msra.mxu0 0.0
        %3697 = vmatpush.msra.mxu0 0.0
        %3698 = vmatpush.msra.mxu0 %v3661
        %3699 = vmatmul.f32.gmra.mxu0 %v3655
        %v3700 = vpop.f32.mrf.mxu0
        %v3701 = vadd.f32 0.0, %v3700
        %3702 = vdwg.mxu0
        %v3703 = vadd.f32 %v3570, %v3681
        %v3704 = vadd.f32 %v3571, %v3701
        %3705 = vmatpush.msra.mxu0 %v2267
        %3706 = vmatpush.msra.mxu0 %v2265
        %3707 = vmatpush.msra.mxu0 %v2263
        %3708 = vmatpush.msra.mxu0 %v2261
        %3709 = vmatpush.msra.mxu0 %v2259
        %3710 = vmatpush.msra.mxu0 %v2257
        %3711 = vmatpush.msra.mxu0 %v2255
        %3712 = vmatpush.msra.mxu0 %v2253
        %3713 = vmatpush.msra.mxu0 %v2251
        %3714 = vmatpush.msra.mxu0 %v2249
        %3715 = vmatpush.msra.mxu0 %v2247
        %3716 = vmatpush.msra.mxu0 %v2245
        %3717 = vmatpush.msra.mxu0 %v2243
        %3718 = vmatpush.msra.mxu0 %v2241
        %3719 = vmatpush.msra.mxu0 %v2239
        %3720 = vmatpush.msra.mxu0 %v2237
        %3721 = vmatmul.f32.gmra.mxu0 %v2777
        %v3722 = vpop.f32.mrf.mxu0
        %v3723 = vadd.f32 0.0, %v3722
        %3724 = vdwg.mxu0
        %3725 = vmatpush.msra.mxu0 %v2299
        %3726 = vmatpush.msra.mxu0 %v2297
        %3727 = vmatpush.msra.mxu0 %v2295
        %3728 = vmatpush.msra.mxu0 %v2293
        %3729 = vmatpush.msra.mxu0 %v2291
        %3730 = vmatpush.msra.mxu0 %v2289
        %3731 = vmatpush.msra.mxu0 %v2287
        %3732 = vmatpush.msra.mxu0 %v2285
        %3733 = vmatpush.msra.mxu0 %v2283
        %3734 = vmatpush.msra.mxu0 %v2281
        %3735 = vmatpush.msra.mxu0 %v2279
        %3736 = vmatpush.msra.mxu0 %v2277
        %3737 = vmatpush.msra.mxu0 %v2275
        %3738 = vmatpush.msra.mxu0 %v2273
        %3739 = vmatpush.msra.mxu0 %v2271
        %3740 = vmatpush.msra.mxu0 %v2269
        %3741 = vmatmul.f32.gmra.mxu0 %v2778
        %v3742 = vpop.f32.mrf.mxu0
        %v3743 = vadd.f32 %v3723, %v3742
        %3744 = vdwg.mxu0
        %3745 = vmatpush.msra.mxu0 %v2268
        %3746 = vmatpush.msra.mxu0 %v2266
        %3747 = vmatpush.msra.mxu0 %v2264
        %3748 = vmatpush.msra.mxu0 %v2262
        %3749 = vmatpush.msra.mxu0 %v2260
        %3750 = vmatpush.msra.mxu0 %v2258
        %3751 = vmatpush.msra.mxu0 %v2256
        %3752 = vmatpush.msra.mxu0 %v2254
        %3753 = vmatpush.msra.mxu0 %v2252
        %3754 = vmatpush.msra.mxu0 %v2250
        %3755 = vmatpush.msra.mxu0 %v2248
        %3756 = vmatpush.msra.mxu0 %v2246
        %3757 = vmatpush.msra.mxu0 %v2244
        %3758 = vmatpush.msra.mxu0 %v2242
        %3759 = vmatpush.msra.mxu0 %v2240
        %3760 = vmatpush.msra.mxu0 %v2238
        %3761 = vmatmul.f32.gmra.mxu0 %v2777
        %v3762 = vpop.f32.mrf.mxu0
        %v3763 = vadd.f32 0.0, %v3762
        %3764 = vdwg.mxu0
        %3765 = vmatpush.msra.mxu0 %v2300
        %3766 = vmatpush.msra.mxu0 %v2298
        %3767 = vmatpush.msra.mxu0 %v2296
        %3768 = vmatpush.msra.mxu0 %v2294
        %3769 = vmatpush.msra.mxu0 %v2292
        %3770 = vmatpush.msra.mxu0 %v2290
        %3771 = vmatpush.msra.mxu0 %v2288
        %3772 = vmatpush.msra.mxu0 %v2286
        %3773 = vmatpush.msra.mxu0 %v2284
        %3774 = vmatpush.msra.mxu0 %v2282
        %3775 = vmatpush.msra.mxu0 %v2280
        %3776 = vmatpush.msra.mxu0 %v2278
        %3777 = vmatpush.msra.mxu0 %v2276
        %3778 = vmatpush.msra.mxu0 %v2274
        %3779 = vmatpush.msra.mxu0 %v2272
        %3780 = vmatpush.msra.mxu0 %v2270
        %3781 = vmatmul.f32.gmra.mxu0 %v2778
        %v3782 = vpop.f32.mrf.mxu0
        %v3783 = vadd.f32 %v3763, %v3782
        %3784 = vdwg.mxu0
        %s3785 = scalar_lea.vmem %s13, 28
        %v3786 = vld [vmem:[%s3785] sm:$0xf]
        %v3788 = vsel %vm1146, %v3786, 0
        %v3791 = vsel %vm1150, %v3743, 0
        %v3794 = vsel %vm1150, %v3783, 0
        %3796 = vmatpush.msra.mxu0 0.0
        %3797 = vmatpush.msra.mxu0 0.0
        %3798 = vmatpush.msra.mxu0 0.0
        %3799 = vmatpush.msra.mxu0 0.0
        %3800 = vmatpush.msra.mxu0 0.0
        %3801 = vmatpush.msra.mxu0 0.0
        %3802 = vmatpush.msra.mxu0 0.0
        %3803 = vmatpush.msra.mxu0 0.0
        %3804 = vmatpush.msra.mxu0 0.0
        %3805 = vmatpush.msra.mxu0 0.0
        %3806 = vmatpush.msra.mxu0 0.0
        %3807 = vmatpush.msra.mxu0 0.0
        %3808 = vmatpush.msra.mxu0 0.0
        %3809 = vmatpush.msra.mxu0 0.0
        %3810 = vmatpush.msra.mxu0 0.0
        %3811 = vmatpush.msra.mxu0 %v3791
        %3812 = vmatmul.f32.gmra.mxu0 %v3788
        %v3813 = vpop.f32.mrf.mxu0
        %v3814 = vadd.f32 0.0, %v3813
        %3815 = vdwg.mxu0
        %3816 = vmatpush.msra.mxu0 0.0
        %3817 = vmatpush.msra.mxu0 0.0
        %3818 = vmatpush.msra.mxu0 0.0
        %3819 = vmatpush.msra.mxu0 0.0
        %3820 = vmatpush.msra.mxu0 0.0
        %3821 = vmatpush.msra.mxu0 0.0
        %3822 = vmatpush.msra.mxu0 0.0
        %3823 = vmatpush.msra.mxu0 0.0
        %3824 = vmatpush.msra.mxu0 0.0
        %3825 = vmatpush.msra.mxu0 0.0
        %3826 = vmatpush.msra.mxu0 0.0
        %3827 = vmatpush.msra.mxu0 0.0
        %3828 = vmatpush.msra.mxu0 0.0
        %3829 = vmatpush.msra.mxu0 0.0
        %3830 = vmatpush.msra.mxu0 0.0
        %3831 = vmatpush.msra.mxu0 %v3794
        %3832 = vmatmul.f32.gmra.mxu0 %v3788
        %v3833 = vpop.f32.mrf.mxu0
        %v3834 = vadd.f32 0.0, %v3833
        %3835 = vdwg.mxu0
        %v3836 = vadd.f32 %v3703, %v3814
        %v3837 = vadd.f32 %v3704, %v3834
        %3838 = vmatpush.msra.mxu0 %v2465
        %3839 = vmatpush.msra.mxu0 %v2463
        %3840 = vmatpush.msra.mxu0 %v2461
        %3841 = vmatpush.msra.mxu0 %v2459
        %3842 = vmatpush.msra.mxu0 %v2457
        %3843 = vmatpush.msra.mxu0 %v2455
        %3844 = vmatpush.msra.mxu0 %v2453
        %3845 = vmatpush.msra.mxu0 %v2451
        %3846 = vmatpush.msra.mxu0 %v2449
        %3847 = vmatpush.msra.mxu0 %v2447
        %3848 = vmatpush.msra.mxu0 %v2445
        %3849 = vmatpush.msra.mxu0 %v2443
        %3850 = vmatpush.msra.mxu0 %v2441
        %3851 = vmatpush.msra.mxu0 %v2439
        %3852 = vmatpush.msra.mxu0 %v2437
        %3853 = vmatpush.msra.mxu0 %v2435
        %3854 = vmatmul.f32.gmra.mxu0 %v2777
        %v3855 = vpop.f32.mrf.mxu0
        %v3856 = vadd.f32 0.0, %v3855
        %3857 = vdwg.mxu0
        %3858 = vmatpush.msra.mxu0 %v2497
        %3859 = vmatpush.msra.mxu0 %v2495
        %3860 = vmatpush.msra.mxu0 %v2493
        %3861 = vmatpush.msra.mxu0 %v2491
        %3862 = vmatpush.msra.mxu0 %v2489
        %3863 = vmatpush.msra.mxu0 %v2487
        %3864 = vmatpush.msra.mxu0 %v2485
        %3865 = vmatpush.msra.mxu0 %v2483
        %3866 = vmatpush.msra.mxu0 %v2481
        %3867 = vmatpush.msra.mxu0 %v2479
        %3868 = vmatpush.msra.mxu0 %v2477
        %3869 = vmatpush.msra.mxu0 %v2475
        %3870 = vmatpush.msra.mxu0 %v2473
        %3871 = vmatpush.msra.mxu0 %v2471
        %3872 = vmatpush.msra.mxu0 %v2469
        %3873 = vmatpush.msra.mxu0 %v2467
        %3874 = vmatmul.f32.gmra.mxu0 %v2778
        %v3875 = vpop.f32.mrf.mxu0
        %v3876 = vadd.f32 %v3856, %v3875
        %3877 = vdwg.mxu0
        %3878 = vmatpush.msra.mxu0 %v2466
        %3879 = vmatpush.msra.mxu0 %v2464
        %3880 = vmatpush.msra.mxu0 %v2462
        %3881 = vmatpush.msra.mxu0 %v2460
        %3882 = vmatpush.msra.mxu0 %v2458
        %3883 = vmatpush.msra.mxu0 %v2456
        %3884 = vmatpush.msra.mxu0 %v2454
        %3885 = vmatpush.msra.mxu0 %v2452
        %3886 = vmatpush.msra.mxu0 %v2450
        %3887 = vmatpush.msra.mxu0 %v2448
        %3888 = vmatpush.msra.mxu0 %v2446
        %3889 = vmatpush.msra.mxu0 %v2444
        %3890 = vmatpush.msra.mxu0 %v2442
        %3891 = vmatpush.msra.mxu0 %v2440
        %3892 = vmatpush.msra.mxu0 %v2438
        %3893 = vmatpush.msra.mxu0 %v2436
        %3894 = vmatmul.f32.gmra.mxu0 %v2777
        %v3895 = vpop.f32.mrf.mxu0
        %v3896 = vadd.f32 0.0, %v3895
        %3897 = vdwg.mxu0
        %3898 = vmatpush.msra.mxu0 %v2498
        %3899 = vmatpush.msra.mxu0 %v2496
        %3900 = vmatpush.msra.mxu0 %v2494
        %3901 = vmatpush.msra.mxu0 %v2492
        %3902 = vmatpush.msra.mxu0 %v2490
        %3903 = vmatpush.msra.mxu0 %v2488
        %3904 = vmatpush.msra.mxu0 %v2486
        %3905 = vmatpush.msra.mxu0 %v2484
        %3906 = vmatpush.msra.mxu0 %v2482
        %3907 = vmatpush.msra.mxu0 %v2480
        %3908 = vmatpush.msra.mxu0 %v2478
        %3909 = vmatpush.msra.mxu0 %v2476
        %3910 = vmatpush.msra.mxu0 %v2474
        %3911 = vmatpush.msra.mxu0 %v2472
        %3912 = vmatpush.msra.mxu0 %v2470
        %3913 = vmatpush.msra.mxu0 %v2468
        %3914 = vmatmul.f32.gmra.mxu0 %v2778
        %v3915 = vpop.f32.mrf.mxu0
        %v3916 = vadd.f32 %v3896, %v3915
        %3917 = vdwg.mxu0
        %s3918 = scalar_lea.vmem %s13, 32
        %v3919 = vld [vmem:[%s3918] sm:$0xf]
        %v3921 = vsel %vm1146, %v3919, 0
        %v3924 = vsel %vm1150, %v3876, 0
        %v3927 = vsel %vm1150, %v3916, 0
        %3929 = vmatpush.msra.mxu0 0.0
        %3930 = vmatpush.msra.mxu0 0.0
        %3931 = vmatpush.msra.mxu0 0.0
        %3932 = vmatpush.msra.mxu0 0.0
        %3933 = vmatpush.msra.mxu0 0.0
        %3934 = vmatpush.msra.mxu0 0.0
        %3935 = vmatpush.msra.mxu0 0.0
        %3936 = vmatpush.msra.mxu0 0.0
        %3937 = vmatpush.msra.mxu0 0.0
        %3938 = vmatpush.msra.mxu0 0.0
        %3939 = vmatpush.msra.mxu0 0.0
        %3940 = vmatpush.msra.mxu0 0.0
        %3941 = vmatpush.msra.mxu0 0.0
        %3942 = vmatpush.msra.mxu0 0.0
        %3943 = vmatpush.msra.mxu0 0.0
        %3944 = vmatpush.msra.mxu0 %v3924
        %3945 = vmatmul.f32.gmra.mxu0 %v3921
        %v3946 = vpop.f32.mrf.mxu0
        %v3947 = vadd.f32 0.0, %v3946
        %3948 = vdwg.mxu0
        %3949 = vmatpush.msra.mxu0 0.0
        %3950 = vmatpush.msra.mxu0 0.0
        %3951 = vmatpush.msra.mxu0 0.0
        %3952 = vmatpush.msra.mxu0 0.0
        %3953 = vmatpush.msra.mxu0 0.0
        %3954 = vmatpush.msra.mxu0 0.0
        %3955 = vmatpush.msra.mxu0 0.0
        %3956 = vmatpush.msra.mxu0 0.0
        %3957 = vmatpush.msra.mxu0 0.0
        %3958 = vmatpush.msra.mxu0 0.0
        %3959 = vmatpush.msra.mxu0 0.0
        %3960 = vmatpush.msra.mxu0 0.0
        %3961 = vmatpush.msra.mxu0 0.0
        %3962 = vmatpush.msra.mxu0 0.0
        %3963 = vmatpush.msra.mxu0 0.0
        %3964 = vmatpush.msra.mxu0 %v3927
        %3965 = vmatmul.f32.gmra.mxu0 %v3921
        %v3966 = vpop.f32.mrf.mxu0
        %v3967 = vadd.f32 0.0, %v3966
        %3968 = vdwg.mxu0
        %v3969 = vadd.f32 %v3836, %v3947
        %v3970 = vadd.f32 %v3837, %v3967
        %v3971 = vld [vmem:[%s14] sm:$0xf]
        %3973 = vset.pattern.permute.xlu0 0
        %3974 = vperm.xlu0 %3973, %v3971
        %v3975 = vpop.permute.xlu0 %3974
        %v3977 = vadd.f32 %v3969, %v3975
        %v3978 = vadd.f32 %v3970, %v3975
        %v3979 = vmax.f32 %v3977, 0.0
        %v3980 = vmax.f32 %v3978, 0.0
        %3982 = vset.pattern.permute.xlu0 0
        %3983 = vperm.xlu0 %3982, %v2726
        %v3984 = vpop.permute.xlu0 %3983
        %3987 = vset.pattern.permute.xlu0 0
        %3988 = vperm.xlu0 %3987, %v2727
        %v3989 = vpop.permute.xlu0 %3988
        %v3992 = vsel %vm1146, %v2724, 0
        %v3995 = vsel %vm1146, %v2725, 0
        %v3998 = vsel %vm1150, %v3979, 0
        %v4001 = vsel %vm1150, %v3980, 0
        %4003 = vmatpush.msra.mxu0 0.0
        %4004 = vmatpush.msra.mxu0 0.0
        %4005 = vmatpush.msra.mxu0 0.0
        %4006 = vmatpush.msra.mxu0 0.0
        %4007 = vmatpush.msra.mxu0 0.0
        %4008 = vmatpush.msra.mxu0 0.0
        %4009 = vmatpush.msra.mxu0 0.0
        %4010 = vmatpush.msra.mxu0 0.0
        %4011 = vmatpush.msra.mxu0 0.0
        %4012 = vmatpush.msra.mxu0 0.0
        %4013 = vmatpush.msra.mxu0 0.0
        %4014 = vmatpush.msra.mxu0 0.0
        %4015 = vmatpush.msra.mxu0 0.0
        %4016 = vmatpush.msra.mxu0 0.0
        %4017 = vmatpush.msra.mxu0 0.0
        %4018 = vmatpush.msra.mxu0 %v3998
        %4019 = vmatmul.f32.gmra.mxu0 %v3992
        %v4020 = vpop.f32.mrf.mxu0
        %v4021 = vadd.f32 %v3984, %v4020
        %4022 = vmatmul.f32.gmra.mxu0 %v3995
        %v4023 = vpop.f32.mrf.mxu0
        %v4024 = vadd.f32 %v3989, %v4023
        %4025 = vdwg.mxu0
        %4026 = vmatpush.msra.mxu0 0.0
        %4027 = vmatpush.msra.mxu0 0.0
        %4028 = vmatpush.msra.mxu0 0.0
        %4029 = vmatpush.msra.mxu0 0.0
        %4030 = vmatpush.msra.mxu0 0.0
        %4031 = vmatpush.msra.mxu0 0.0
        %4032 = vmatpush.msra.mxu0 0.0
        %4033 = vmatpush.msra.mxu0 0.0
        %4034 = vmatpush.msra.mxu0 0.0
        %4035 = vmatpush.msra.mxu0 0.0
        %4036 = vmatpush.msra.mxu0 0.0
        %4037 = vmatpush.msra.mxu0 0.0
        %4038 = vmatpush.msra.mxu0 0.0
        %4039 = vmatpush.msra.mxu0 0.0
        %4040 = vmatpush.msra.mxu0 0.0
        %4041 = vmatpush.msra.mxu0 %v4001
        %4042 = vmatmul.f32.gmra.mxu0 %v3992
        %v4043 = vpop.f32.mrf.mxu0
        %v4044 = vadd.f32 %v3984, %v4043
        %4045 = vmatmul.f32.gmra.mxu0 %v3995
        %v4046 = vpop.f32.mrf.mxu0
        %v4047 = vadd.f32 %v3989, %v4046
        %4048 = vdwg.mxu0
        %v4049 = vadd.f32 %v4021, %v2718
        %v4050 = vadd.f32 %v4044, %v2719
        %v4051 = vadd.f32 %v4024, %v2720
        %v4052 = vadd.f32 %v4047, %v2721
        %v4053 = vmax.f32 %v4049, 0.0
        %v4054 = vmax.f32 %v4050, 0.0
        %v4055 = vmax.f32 %v4051, 0.0
        %v4056 = vmax.f32 %v4052, 0.0
        %4057 = vst [vmem:[%s647] sm:$0xff] %v4053
        %4058 = vst [vmem:[%s647 + $0x8] sm:$0xff] %v4054
        %4059 = vst [vmem:[%s647 + $0x10] sm:$0xff] %v4055
        %4060 = vst [vmem:[%s647 + $0x18] sm:$0xff] %v4056
        %p4061 = scmp.lt.s32.totalorder %s31, 1
        %s4062 = scalar_select %p4061, %s31, 1
        %s4063 = smul.addr %s4062, 4
        %s4064 = smul.addr %s4063, 8
        %s4065 = scalar_lea.vmem %s17, %s4064
        // Predicated region
        $region109: #{decoder_block_forward.1} parent=87 // pred_check
          %p4066 = pneg %p416
        $region110: #{decoder_block_forward.1} parent=87 // pred_check_branch
          %4068 = sbr.rel (%p4066) target = $region112
        $region111: #{decoder_block_forward.1} parent=87 // pred_region
          _
        $region112: #{decoder_block_forward.1} parent=87 // pred_fallthru
          _
      $region88: #{decoder_block_forward.1} parent=5 // pred_fallthru
        _
      %p4069 = scmp.le.s32.totalorder 2, %s26
      // Predicated region
      $region113: #{decoder_block_forward.1} parent=5 // pred_check
        %p4070 = pneg %p4069
      $region114: #{decoder_block_forward.1} parent=5 // pred_check_branch
        %4072 = sbr.rel (%p4070) target = $region116
      $region115: #{decoder_block_forward.1} parent=5 // pred_region
        %s4073 = ssub.s32 %s26, 2
        // Predicated region
        $region117: #{decoder_block_forward.1} parent=115 // pred_check
          %p4074 = pneg %p422
        $region118: #{decoder_block_forward.1} parent=115 // pred_check_branch
          %4076 = sbr.rel (%p4074) target = $region120
        $region119: #{decoder_block_forward.1} parent=115 // pred_region
          %p4077 = scmp.lt.s32.totalorder %s32, 1
          %s4078 = scalar_select %p4077, %s32, 1
          %s4079 = smul.addr %s4078, 4
          %s4080 = smul.addr %s4079, 8
          %s4081 = scalar_lea.vmem %s17, %s4080
        $region120: #{decoder_block_forward.1} parent=115 // pred_fallthru
          _
      $region116: #{decoder_block_forward.1} parent=5 // pred_fallthru
        _
    $region6: #{decoder_block_forward.1} parent=1 // loop_footer
      %s30 = sadd.s32 1, %s26
    $region7: #{decoder_block_forward.1} parent=1 // loop_footer_branch
      %25 = sbr.rel target = $region3
    $region8: #{decoder_block_forward.1} parent=1 // loop_exit
      _
    %4082 = vsyncpa [#allocation3], 1
    %s4083 = scalar_lea.sflag [#allocation3], 1
    %4084 = vsyncpa %s4083, 1
    %4085 = vsyncpa [#allocation5], 1
    %4086 = vsyncpa [#allocation8], 1

</llo_original>
